<compile_context>
chip_gen: v7x
topology: tpu7x:2x2x1
jax: 0.10.0
libtpu: 0.0.40
codegen_flags: <defaults>
</compile_context>

<pallas_src>
import functools

import jax
import jax.numpy as jnp
from jax.experimental import pallas as pl
from jax.experimental.pallas import tpu as pltpu

BN_EPS = 1e-5


def merge_and_conv_kernel(p1_ref, w1_ref, b1_ref, gamma_ref, beta_ref,
                          w2_ref, b2_ref, masks_ref, out_ref, *, W):
    # p1_ref   : (N*H*W, K1)   conv1 im2col patches (built in wrapper, lane-tile padded)
    # w1_ref   : (K1, CM)      conv1 weight, zero-padded to full tiles
    # b1/gamma/beta : (1, CM)
    # w2_ref   : (9*CM, CO)    conv2 weight, tap t at rows [t*CM, t*CM+inner)
    # b2_ref   : (1, CO)
    # masks_ref: (N*H*W, 9)    per-row validity mask for each shifted tap
    # out_ref  : (oc, N*H*W)   lane-dense output
    NHW = p1_ref.shape[0]
    oc = out_ref.shape[0]
    f32 = jnp.float32

    # ---- conv1: one dense, fully tile-aligned MXU matmul ----
    y = jnp.dot(p1_ref[...], w1_ref[...], preferred_element_type=f32) + b1_ref[...]
    y = jnp.maximum(y, 0.0)                                      # ReLU, (NHW, CM)

    # ---- BatchNorm2d (training-mode batch stats over N,H,W), two-pass for robustness ----
    inv_cnt = 1.0 / float(NHW)
    mean = jnp.sum(y, axis=0, keepdims=True) * inv_cnt
    centered = y - mean
    var = jnp.sum(centered * centered, axis=0, keepdims=True) * inv_cnt
    scale = gamma_ref[...] * jax.lax.rsqrt(var + BN_EPS)         # padded channels: gamma=0 -> 0
    y = centered * scale + beta_ref[...]
    # TODO(synk): BN running_mean/running_var buffer updates are stateful side effects and are
    # not reproduced (they do not affect this forward's output).

    # ---- conv2 im2col: +/-1 spatial shifts as XLU sublane rolls of the flat activation,
    # edge rows re-zeroed with per-row masks; each tap is a lane-tile-aligned 128-wide strip ----
    taps = []
    for kh in range(3):
        for kw in range(3):
            dh, dw = kh - 1, kw - 1
            delta = dh * W + dw
            if delta == 0:
                taps.append(y)
            else:
                t = pltpu.roll(y, shift=(-delta) % NHW, axis=0)  # t[r] = y[r + delta]
                idx = kh * 3 + kw
                taps.append(t * masks_ref[:, idx:idx + 1])       # zero out-of-image rows
    p2 = jnp.concatenate(taps, axis=-1)                          # (NHW, 9*CM), unmasked concat

    # ---- conv2 (single MXU matmul) + sigmoid, lane-dense output ----
    z = jnp.dot(p2, w2_ref[...], preferred_element_type=f32) + b2_ref[...]   # (NHW, CO)
    zt = z.T                                                     # tile-aligned (CO, NHW) transpose
    out_ref[...] = jax.nn.sigmoid(zt[0:oc, :])                   # full-width (oc, NHW) store


def _round_up(x, m):
    return (x + m - 1) // m * m


def merge_and_conv(x_nchw, w1, b1, gamma, beta, w2, b2):
    """x_nchw: (N, Cin, H, W) float32. Returns (N, oc, H, W) float32."""
    N, Cin, H, W = x_nchw.shape
    inner = w1.shape[-1]
    oc = w2.shape[-1]
    NHW = N * H * W
    f32 = jnp.float32

    K1 = _round_up(9 * Cin, 128)       # conv1 contraction dim, lane-tile padded
    CM = _round_up(inner, 128)         # conv1 output / conv2 input channels, padded
    CO = _round_up(oc, 128)            # conv2 output channels, padded

    x = jnp.transpose(x_nchw, (0, 2, 3, 1)).astype(f32)          # NHWC

    # conv1 im2col in the wrapper (tiny at Cin=4; removes all conv1 relayout from the kernel).
    xp = jnp.pad(x, ((0, 0), (1, 1), (1, 1), (0, 0)))
    p1 = jnp.concatenate([xp[:, kh:kh + H, kw:kw + W, :]
                          for kh in range(3) for kw in range(3)], axis=-1)
    p1 = jnp.pad(p1.reshape(NHW, 9 * Cin), ((0, 0), (0, K1 - 9 * Cin)))

    # conv1 weight/bias/BN params, zero-padded to full lane tiles (padded channels stay 0).
    w1m = jnp.pad(w1.astype(f32).reshape(9 * Cin, inner),
                  ((0, K1 - 9 * Cin), (0, CM - inner)))
    b1p = jnp.pad(b1.astype(f32).reshape(1, inner), ((0, 0), (0, CM - inner)))
    gammap = jnp.pad(gamma.astype(f32).reshape(1, inner), ((0, 0), (0, CM - inner)))
    betap = jnp.pad(beta.astype(f32).reshape(1, inner), ((0, 0), (0, CM - inner)))

    # conv2 weight: tap t occupies rows [t*CM, t*CM+inner); cols padded so the matmul result is
    # a full 128-lane tile (the MXU pads to the tile internally anyway, so this is free work).
    w2m = jnp.pad(w2.astype(f32).reshape(9, inner, oc),
                  ((0, 0), (0, CM - inner), (0, CO - oc))).reshape(9 * CM, CO)
    b2p = jnp.pad(b2.astype(f32).reshape(1, oc), ((0, 0), (0, CO - oc)))

    # Per-row validity masks for the 9 conv2 taps (t = kh*3+kw); row r = n*H*W + h*W + w.
    hh = jnp.arange(H)
    ww = jnp.arange(W)
    cols = []
    for kh in range(3):
        for kw in range(3):
            dh, dw = kh - 1, kw - 1
            vh = (hh + dh >= 0) & (hh + dh < H)
            vw = (ww + dw >= 0) & (ww + dw < W)
            m = (vh[:, None] & vw[None, :]).astype(f32)          # (H, W)
            cols.append(jnp.tile(m.reshape(1, H, W), (N, 1, 1)).reshape(NHW))
    tap_masks = jnp.stack(cols, axis=-1)                         # (NHW, 9)

    # VMEM budget derived from the actual (sublane/lane padded) buffer sizes (v5e scoped default
    # is only 16 MiB; clamp well below v7x's 64 MiB physical VMEM).
    def padded_bytes(r, c):
        return _round_up(r, 8) * _round_up(c, 128) * 4
    io_bytes = (padded_bytes(NHW, K1) + padded_bytes(K1, CM) + 3 * padded_bytes(1, CM)
                + padded_bytes(9 * CM, CO) + padded_bytes(1, CO)
                + padded_bytes(NHW, 9) + padded_bytes(oc, NHW))
    tmp_bytes = (12 * padded_bytes(NHW, CM)          # y / centered / tap working set
                 + 2 * padded_bytes(NHW, 9 * CM)     # conv2 patch matrix
                 + 2 * padded_bytes(NHW, CO))        # conv2 result + transpose
    vmem_limit = int(min(max(2 * io_bytes + tmp_bytes + (4 << 20), 24 << 20), 48 << 20))

    vmem = pl.BlockSpec(memory_space=pltpu.MemorySpace.VMEM)
    # TODO(synk): single-program call (no grid) is right at these toy shapes; for large N*H*W add
    # a 'parallel' row-tile grid (two-phase BN stats) to use both v7x TensorCores and pipeline.
    out_t = pl.pallas_call(
        functools.partial(merge_and_conv_kernel, W=W),
        out_shape=jax.ShapeDtypeStruct((oc, NHW), f32),
        in_specs=[vmem] * 8,
        out_specs=vmem,
        compiler_params=pltpu.CompilerParams(vmem_limit_bytes=vmem_limit),
    )(p1, w1m, b1p, gammap, betap, w2m, b2p, tap_masks)

    out_nchw = jnp.transpose(out_t.reshape(oc, N, H, W), (1, 0, 2, 3))
    return out_nchw


def _reference(x_nchw, w1, b1, gamma, beta, w2, b2):
    """Pure-JAX reference (NHWC convs via lax.conv_general_dilated)."""
    x = jnp.transpose(x_nchw, (0, 2, 3, 1))
    dn = jax.lax.conv_dimension_numbers(x.shape, w1.shape, ("NHWC", "HWIO", "NHWC"))
    y = jax.lax.conv_general_dilated(x, w1, (1, 1), "SAME", dimension_numbers=dn) + b1
    y = jnp.maximum(y, 0.0)
    mean = jnp.mean(y, axis=(0, 1, 2))
    var = jnp.mean((y - mean) ** 2, axis=(0, 1, 2))
    y = (y - mean) * jax.lax.rsqrt(var + BN_EPS) * gamma + beta
    dn2 = jax.lax.conv_dimension_numbers(y.shape, w2.shape, ("NHWC", "HWIO", "NHWC"))
    y = jax.lax.conv_general_dilated(y, w2, (1, 1), "SAME", dimension_numbers=dn2) + b2
    y = jax.nn.sigmoid(y)
    return jnp.transpose(y, (0, 3, 1, 2))


if __name__ == "__main__":
    # shapes implied by the module: NCHW input, ic -> inner(=32) -> oc
    N, ic, oc, inner = 2, 4, 4, 32
    H = W = 16

    key = jax.random.PRNGKey(0)
    kx, k1, k2, k3, k4 = jax.random.split(key, 5)

    x = jax.random.normal(kx, (N, ic, H, W), jnp.float32)

    # deterministic parameter init (PyTorch-style uniform(+/-1/sqrt(fan_in)) for convs,
    # gamma=1 / beta=0 for BatchNorm)
    bound1 = 1.0 / (ic * 9) ** 0.5
    w1 = jax.random.uniform(k1, (3, 3, ic, inner), jnp.float32, -bound1, bound1)
    b1 = jax.random.uniform(k2, (inner,), jnp.float32, -bound1, bound1)
    gamma = jnp.ones((inner,), jnp.float32)
    beta = jnp.zeros((inner,), jnp.float32)
    bound2 = 1.0 / (inner * 9) ** 0.5
    w2 = jax.random.uniform(k3, (3, 3, inner, oc), jnp.float32, -bound2, bound2)
    b2 = jax.random.uniform(k4, (oc,), jnp.float32, -bound2, bound2)

    out = jax.jit(merge_and_conv)(x, w1, b1, gamma, beta, w2, b2)
    out = jax.block_until_ready(out)

    ref = _reference(x, w1, b1, gamma, beta, w2, b2)
    assert out.shape == (N, oc, H, W)
    assert jnp.allclose(out, ref, rtol=1e-4, atol=1e-5), "mismatch vs JAX reference"

    print("KERNEL_OK")
</pallas_src>

<mosaic_0001>
module attributes {stable_mosaic.version = 11 : i64} {
  func.func @merge_and_conv_kernel(%arg0: memref<512x128xf32, #tpu.memory_space<vmem>>, %arg1: memref<128x128xf32, #tpu.memory_space<vmem>>, %arg2: memref<1x128xf32, #tpu.memory_space<vmem>>, %arg3: memref<1x128xf32, #tpu.memory_space<vmem>>, %arg4: memref<1x128xf32, #tpu.memory_space<vmem>>, %arg5: memref<1152x128xf32, #tpu.memory_space<vmem>>, %arg6: memref<1x128xf32, #tpu.memory_space<vmem>>, %arg7: memref<512x9xf32, #tpu.memory_space<vmem>>, %arg8: memref<4x512xf32, #tpu.memory_space<vmem>>) attributes {dimension_semantics = [], scalar_prefetch = 0 : i64, scratch_operands = 0 : i64, tpu.core_type = #tpu.core_type<tc>} {
    %c0 = arith.constant 0 : index
    %c0_0 = arith.constant 0 : index
    %0 = vector.load %arg0[%c0, %c0_0] : memref<512x128xf32, #tpu.memory_space<vmem>>, vector<512x128xf32>
    %c0_1 = arith.constant 0 : index
    %c0_2 = arith.constant 0 : index
    %1 = vector.load %arg1[%c0_1, %c0_2] : memref<128x128xf32, #tpu.memory_space<vmem>>, vector<128x128xf32>
    %cst = arith.constant dense<0.000000e+00> : vector<512x128xf32>
    %2 = tpu.matmul %0, %1, %cst {dimension_numbers = #tpu.dot_dimension_numbers<[1], [0], [0], [1], [0, 0, 1, 1], [], []>} : vector<512x128xf32>, vector<128x128xf32>, vector<512x128xf32> -> vector<512x128xf32>
    %c0_3 = arith.constant 0 : index
    %c0_4 = arith.constant 0 : index
    %3 = vector.load %arg2[%c0_3, %c0_4] : memref<1x128xf32, #tpu.memory_space<vmem>>, vector<1x128xf32>
    %4 = vector.broadcast %3 : vector<1x128xf32> to vector<512x128xf32>
    %5 = arith.addf %2, %4 : vector<512x128xf32>
    %cst_5 = arith.constant 0.000000e+00 : f32
    %6 = vector.broadcast %cst_5 : f32 to vector<512x128xf32>
    %7 = arith.maximumf %5, %6 : vector<512x128xf32>
    %cst_6 = arith.constant dense<0.000000e+00> : vector<128xf32>
    %8 = vector.multi_reduction <add>, %7, %cst_6 [0] : vector<512x128xf32> to vector<128xf32>
    %9 = vector.shape_cast %8 : vector<128xf32> to vector<1x128xf32>
    %cst_7 = arith.constant 0.001953125 : f32
    %10 = vector.broadcast %cst_7 : f32 to vector<1x128xf32>
    %11 = arith.mulf %9, %10 : vector<1x128xf32>
    %12 = vector.broadcast %11 : vector<1x128xf32> to vector<512x128xf32>
    %13 = arith.subf %7, %12 : vector<512x128xf32>
    %14 = arith.mulf %13, %13 : vector<512x128xf32>
    %cst_8 = arith.constant dense<0.000000e+00> : vector<128xf32>
    %15 = vector.multi_reduction <add>, %14, %cst_8 [0] : vector<512x128xf32> to vector<128xf32>
    %16 = vector.shape_cast %15 : vector<128xf32> to vector<1x128xf32>
    %cst_9 = arith.constant 0.001953125 : f32
    %17 = vector.broadcast %cst_9 : f32 to vector<1x128xf32>
    %18 = arith.mulf %16, %17 : vector<1x128xf32>
    %c0_10 = arith.constant 0 : index
    %c0_11 = arith.constant 0 : index
    %19 = vector.load %arg3[%c0_10, %c0_11] : memref<1x128xf32, #tpu.memory_space<vmem>>, vector<1x128xf32>
    %cst_12 = arith.constant 9.99999974E-6 : f32
    %20 = vector.broadcast %cst_12 : f32 to vector<1x128xf32>
    %21 = arith.addf %18, %20 : vector<1x128xf32>
    %22 = math.rsqrt %21 : vector<1x128xf32>
    %23 = arith.mulf %19, %22 : vector<1x128xf32>
    %24 = vector.broadcast %23 : vector<1x128xf32> to vector<512x128xf32>
    %25 = arith.mulf %13, %24 : vector<512x128xf32>
    %c0_13 = arith.constant 0 : index
    %c0_14 = arith.constant 0 : index
    %26 = vector.load %arg4[%c0_13, %c0_14] : memref<1x128xf32, #tpu.memory_space<vmem>>, vector<1x128xf32>
    %27 = vector.broadcast %26 : vector<1x128xf32> to vector<512x128xf32>
    %28 = arith.addf %25, %27 : vector<512x128xf32>
    %c17_i32 = arith.constant 17 : i32
    %29 = tpu.dynamic_rotate %28 by %c17_i32 dim 0 : vector<512x128xf32>, i32 -> vector<512x128xf32>
    %c0_15 = arith.constant 0 : index
    %c0_16 = arith.constant 0 : index
    %30 = vector.load %arg7[%c0_15, %c0_16] : memref<512x9xf32, #tpu.memory_space<vmem>>, vector<512x1xf32>
    %31 = vector.broadcast %30 : vector<512x1xf32> to vector<512x128xf32>
    %32 = arith.mulf %29, %31 : vector<512x128xf32>
    %c16_i32 = arith.constant 16 : i32
    %33 = tpu.dynamic_rotate %28 by %c16_i32 dim 0 : vector<512x128xf32>, i32 -> vector<512x128xf32>
    %c0_17 = arith.constant 0 : index
    %c1 = arith.constant 1 : index
    %34 = vector.load %arg7[%c0_17, %c1] : memref<512x9xf32, #tpu.memory_space<vmem>>, vector<512x1xf32>
    %35 = vector.broadcast %34 : vector<512x1xf32> to vector<512x128xf32>
    %36 = arith.mulf %33, %35 : vector<512x128xf32>
    %c15_i32 = arith.constant 15 : i32
    %37 = tpu.dynamic_rotate %28 by %c15_i32 dim 0 : vector<512x128xf32>, i32 -> vector<512x128xf32>
    %c0_18 = arith.constant 0 : index
    %c2 = arith.constant 2 : index
    %38 = vector.load %arg7[%c0_18, %c2] : memref<512x9xf32, #tpu.memory_space<vmem>>, vector<512x1xf32>
    %39 = vector.broadcast %38 : vector<512x1xf32> to vector<512x128xf32>
    %40 = arith.mulf %37, %39 : vector<512x128xf32>
    %c1_i32 = arith.constant 1 : i32
    %41 = tpu.dynamic_rotate %28 by %c1_i32 dim 0 : vector<512x128xf32>, i32 -> vector<512x128xf32>
    %c0_19 = arith.constant 0 : index
    %c3 = arith.constant 3 : index
    %42 = vector.load %arg7[%c0_19, %c3] : memref<512x9xf32, #tpu.memory_space<vmem>>, vector<512x1xf32>
    %43 = vector.broadcast %42 : vector<512x1xf32> to vector<512x128xf32>
    %44 = arith.mulf %41, %43 : vector<512x128xf32>
    %c511_i32 = arith.constant 511 : i32
    %45 = tpu.dynamic_rotate %28 by %c511_i32 dim 0 : vector<512x128xf32>, i32 -> vector<512x128xf32>
    %c0_20 = arith.constant 0 : index
    %c5 = arith.constant 5 : index
    %46 = vector.load %arg7[%c0_20, %c5] : memref<512x9xf32, #tpu.memory_space<vmem>>, vector<512x1xf32>
    %47 = vector.broadcast %46 : vector<512x1xf32> to vector<512x128xf32>
    %48 = arith.mulf %45, %47 : vector<512x128xf32>
    %c497_i32 = arith.constant 497 : i32
    %49 = tpu.dynamic_rotate %28 by %c497_i32 dim 0 : vector<512x128xf32>, i32 -> vector<512x128xf32>
    %c0_21 = arith.constant 0 : index
    %c6 = arith.constant 6 : index
    %50 = vector.load %arg7[%c0_21, %c6] : memref<512x9xf32, #tpu.memory_space<vmem>>, vector<512x1xf32>
    %51 = vector.broadcast %50 : vector<512x1xf32> to vector<512x128xf32>
    %52 = arith.mulf %49, %51 : vector<512x128xf32>
    %c496_i32 = arith.constant 496 : i32
    %53 = tpu.dynamic_rotate %28 by %c496_i32 dim 0 : vector<512x128xf32>, i32 -> vector<512x128xf32>
    %c0_22 = arith.constant 0 : index
    %c7 = arith.constant 7 : index
    %54 = vector.load %arg7[%c0_22, %c7] : memref<512x9xf32, #tpu.memory_space<vmem>>, vector<512x1xf32>
    %55 = vector.broadcast %54 : vector<512x1xf32> to vector<512x128xf32>
    %56 = arith.mulf %53, %55 : vector<512x128xf32>
    %c495_i32 = arith.constant 495 : i32
    %57 = tpu.dynamic_rotate %28 by %c495_i32 dim 0 : vector<512x128xf32>, i32 -> vector<512x128xf32>
    %c0_23 = arith.constant 0 : index
    %c8 = arith.constant 8 : index
    %58 = vector.load %arg7[%c0_23, %c8] : memref<512x9xf32, #tpu.memory_space<vmem>>, vector<512x1xf32>
    %59 = vector.broadcast %58 : vector<512x1xf32> to vector<512x128xf32>
    %60 = arith.mulf %57, %59 : vector<512x128xf32>
    %61 = tpu.concatenate %32, %36, %40, %44, %28, %48, %52, %56, %60 in 1 : vector<512x128xf32>, vector<512x128xf32>, vector<512x128xf32>, vector<512x128xf32>, vector<512x128xf32>, vector<512x128xf32>, vector<512x128xf32>, vector<512x128xf32>, vector<512x128xf32> -> vector<512x1152xf32>
    %c0_24 = arith.constant 0 : index
    %c0_25 = arith.constant 0 : index
    %62 = vector.load %arg5[%c0_24, %c0_25] : memref<1152x128xf32, #tpu.memory_space<vmem>>, vector<1152x128xf32>
    %cst_26 = arith.constant dense<0.000000e+00> : vector<512x128xf32>
    %63 = tpu.matmul %61, %62, %cst_26 {dimension_numbers = #tpu.dot_dimension_numbers<[1], [0], [0], [1], [0, 0, 1, 1], [], []>} : vector<512x1152xf32>, vector<1152x128xf32>, vector<512x128xf32> -> vector<512x128xf32>
    %c0_27 = arith.constant 0 : index
    %c0_28 = arith.constant 0 : index
    %64 = vector.load %arg6[%c0_27, %c0_28] : memref<1x128xf32, #tpu.memory_space<vmem>>, vector<1x128xf32>
    %65 = vector.broadcast %64 : vector<1x128xf32> to vector<512x128xf32>
    %66 = arith.addf %63, %65 : vector<512x128xf32>
    %67 = tpu.transpose %66, [1, 0] : vector<512x128xf32> -> vector<128x512xf32>
    %68 = vector.extract_strided_slice %67 {offsets = [0, 0], sizes = [4, 512], strides = [1, 1]} : vector<128x512xf32> to vector<4x512xf32>
    %69 = arith.negf %68 : vector<4x512xf32>
    %70 = math.exp %69 : vector<4x512xf32>
    %cst_29 = arith.constant 1.000000e+00 : f32
    %71 = vector.broadcast %cst_29 : f32 to vector<4x512xf32>
    %72 = arith.addf %71, %70 : vector<4x512xf32>
    %73 = arith.divf %71, %72 : vector<4x512xf32>
    %c0_30 = arith.constant 0 : index
    %c0_31 = arith.constant 0 : index
    %74 = vector.load %arg8[%c0_30, %c0_31] : memref<4x512xf32, #tpu.memory_space<vmem>>, vector<4x512xf32>
    tpu.vector_store %arg8[%c0_30, %c0_31], %73 {strides = array<i32>} : memref<4x512xf32, #tpu.memory_space<vmem>>, vector<4x512xf32>,
    return
  }
}

</mosaic_0001>

<llo_original>
// kernel: tile.38
$region0: #{tile.38}
  #allocation0 [shape = 's32[1]{0}', space=sflag, size = 0x4, scoped, tag = 'scoped memory for tile.38']
  %s0 = inlined_call_operand.vmem [shape: f32[16,16], index: 0, kind: input, shape index: {}]
  %s1 = inlined_call_operand.vmem [shape: f32[2,1,1,16,1,16], index: 1, kind: output, shape index: {}]
  // Predicated region
  $region2: #{tile.38} parent=0 // pred_check
    _
  $region3: #{tile.38} parent=0 // pred_check_branch
    %3 = sbr.rel (0) target = $region5
  $region4: #{tile.38} parent=0 // pred_region
    _
  $region5: #{tile.38} parent=0 // pred_fallthru
    _
  %v4 = vld [vmem:[%s0] sm:$0xff]
  %5 = vst [vmem:[%s1] sm:$0xff] %v4
  %s6 = scalar_lea.vmem %s1, 16
  %7 = vst [vmem:[%s6] sm:$0xff] %v4
  %s8 = scalar_lea.vmem %s0, 8
  %v9 = vld [vmem:[%s8] sm:$0xff]
  %s10 = scalar_lea.vmem %s1, 8
  %11 = vst [vmem:[%s10] sm:$0xff] %v9
  %s12 = scalar_lea.vmem %s1, 24
  %13 = vst [vmem:[%s12] sm:$0xff] %v9

// kernel: tile.63
$region0: #{tile.63}
  %s0 = inlined_call_operand.vmem [shape: f32[2,1,1,16,1,16], index: 0, kind: input, shape index: {}]
  %s1 = inlined_call_operand.vmem [shape: f32[512,1], index: 1, kind: output, shape index: {}]
  $region1: #{tile.63} parent=0
    #allocation0 [shape = 'u8[16384]{0}', space=vmem, size = 0x4000, scoped, tag = 'scoped mem for output reshape']
    %v2 = vld [vmem:[%s0] ss:$8 sm:$0xf]
    %vm3 = vcmask 130048
    %4 = vst.msk [vmem:[#allocation0] ss:$8 sm:$0xf] %vm3, %v2
    %s5 = scalar_lea.vmem %s0, 7
    %v6 = vld [vmem:[%s5] ss:$8 sm:$0xf]
    %7 = vrot.lane.b32.xlu0 %v6, 112
    %v8 = vpop.permute.xlu0 %7
    %vm9 = vcmask 1048448
    %10 = vst.msk [vmem:[#allocation0] ss:$8 sm:$0xf] %vm9, %v8
    %s11 = scalar_lea.vmem %s0, 6
    %v12 = vld [vmem:[%s11] ss:$8 sm:$0xf]
    %13 = vrot.lane.b32.xlu0 %v12, 96
    %v14 = vpop.permute.xlu0 %13
    %vm15 = vcmask 917248
    %16 = vst.msk [vmem:[#allocation0] ss:$8 sm:$0xf] %vm15, %v14
    %s17 = scalar_lea.vmem %s0, 5
    %v18 = vld [vmem:[%s17] ss:$8 sm:$0xf]
    %19 = vrot.lane.b32.xlu0 %v18, 80
    %v20 = vpop.permute.xlu0 %19
    %vm21 = vcmask 786048
    %22 = vst.msk [vmem:[#allocation0] ss:$8 sm:$0xf] %vm21, %v20
    %s23 = scalar_lea.vmem %s0, 4
    %v24 = vld [vmem:[%s23] ss:$8 sm:$0xf]
    %25 = vrot.lane.b32.xlu0 %v24, 64
    %v26 = vpop.permute.xlu0 %25
    %vm27 = vcmask 654848
    %28 = vst.msk [vmem:[#allocation0] ss:$8 sm:$0xf] %vm27, %v26
    %s29 = scalar_lea.vmem %s0, 3
    %v30 = vld [vmem:[%s29] ss:$8 sm:$0xf]
    %31 = vrot.lane.b32.xlu0 %v30, 48
    %v32 = vpop.permute.xlu0 %31
    %vm33 = vcmask 523648
    %34 = vst.msk [vmem:[#allocation0] ss:$8 sm:$0xf] %vm33, %v32
    %s35 = scalar_lea.vmem %s0, 2
    %v36 = vld [vmem:[%s35] ss:$8 sm:$0xf]
    %37 = vrot.lane.b32.xlu0 %v36, 32
    %v38 = vpop.permute.xlu0 %37
    %vm39 = vcmask 392448
    %40 = vst.msk [vmem:[#allocation0] ss:$8 sm:$0xf] %vm39, %v38
    %s41 = scalar_lea.vmem %s0, 1
    %v42 = vld [vmem:[%s41] ss:$8 sm:$0xf]
    %43 = vrot.lane.b32.xlu0 %v42, 16
    %v44 = vpop.permute.xlu0 %43
    %vm45 = vcmask 261248
    %46 = vst.msk [vmem:[#allocation0] ss:$8 sm:$0xf] %vm45, %v44
    %s48 = sshllo.u32 0, 1
    %v50 = vld [vmem:[#allocation0] sm:%s48]
    %s51 = sshllo.u32 0, 1
    %52 = vst [vmem:[%s1] sm:%s51] %v50
    %s53 = scalar_lea.vmem [#allocation0], 8
    %v54 = vld [vmem:[%s53] sm:%s48]
    %s55 = sshllo.u32 0, 1
    %s56 = scalar_lea.vmem %s1, 1
    %57 = vst [vmem:[%s56] sm:%s55] %v54
    %s58 = scalar_lea.vmem [#allocation0], 16
    %v59 = vld [vmem:[%s58] sm:%s48]
    %s60 = sshllo.u32 0, 1
    %s61 = smul.addr 1, 2
    %s62 = scalar_lea.vmem %s1, %s61
    %63 = vst [vmem:[%s62] sm:%s60] %v59
    %s64 = scalar_lea.vmem [#allocation0], 24
    %v65 = vld [vmem:[%s64] sm:%s48]
    %s66 = sshllo.u32 0, 1
    %s67 = smul.addr 1, 3
    %s68 = scalar_lea.vmem %s1, %s67
    %69 = vst [vmem:[%s68] sm:%s66] %v65

// kernel: merge_and_conv.1
$region0: #{merge_and_conv.1}
  #allocation0 [shape = 'u32[]', space=smem, size = 0x4, offset = 0x4, fixed_abs, tag = 'smem constant byte address 0x4 - core index']
  #allocation1 [shape = 'u32[144,128]{1,0:T(1,128)}', space=vmem, size = 0x12000, scoped, tag = 'internal scratch']
  %s0 = inlined_call_operand.vmem [shape: f32[512,128], index: 0, kind: input, shape index: {}]
  %s1 = inlined_call_operand.vmem [shape: f32[128,128], index: 1, kind: input, shape index: {}]
  %s2 = inlined_call_operand.vmem [shape: f32[1,128], index: 2, kind: input, shape index: {}]
  %s3 = inlined_call_operand.vmem [shape: f32[1,128], index: 3, kind: input, shape index: {}]
  %s4 = inlined_call_operand.vmem [shape: f32[1,128], index: 4, kind: input, shape index: {}]
  %s5 = inlined_call_operand.vmem [shape: f32[1152,128], index: 5, kind: input, shape index: {}]
  %s6 = inlined_call_operand.vmem [shape: f32[1,128], index: 6, kind: input, shape index: {}]
  %s7 = inlined_call_operand.vmem [shape: f32[512,9], index: 7, kind: input, shape index: {}]
  %s8 = inlined_call_operand.vmem [shape: f32[4,512], index: 8, kind: output, shape index: {}]
  %s9 = sld [smem:[#allocation0]]
  $region42: #{merge_and_conv.1} parent=0
    _
  %s11 = ssub.s32 1, %s9
  %s12 = scalar_select 0, %s11, %s9
  // Predicated region
  $region2: #{merge_and_conv.1} parent=0 // pred_check
    _
  $region3: #{merge_and_conv.1} parent=0 // pred_check_branch
    %14 = sbr.rel (0) target = $region5
  $region4: #{merge_and_conv.1} parent=0 // pred_region
    _
  $region5: #{merge_and_conv.1} parent=0 // pred_fallthru
    _
  // Predicated region
  $region6: #{merge_and_conv.1} parent=0 // pred_check
    _
  $region7: #{merge_and_conv.1} parent=0 // pred_check_branch
    %16 = sbr.rel (0) target = $region9
  $region8: #{merge_and_conv.1} parent=0 // pred_region
    _
  $region9: #{merge_and_conv.1} parent=0 // pred_fallthru
    _
  // Predicated region
  $region10: #{merge_and_conv.1} parent=0 // pred_check
    _
  $region11: #{merge_and_conv.1} parent=0 // pred_check_branch
    %18 = sbr.rel (0) target = $region13
  $region12: #{merge_and_conv.1} parent=0 // pred_region
    _
  $region13: #{merge_and_conv.1} parent=0 // pred_fallthru
    _
  // Predicated region
  $region14: #{merge_and_conv.1} parent=0 // pred_check
    _
  $region15: #{merge_and_conv.1} parent=0 // pred_check_branch
    %20 = sbr.rel (0) target = $region17
  $region16: #{merge_and_conv.1} parent=0 // pred_region
    _
  $region17: #{merge_and_conv.1} parent=0 // pred_fallthru
    _
  // Predicated region
  $region18: #{merge_and_conv.1} parent=0 // pred_check
    _
  $region19: #{merge_and_conv.1} parent=0 // pred_check_branch
    %22 = sbr.rel (0) target = $region21
  $region20: #{merge_and_conv.1} parent=0 // pred_region
    _
  $region21: #{merge_and_conv.1} parent=0 // pred_fallthru
    _
  // Predicated region
  $region22: #{merge_and_conv.1} parent=0 // pred_check
    _
  $region23: #{merge_and_conv.1} parent=0 // pred_check_branch
    %24 = sbr.rel (0) target = $region25
  $region24: #{merge_and_conv.1} parent=0 // pred_region
    _
  $region25: #{merge_and_conv.1} parent=0 // pred_fallthru
    _
  // Predicated region
  $region26: #{merge_and_conv.1} parent=0 // pred_check
    _
  $region27: #{merge_and_conv.1} parent=0 // pred_check_branch
    %26 = sbr.rel (0) target = $region29
  $region28: #{merge_and_conv.1} parent=0 // pred_region
    _
  $region29: #{merge_and_conv.1} parent=0 // pred_fallthru
    _
  // Predicated region
  $region30: #{merge_and_conv.1} parent=0 // pred_check
    _
  $region31: #{merge_and_conv.1} parent=0 // pred_check_branch
    %28 = sbr.rel (0) target = $region33
  $region32: #{merge_and_conv.1} parent=0 // pred_region
    _
  $region33: #{merge_and_conv.1} parent=0 // pred_fallthru
    _
  %v29 = vld [vmem:[%s0] sm:$0xff]
  %v30 = vld [vmem:[%s0 + $0x8] sm:$0xff]
  %v31 = vld [vmem:[%s0 + $0x10] sm:$0xff]
  %v32 = vld [vmem:[%s0 + $0x18] sm:$0xff]
  %v33 = vld [vmem:[%s0 + $0x20] sm:$0xff]
  %v34 = vld [vmem:[%s0 + $0x28] sm:$0xff]
  %v35 = vld [vmem:[%s0 + $0x30] sm:$0xff]
  %v36 = vld [vmem:[%s0 + $0x38] sm:$0xff]
  %v37 = vld [vmem:[%s0 + $0x40] sm:$0xff]
  %v38 = vld [vmem:[%s0 + $0x48] sm:$0xff]
  %v39 = vld [vmem:[%s0 + $0x50] sm:$0xff]
  %v40 = vld [vmem:[%s0 + $0x58] sm:$0xff]
  %v41 = vld [vmem:[%s0 + $0x60] sm:$0xff]
  %v42 = vld [vmem:[%s0 + $0x68] sm:$0xff]
  %v43 = vld [vmem:[%s0 + $0x70] sm:$0xff]
  %v44 = vld [vmem:[%s0 + $0x78] sm:$0xff]
  %v45 = vld [vmem:[%s0 + $0x80] sm:$0xff]
  %v46 = vld [vmem:[%s0 + $0x88] sm:$0xff]
  %v47 = vld [vmem:[%s0 + $0x90] sm:$0xff]
  %v48 = vld [vmem:[%s0 + $0x98] sm:$0xff]
  %v49 = vld [vmem:[%s0 + $0xa0] sm:$0xff]
  %v50 = vld [vmem:[%s0 + $0xa8] sm:$0xff]
  %v51 = vld [vmem:[%s0 + $0xb0] sm:$0xff]
  %v52 = vld [vmem:[%s0 + $0xb8] sm:$0xff]
  %v53 = vld [vmem:[%s0 + $0xc0] sm:$0xff]
  %v54 = vld [vmem:[%s0 + $0xc8] sm:$0xff]
  %v55 = vld [vmem:[%s0 + $0xd0] sm:$0xff]
  %v56 = vld [vmem:[%s0 + $0xd8] sm:$0xff]
  %v57 = vld [vmem:[%s0 + $0xe0] sm:$0xff]
  %v58 = vld [vmem:[%s0 + $0xe8] sm:$0xff]
  %v59 = vld [vmem:[%s0 + $0xf0] sm:$0xff]
  %v60 = vld [vmem:[%s0 + $0xf8] sm:$0xff]
  %v61 = vld [vmem:[%s0 + $0x100] sm:$0xff]
  %v62 = vld [vmem:[%s0 + $0x108] sm:$0xff]
  %v63 = vld [vmem:[%s0 + $0x110] sm:$0xff]
  %v64 = vld [vmem:[%s0 + $0x118] sm:$0xff]
  %v65 = vld [vmem:[%s0 + $0x120] sm:$0xff]
  %v66 = vld [vmem:[%s0 + $0x128] sm:$0xff]
  %v67 = vld [vmem:[%s0 + $0x130] sm:$0xff]
  %v68 = vld [vmem:[%s0 + $0x138] sm:$0xff]
  %v69 = vld [vmem:[%s0 + $0x140] sm:$0xff]
  %v70 = vld [vmem:[%s0 + $0x148] sm:$0xff]
  %v71 = vld [vmem:[%s0 + $0x150] sm:$0xff]
  %v72 = vld [vmem:[%s0 + $0x158] sm:$0xff]
  %v73 = vld [vmem:[%s0 + $0x160] sm:$0xff]
  %v74 = vld [vmem:[%s0 + $0x168] sm:$0xff]
  %v75 = vld [vmem:[%s0 + $0x170] sm:$0xff]
  %v76 = vld [vmem:[%s0 + $0x178] sm:$0xff]
  %v77 = vld [vmem:[%s0 + $0x180] sm:$0xff]
  %v78 = vld [vmem:[%s0 + $0x188] sm:$0xff]
  %v79 = vld [vmem:[%s0 + $0x190] sm:$0xff]
  %v80 = vld [vmem:[%s0 + $0x198] sm:$0xff]
  %v81 = vld [vmem:[%s0 + $0x1a0] sm:$0xff]
  %v82 = vld [vmem:[%s0 + $0x1a8] sm:$0xff]
  %v83 = vld [vmem:[%s0 + $0x1b0] sm:$0xff]
  %v84 = vld [vmem:[%s0 + $0x1b8] sm:$0xff]
  %v85 = vld [vmem:[%s0 + $0x1c0] sm:$0xff]
  %v86 = vld [vmem:[%s0 + $0x1c8] sm:$0xff]
  %v87 = vld [vmem:[%s0 + $0x1d0] sm:$0xff]
  %v88 = vld [vmem:[%s0 + $0x1d8] sm:$0xff]
  %v89 = vld [vmem:[%s0 + $0x1e0] sm:$0xff]
  %v90 = vld [vmem:[%s0 + $0x1e8] sm:$0xff]
  %v91 = vld [vmem:[%s0 + $0x1f0] sm:$0xff]
  %v92 = vld [vmem:[%s0 + $0x1f8] sm:$0xff]
  %v93 = vld [vmem:[%s1] sm:$0xff]
  %v94 = vld [vmem:[%s1 + $0x8] sm:$0xff]
  %v95 = vld [vmem:[%s1 + $0x10] sm:$0xff]
  %v96 = vld [vmem:[%s1 + $0x18] sm:$0xff]
  %v97 = vld [vmem:[%s1 + $0x20] sm:$0xff]
  %v98 = vld [vmem:[%s1 + $0x28] sm:$0xff]
  %v99 = vld [vmem:[%s1 + $0x30] sm:$0xff]
  %v100 = vld [vmem:[%s1 + $0x38] sm:$0xff]
  %v101 = vld [vmem:[%s1 + $0x40] sm:$0xff]
  %v102 = vld [vmem:[%s1 + $0x48] sm:$0xff]
  %v103 = vld [vmem:[%s1 + $0x50] sm:$0xff]
  %v104 = vld [vmem:[%s1 + $0x58] sm:$0xff]
  %v105 = vld [vmem:[%s1 + $0x60] sm:$0xff]
  %v106 = vld [vmem:[%s1 + $0x68] sm:$0xff]
  %v107 = vld [vmem:[%s1 + $0x70] sm:$0xff]
  %v108 = vld [vmem:[%s1 + $0x78] sm:$0xff]
  %v109 = vld [vmem:[%s2] sm:$0x1]
  %v111 = vlaneseq
  %v112 = vshrl.u32 %v111, 7
  %v113 = vsub.s32 0, %v112
  %v114 = vrot.slane %v109, %v113
  %116 = vmatprep.subr.mxu0 0.0
  %117 = vmatpush1.msra.mxu0 %v93
  %118 = vmatprep.subr.mxu0 0.0
  %119 = vmatpush1.msra.mxu0 %v94
  %120 = vmatprep.subr.mxu0 0.0
  %121 = vmatpush1.msra.mxu0 %v95
  %122 = vmatprep.subr.mxu0 0.0
  %123 = vmatpush1.msra.mxu0 %v96
  %124 = vmatprep.subr.mxu0 0.0
  %125 = vmatpush1.msra.mxu0 %v97
  %126 = vmatprep.subr.mxu0 0.0
  %127 = vmatpush1.msra.mxu0 %v98
  %128 = vmatprep.subr.mxu0 0.0
  %129 = vmatpush1.msra.mxu0 %v99
  %130 = vmatprep.subr.mxu0 0.0
  %131 = vmatpush1.msra.mxu0 %v100
  %132 = vmatprep.subr.mxu0 0.0
  %133 = vmatpush1.msra.mxu0 %v101
  %134 = vmatprep.subr.mxu0 0.0
  %135 = vmatpush1.msra.mxu0 %v102
  %136 = vmatprep.subr.mxu0 0.0
  %137 = vmatpush1.msra.mxu0 %v103
  %138 = vmatprep.subr.mxu0 0.0
  %139 = vmatpush1.msra.mxu0 %v104
  %140 = vmatprep.subr.mxu0 0.0
  %141 = vmatpush1.msra.mxu0 %v105
  %142 = vmatprep.subr.mxu0 0.0
  %143 = vmatpush1.msra.mxu0 %v106
  %144 = vmatprep.subr.mxu0 0.0
  %145 = vmatpush1.msra.mxu0 %v107
  %146 = vmatprep.subr.mxu0 0.0
  %147 = vmatpush1.msra.mxu0 %v108
  %148 = vmatprep.subr.mxu0 0.0
  %149 = vmatpush1.msra.mxu0 0.0
  %150 = vmatprep.subr.mxu0 0.0
  %151 = vmatpush1.msra.mxu0 0.0
  %152 = vmatprep.subr.mxu0 0.0
  %153 = vmatpush1.msra.mxu0 0.0
  %154 = vmatprep.subr.mxu0 0.0
  %155 = vmatpush1.msra.mxu0 0.0
  %156 = vmatprep.subr.mxu0 0.0
  %157 = vmatpush1.msra.mxu0 0.0
  %158 = vmatprep.subr.mxu0 0.0
  %159 = vmatpush1.msra.mxu0 0.0
  %160 = vmatprep.subr.mxu0 0.0
  %161 = vmatpush1.msra.mxu0 0.0
  %162 = vmatprep.subr.mxu0 0.0
  %163 = vmatpush1.msra.mxu0 0.0
  %164 = vmatprep.subr.mxu0 0.0
  %165 = vmatpush1.msra.mxu0 0.0
  %166 = vmatprep.subr.mxu0 0.0
  %167 = vmatpush1.msra.mxu0 0.0
  %168 = vmatprep.subr.mxu0 0.0
  %169 = vmatpush1.msra.mxu0 0.0
  %170 = vmatprep.subr.mxu0 0.0
  %171 = vmatpush1.msra.mxu0 0.0
  %172 = vmatprep.subr.mxu0 0.0
  %173 = vmatpush1.msra.mxu0 0.0
  %174 = vmatprep.subr.mxu0 0.0
  %175 = vmatpush1.msra.mxu0 0.0
  %176 = vmatprep.subr.mxu0 0.0
  %177 = vmatpush1.msra.mxu0 0.0
  %178 = vmatprep.subr.mxu0 0.0
  %179 = vmatpush1.msra.mxu0 0.0
  %180 = vmatprep.mubr.f32.mxu0 0.0
  %181 = vmatmul.mubr.f32.gmra.mrb[0].mxu0 %v29
  %v182 = vpop.f32.mrb[0].mxu0
  %v183 = vadd.f32 %v114, %v182
  %v184 = vpop.f32.mrb[0].mxu0
  %185 = vmatprep.mubr.f32.mxu0 0.0
  %186 = vmatmul.mubr.f32.gmra.mrb[0].mxu0 %v30
  %v187 = vpop.f32.mrb[0].mxu0
  %v188 = vadd.f32 %v114, %v187
  %v189 = vpop.f32.mrb[0].mxu0
  %190 = vmatprep.mubr.f32.mxu0 0.0
  %191 = vmatmul.mubr.f32.gmra.mrb[0].mxu0 %v31
  %v192 = vpop.f32.mrb[0].mxu0
  %v193 = vadd.f32 %v114, %v192
  %v194 = vpop.f32.mrb[0].mxu0
  %195 = vmatprep.mubr.f32.mxu0 0.0
  %196 = vmatmul.mubr.f32.gmra.mrb[0].mxu0 %v32
  %v197 = vpop.f32.mrb[0].mxu0
  %v198 = vadd.f32 %v114, %v197
  %v199 = vpop.f32.mrb[0].mxu0
  %200 = vmatprep.mubr.f32.mxu0 0.0
  %201 = vmatmul.mubr.f32.gmra.mrb[0].mxu0 %v33
  %v202 = vpop.f32.mrb[0].mxu0
  %v203 = vadd.f32 %v114, %v202
  %v204 = vpop.f32.mrb[0].mxu0
  %205 = vmatprep.mubr.f32.mxu0 0.0
  %206 = vmatmul.mubr.f32.gmra.mrb[0].mxu0 %v34
  %v207 = vpop.f32.mrb[0].mxu0
  %v208 = vadd.f32 %v114, %v207
  %v209 = vpop.f32.mrb[0].mxu0
  %210 = vmatprep.mubr.f32.mxu0 0.0
  %211 = vmatmul.mubr.f32.gmra.mrb[0].mxu0 %v35
  %v212 = vpop.f32.mrb[0].mxu0
  %v213 = vadd.f32 %v114, %v212
  %v214 = vpop.f32.mrb[0].mxu0
  %215 = vmatprep.mubr.f32.mxu0 0.0
  %216 = vmatmul.mubr.f32.gmra.mrb[0].mxu0 %v36
  %v217 = vpop.f32.mrb[0].mxu0
  %v218 = vadd.f32 %v114, %v217
  %v219 = vpop.f32.mrb[0].mxu0
  %220 = vmatprep.mubr.f32.mxu0 0.0
  %221 = vmatmul.mubr.f32.gmra.mrb[0].mxu0 %v37
  %v222 = vpop.f32.mrb[0].mxu0
  %v223 = vadd.f32 %v114, %v222
  %v224 = vpop.f32.mrb[0].mxu0
  %225 = vmatprep.mubr.f32.mxu0 0.0
  %226 = vmatmul.mubr.f32.gmra.mrb[0].mxu0 %v38
  %v227 = vpop.f32.mrb[0].mxu0
  %v228 = vadd.f32 %v114, %v227
  %v229 = vpop.f32.mrb[0].mxu0
  %230 = vmatprep.mubr.f32.mxu0 0.0
  %231 = vmatmul.mubr.f32.gmra.mrb[0].mxu0 %v39
  %v232 = vpop.f32.mrb[0].mxu0
  %v233 = vadd.f32 %v114, %v232
  %v234 = vpop.f32.mrb[0].mxu0
  %235 = vmatprep.mubr.f32.mxu0 0.0
  %236 = vmatmul.mubr.f32.gmra.mrb[0].mxu0 %v40
  %v237 = vpop.f32.mrb[0].mxu0
  %v238 = vadd.f32 %v114, %v237
  %v239 = vpop.f32.mrb[0].mxu0
  %240 = vmatprep.mubr.f32.mxu0 0.0
  %241 = vmatmul.mubr.f32.gmra.mrb[0].mxu0 %v41
  %v242 = vpop.f32.mrb[0].mxu0
  %v243 = vadd.f32 %v114, %v242
  %v244 = vpop.f32.mrb[0].mxu0
  %245 = vmatprep.mubr.f32.mxu0 0.0
  %246 = vmatmul.mubr.f32.gmra.mrb[0].mxu0 %v42
  %v247 = vpop.f32.mrb[0].mxu0
  %v248 = vadd.f32 %v114, %v247
  %v249 = vpop.f32.mrb[0].mxu0
  %250 = vmatprep.mubr.f32.mxu0 0.0
  %251 = vmatmul.mubr.f32.gmra.mrb[0].mxu0 %v43
  %v252 = vpop.f32.mrb[0].mxu0
  %v253 = vadd.f32 %v114, %v252
  %v254 = vpop.f32.mrb[0].mxu0
  %255 = vmatprep.mubr.f32.mxu0 0.0
  %256 = vmatmul.mubr.f32.gmra.mrb[0].mxu0 %v44
  %v257 = vpop.f32.mrb[0].mxu0
  %v258 = vadd.f32 %v114, %v257
  %v259 = vpop.f32.mrb[0].mxu0
  %260 = vmatprep.mubr.f32.mxu0 0.0
  %261 = vmatmul.mubr.f32.gmra.mrb[0].mxu0 %v45
  %v262 = vpop.f32.mrb[0].mxu0
  %v263 = vadd.f32 %v114, %v262
  %v264 = vpop.f32.mrb[0].mxu0
  %265 = vmatprep.mubr.f32.mxu0 0.0
  %266 = vmatmul.mubr.f32.gmra.mrb[0].mxu0 %v46
  %v267 = vpop.f32.mrb[0].mxu0
  %v268 = vadd.f32 %v114, %v267
  %v269 = vpop.f32.mrb[0].mxu0
  %270 = vmatprep.mubr.f32.mxu0 0.0
  %271 = vmatmul.mubr.f32.gmra.mrb[0].mxu0 %v47
  %v272 = vpop.f32.mrb[0].mxu0
  %v273 = vadd.f32 %v114, %v272
  %v274 = vpop.f32.mrb[0].mxu0
  %275 = vmatprep.mubr.f32.mxu0 0.0
  %276 = vmatmul.mubr.f32.gmra.mrb[0].mxu0 %v48
  %v277 = vpop.f32.mrb[0].mxu0
  %v278 = vadd.f32 %v114, %v277
  %v279 = vpop.f32.mrb[0].mxu0
  %280 = vmatprep.mubr.f32.mxu0 0.0
  %281 = vmatmul.mubr.f32.gmra.mrb[0].mxu0 %v49
  %v282 = vpop.f32.mrb[0].mxu0
  %v283 = vadd.f32 %v114, %v282
  %v284 = vpop.f32.mrb[0].mxu0
  %285 = vmatprep.mubr.f32.mxu0 0.0
  %286 = vmatmul.mubr.f32.gmra.mrb[0].mxu0 %v50
  %v287 = vpop.f32.mrb[0].mxu0
  %v288 = vadd.f32 %v114, %v287
  %v289 = vpop.f32.mrb[0].mxu0
  %290 = vmatprep.mubr.f32.mxu0 0.0
  %291 = vmatmul.mubr.f32.gmra.mrb[0].mxu0 %v51
  %v292 = vpop.f32.mrb[0].mxu0
  %v293 = vadd.f32 %v114, %v292
  %v294 = vpop.f32.mrb[0].mxu0
  %295 = vmatprep.mubr.f32.mxu0 0.0
  %296 = vmatmul.mubr.f32.gmra.mrb[0].mxu0 %v52
  %v297 = vpop.f32.mrb[0].mxu0
  %v298 = vadd.f32 %v114, %v297
  %v299 = vpop.f32.mrb[0].mxu0
  %300 = vmatprep.mubr.f32.mxu0 0.0
  %301 = vmatmul.mubr.f32.gmra.mrb[0].mxu0 %v53
  %v302 = vpop.f32.mrb[0].mxu0
  %v303 = vadd.f32 %v114, %v302
  %v304 = vpop.f32.mrb[0].mxu0
  %305 = vmatprep.mubr.f32.mxu0 0.0
  %306 = vmatmul.mubr.f32.gmra.mrb[0].mxu0 %v54
  %v307 = vpop.f32.mrb[0].mxu0
  %v308 = vadd.f32 %v114, %v307
  %v309 = vpop.f32.mrb[0].mxu0
  %310 = vmatprep.mubr.f32.mxu0 0.0
  %311 = vmatmul.mubr.f32.gmra.mrb[0].mxu0 %v55
  %v312 = vpop.f32.mrb[0].mxu0
  %v313 = vadd.f32 %v114, %v312
  %v314 = vpop.f32.mrb[0].mxu0
  %315 = vmatprep.mubr.f32.mxu0 0.0
  %316 = vmatmul.mubr.f32.gmra.mrb[0].mxu0 %v56
  %v317 = vpop.f32.mrb[0].mxu0
  %v318 = vadd.f32 %v114, %v317
  %v319 = vpop.f32.mrb[0].mxu0
  %320 = vmatprep.mubr.f32.mxu0 0.0
  %321 = vmatmul.mubr.f32.gmra.mrb[0].mxu0 %v57
  %v322 = vpop.f32.mrb[0].mxu0
  %v323 = vadd.f32 %v114, %v322
  %v324 = vpop.f32.mrb[0].mxu0
  %325 = vmatprep.mubr.f32.mxu0 0.0
  %326 = vmatmul.mubr.f32.gmra.mrb[0].mxu0 %v58
  %v327 = vpop.f32.mrb[0].mxu0
  %v328 = vadd.f32 %v114, %v327
  %v329 = vpop.f32.mrb[0].mxu0
  %330 = vmatprep.mubr.f32.mxu0 0.0
  %331 = vmatmul.mubr.f32.gmra.mrb[0].mxu0 %v59
  %v332 = vpop.f32.mrb[0].mxu0
  %v333 = vadd.f32 %v114, %v332
  %v334 = vpop.f32.mrb[0].mxu0
  %335 = vmatprep.mubr.f32.mxu0 0.0
  %336 = vmatmul.mubr.f32.gmra.mrb[0].mxu0 %v60
  %v337 = vpop.f32.mrb[0].mxu0
  %v338 = vadd.f32 %v114, %v337
  %v339 = vpop.f32.mrb[0].mxu0
  %340 = vmatprep.mubr.f32.mxu0 0.0
  %341 = vmatmul.mubr.f32.gmra.mrb[0].mxu0 %v61
  %v342 = vpop.f32.mrb[0].mxu0
  %v343 = vadd.f32 %v114, %v342
  %v344 = vpop.f32.mrb[0].mxu0
  %345 = vmatprep.mubr.f32.mxu0 0.0
  %346 = vmatmul.mubr.f32.gmra.mrb[0].mxu0 %v62
  %v347 = vpop.f32.mrb[0].mxu0
  %v348 = vadd.f32 %v114, %v347
  %v349 = vpop.f32.mrb[0].mxu0
  %350 = vmatprep.mubr.f32.mxu0 0.0
  %351 = vmatmul.mubr.f32.gmra.mrb[0].mxu0 %v63
  %v352 = vpop.f32.mrb[0].mxu0
  %v353 = vadd.f32 %v114, %v352
  %v354 = vpop.f32.mrb[0].mxu0
  %355 = vmatprep.mubr.f32.mxu0 0.0
  %356 = vmatmul.mubr.f32.gmra.mrb[0].mxu0 %v64
  %v357 = vpop.f32.mrb[0].mxu0
  %v358 = vadd.f32 %v114, %v357
  %v359 = vpop.f32.mrb[0].mxu0
  %360 = vmatprep.mubr.f32.mxu0 0.0
  %361 = vmatmul.mubr.f32.gmra.mrb[0].mxu0 %v65
  %v362 = vpop.f32.mrb[0].mxu0
  %v363 = vadd.f32 %v114, %v362
  %v364 = vpop.f32.mrb[0].mxu0
  %365 = vmatprep.mubr.f32.mxu0 0.0
  %366 = vmatmul.mubr.f32.gmra.mrb[0].mxu0 %v66
  %v367 = vpop.f32.mrb[0].mxu0
  %v368 = vadd.f32 %v114, %v367
  %v369 = vpop.f32.mrb[0].mxu0
  %370 = vmatprep.mubr.f32.mxu0 0.0
  %371 = vmatmul.mubr.f32.gmra.mrb[0].mxu0 %v67
  %v372 = vpop.f32.mrb[0].mxu0
  %v373 = vadd.f32 %v114, %v372
  %v374 = vpop.f32.mrb[0].mxu0
  %375 = vmatprep.mubr.f32.mxu0 0.0
  %376 = vmatmul.mubr.f32.gmra.mrb[0].mxu0 %v68
  %v377 = vpop.f32.mrb[0].mxu0
  %v378 = vadd.f32 %v114, %v377
  %v379 = vpop.f32.mrb[0].mxu0
  %380 = vmatprep.mubr.f32.mxu0 0.0
  %381 = vmatmul.mubr.f32.gmra.mrb[0].mxu0 %v69
  %v382 = vpop.f32.mrb[0].mxu0
  %v383 = vadd.f32 %v114, %v382
  %v384 = vpop.f32.mrb[0].mxu0
  %385 = vmatprep.mubr.f32.mxu0 0.0
  %386 = vmatmul.mubr.f32.gmra.mrb[0].mxu0 %v70
  %v387 = vpop.f32.mrb[0].mxu0
  %v388 = vadd.f32 %v114, %v387
  %v389 = vpop.f32.mrb[0].mxu0
  %390 = vmatprep.mubr.f32.mxu0 0.0
  %391 = vmatmul.mubr.f32.gmra.mrb[0].mxu0 %v71
  %v392 = vpop.f32.mrb[0].mxu0
  %v393 = vadd.f32 %v114, %v392
  %v394 = vpop.f32.mrb[0].mxu0
  %395 = vmatprep.mubr.f32.mxu0 0.0
  %396 = vmatmul.mubr.f32.gmra.mrb[0].mxu0 %v72
  %v397 = vpop.f32.mrb[0].mxu0
  %v398 = vadd.f32 %v114, %v397
  %v399 = vpop.f32.mrb[0].mxu0
  %400 = vmatprep.mubr.f32.mxu0 0.0
  %401 = vmatmul.mubr.f32.gmra.mrb[0].mxu0 %v73
  %v402 = vpop.f32.mrb[0].mxu0
  %v403 = vadd.f32 %v114, %v402
  %v404 = vpop.f32.mrb[0].mxu0
  %405 = vmatprep.mubr.f32.mxu0 0.0
  %406 = vmatmul.mubr.f32.gmra.mrb[0].mxu0 %v74
  %v407 = vpop.f32.mrb[0].mxu0
  %v408 = vadd.f32 %v114, %v407
  %v409 = vpop.f32.mrb[0].mxu0
  %410 = vmatprep.mubr.f32.mxu0 0.0
  %411 = vmatmul.mubr.f32.gmra.mrb[0].mxu0 %v75
  %v412 = vpop.f32.mrb[0].mxu0
  %v413 = vadd.f32 %v114, %v412
  %v414 = vpop.f32.mrb[0].mxu0
  %415 = vmatprep.mubr.f32.mxu0 0.0
  %416 = vmatmul.mubr.f32.gmra.mrb[0].mxu0 %v76
  %v417 = vpop.f32.mrb[0].mxu0
  %v418 = vadd.f32 %v114, %v417
  %v419 = vpop.f32.mrb[0].mxu0
  %420 = vmatprep.mubr.f32.mxu0 0.0
  %421 = vmatmul.mubr.f32.gmra.mrb[0].mxu0 %v77
  %v422 = vpop.f32.mrb[0].mxu0
  %v423 = vadd.f32 %v114, %v422
  %v424 = vpop.f32.mrb[0].mxu0
  %425 = vmatprep.mubr.f32.mxu0 0.0
  %426 = vmatmul.mubr.f32.gmra.mrb[0].mxu0 %v78
  %v427 = vpop.f32.mrb[0].mxu0
  %v428 = vadd.f32 %v114, %v427
  %v429 = vpop.f32.mrb[0].mxu0
  %430 = vmatprep.mubr.f32.mxu0 0.0
  %431 = vmatmul.mubr.f32.gmra.mrb[0].mxu0 %v79
  %v432 = vpop.f32.mrb[0].mxu0
  %v433 = vadd.f32 %v114, %v432
  %v434 = vpop.f32.mrb[0].mxu0
  %435 = vmatprep.mubr.f32.mxu0 0.0
  %436 = vmatmul.mubr.f32.gmra.mrb[0].mxu0 %v80
  %v437 = vpop.f32.mrb[0].mxu0
  %v438 = vadd.f32 %v114, %v437
  %v439 = vpop.f32.mrb[0].mxu0
  %440 = vmatprep.mubr.f32.mxu0 0.0
  %441 = vmatmul.mubr.f32.gmra.mrb[0].mxu0 %v81
  %v442 = vpop.f32.mrb[0].mxu0
  %v443 = vadd.f32 %v114, %v442
  %v444 = vpop.f32.mrb[0].mxu0
  %445 = vmatprep.mubr.f32.mxu0 0.0
  %446 = vmatmul.mubr.f32.gmra.mrb[0].mxu0 %v82
  %v447 = vpop.f32.mrb[0].mxu0
  %v448 = vadd.f32 %v114, %v447
  %v449 = vpop.f32.mrb[0].mxu0
  %450 = vmatprep.mubr.f32.mxu0 0.0
  %451 = vmatmul.mubr.f32.gmra.mrb[0].mxu0 %v83
  %v452 = vpop.f32.mrb[0].mxu0
  %v453 = vadd.f32 %v114, %v452
  %v454 = vpop.f32.mrb[0].mxu0
  %455 = vmatprep.mubr.f32.mxu0 0.0
  %456 = vmatmul.mubr.f32.gmra.mrb[0].mxu0 %v84
  %v457 = vpop.f32.mrb[0].mxu0
  %v458 = vadd.f32 %v114, %v457
  %v459 = vpop.f32.mrb[0].mxu0
  %460 = vmatprep.mubr.f32.mxu0 0.0
  %461 = vmatmul.mubr.f32.gmra.mrb[0].mxu0 %v85
  %v462 = vpop.f32.mrb[0].mxu0
  %v463 = vadd.f32 %v114, %v462
  %v464 = vpop.f32.mrb[0].mxu0
  %465 = vmatprep.mubr.f32.mxu0 0.0
  %466 = vmatmul.mubr.f32.gmra.mrb[0].mxu0 %v86
  %v467 = vpop.f32.mrb[0].mxu0
  %v468 = vadd.f32 %v114, %v467
  %v469 = vpop.f32.mrb[0].mxu0
  %470 = vmatprep.mubr.f32.mxu0 0.0
  %471 = vmatmul.mubr.f32.gmra.mrb[0].mxu0 %v87
  %v472 = vpop.f32.mrb[0].mxu0
  %v473 = vadd.f32 %v114, %v472
  %v474 = vpop.f32.mrb[0].mxu0
  %475 = vmatprep.mubr.f32.mxu0 0.0
  %476 = vmatmul.mubr.f32.gmra.mrb[0].mxu0 %v88
  %v477 = vpop.f32.mrb[0].mxu0
  %v478 = vadd.f32 %v114, %v477
  %v479 = vpop.f32.mrb[0].mxu0
  %480 = vmatprep.mubr.f32.mxu0 0.0
  %481 = vmatmul.mubr.f32.gmra.mrb[0].mxu0 %v89
  %v482 = vpop.f32.mrb[0].mxu0
  %v483 = vadd.f32 %v114, %v482
  %v484 = vpop.f32.mrb[0].mxu0
  %485 = vmatprep.mubr.f32.mxu0 0.0
  %486 = vmatmul.mubr.f32.gmra.mrb[0].mxu0 %v90
  %v487 = vpop.f32.mrb[0].mxu0
  %v488 = vadd.f32 %v114, %v487
  %v489 = vpop.f32.mrb[0].mxu0
  %490 = vmatprep.mubr.f32.mxu0 0.0
  %491 = vmatmul.mubr.f32.gmra.mrb[0].mxu0 %v91
  %v492 = vpop.f32.mrb[0].mxu0
  %v493 = vadd.f32 %v114, %v492
  %v494 = vpop.f32.mrb[0].mxu0
  %495 = vmatprep.mubr.f32.mxu0 0.0
  %496 = vmatmul.mubr.f32.gmra.mrb[0].mxu0 %v92
  %v497 = vpop.f32.mrb[0].mxu0
  %v498 = vadd.f32 %v114, %v497
  %v499 = vpop.f32.mrb[0].mxu0
  %500 = vdwg.mxu0
  %v501 = vmax.f32 %v183, 0.0
  %v502 = vmax.f32 %v188, 0.0
  %v503 = vmax.f32 %v193, 0.0
  %v504 = vmax.f32 %v198, 0.0
  %v505 = vmax.f32 %v203, 0.0
  %v506 = vmax.f32 %v208, 0.0
  %v507 = vmax.f32 %v213, 0.0
  %v508 = vmax.f32 %v218, 0.0
  %v509 = vmax.f32 %v223, 0.0
  %v510 = vmax.f32 %v228, 0.0
  %v511 = vmax.f32 %v233, 0.0
  %v512 = vmax.f32 %v238, 0.0
  %v513 = vmax.f32 %v243, 0.0
  %v514 = vmax.f32 %v248, 0.0
  %v515 = vmax.f32 %v253, 0.0
  %v516 = vmax.f32 %v258, 0.0
  %v517 = vmax.f32 %v263, 0.0
  %v518 = vmax.f32 %v268, 0.0
  %v519 = vmax.f32 %v273, 0.0
  %v520 = vmax.f32 %v278, 0.0
  %v521 = vmax.f32 %v283, 0.0
  %v522 = vmax.f32 %v288, 0.0
  %v523 = vmax.f32 %v293, 0.0
  %v524 = vmax.f32 %v298, 0.0
  %v525 = vmax.f32 %v303, 0.0
  %v526 = vmax.f32 %v308, 0.0
  %v527 = vmax.f32 %v313, 0.0
  %v528 = vmax.f32 %v318, 0.0
  %v529 = vmax.f32 %v323, 0.0
  %v530 = vmax.f32 %v328, 0.0
  %v531 = vmax.f32 %v333, 0.0
  %v532 = vmax.f32 %v338, 0.0
  %v533 = vmax.f32 %v343, 0.0
  %v534 = vmax.f32 %v348, 0.0
  %v535 = vmax.f32 %v353, 0.0
  %v536 = vmax.f32 %v358, 0.0
  %v537 = vmax.f32 %v363, 0.0
  %v538 = vmax.f32 %v368, 0.0
  %v539 = vmax.f32 %v373, 0.0
  %v540 = vmax.f32 %v378, 0.0
  %v541 = vmax.f32 %v383, 0.0
  %v542 = vmax.f32 %v388, 0.0
  %v543 = vmax.f32 %v393, 0.0
  %v544 = vmax.f32 %v398, 0.0
  %v545 = vmax.f32 %v403, 0.0
  %v546 = vmax.f32 %v408, 0.0
  %v547 = vmax.f32 %v413, 0.0
  %v548 = vmax.f32 %v418, 0.0
  %v549 = vmax.f32 %v423, 0.0
  %v550 = vmax.f32 %v428, 0.0
  %v551 = vmax.f32 %v433, 0.0
  %v552 = vmax.f32 %v438, 0.0
  %v553 = vmax.f32 %v443, 0.0
  %v554 = vmax.f32 %v448, 0.0
  %v555 = vmax.f32 %v453, 0.0
  %v556 = vmax.f32 %v458, 0.0
  %v557 = vmax.f32 %v463, 0.0
  %v558 = vmax.f32 %v468, 0.0
  %v559 = vmax.f32 %v473, 0.0
  %v560 = vmax.f32 %v478, 0.0
  %v561 = vmax.f32 %v483, 0.0
  %v562 = vmax.f32 %v488, 0.0
  %v563 = vmax.f32 %v493, 0.0
  %v564 = vmax.f32 %v498, 0.0
  %v565 = vadd.f32 %v501, %v502
  %v566 = vadd.f32 %v565, %v503
  %v567 = vadd.f32 %v566, %v504
  %v568 = vadd.f32 %v567, %v505
  %v569 = vadd.f32 %v568, %v506
  %v570 = vadd.f32 %v569, %v507
  %v571 = vadd.f32 %v570, %v508
  %v572 = vadd.f32 %v571, %v509
  %v573 = vadd.f32 %v572, %v510
  %v574 = vadd.f32 %v573, %v511
  %v575 = vadd.f32 %v574, %v512
  %v576 = vadd.f32 %v575, %v513
  %v577 = vadd.f32 %v576, %v514
  %v578 = vadd.f32 %v577, %v515
  %v579 = vadd.f32 %v578, %v516
  %v580 = vadd.f32 %v579, %v517
  %v581 = vadd.f32 %v580, %v518
  %v582 = vadd.f32 %v581, %v519
  %v583 = vadd.f32 %v582, %v520
  %v584 = vadd.f32 %v583, %v521
  %v585 = vadd.f32 %v584, %v522
  %v586 = vadd.f32 %v585, %v523
  %v587 = vadd.f32 %v586, %v524
  %v588 = vadd.f32 %v587, %v525
  %v589 = vadd.f32 %v588, %v526
  %v590 = vadd.f32 %v589, %v527
  %v591 = vadd.f32 %v590, %v528
  %v592 = vadd.f32 %v591, %v529
  %v593 = vadd.f32 %v592, %v530
  %v594 = vadd.f32 %v593, %v531
  %v595 = vadd.f32 %v594, %v532
  %v596 = vadd.f32 %v595, %v533
  %v597 = vadd.f32 %v596, %v534
  %v598 = vadd.f32 %v597, %v535
  %v599 = vadd.f32 %v598, %v536
  %v600 = vadd.f32 %v599, %v537
  %v601 = vadd.f32 %v600, %v538
  %v602 = vadd.f32 %v601, %v539
  %v603 = vadd.f32 %v602, %v540
  %v604 = vadd.f32 %v603, %v541
  %v605 = vadd.f32 %v604, %v542
  %v606 = vadd.f32 %v605, %v543
  %v607 = vadd.f32 %v606, %v544
  %v608 = vadd.f32 %v607, %v545
  %v609 = vadd.f32 %v608, %v546
  %v610 = vadd.f32 %v609, %v547
  %v611 = vadd.f32 %v610, %v548
  %v612 = vadd.f32 %v611, %v549
  %v613 = vadd.f32 %v612, %v550
  %v614 = vadd.f32 %v613, %v551
  %v615 = vadd.f32 %v614, %v552
  %v616 = vadd.f32 %v615, %v553
  %v617 = vadd.f32 %v616, %v554
  %v618 = vadd.f32 %v617, %v555
  %v619 = vadd.f32 %v618, %v556
  %v620 = vadd.f32 %v619, %v557
  %v621 = vadd.f32 %v620, %v558
  %v622 = vadd.f32 %v621, %v559
  %v623 = vadd.f32 %v622, %v560
  %v624 = vadd.f32 %v623, %v561
  %v625 = vadd.f32 %v624, %v562
  %v626 = vadd.f32 %v625, %v563
  %v627 = vadd.f32 %v626, %v564
  %v628 = vrot.slane %v627, 4
  %v629 = vadd.f32 %v627, %v628
  %v630 = vrot.slane %v629, 2
  %v631 = vadd.f32 %v629, %v630
  %v632 = vrot.slane %v631, 1
  %v633 = vadd.f32 %v631, %v632
  %v634 = vmul.f32 %v633, 0.001953125
  %v635 = vsub.f32 %v501, %v634
  %v636 = vsub.f32 %v502, %v634
  %v637 = vsub.f32 %v503, %v634
  %v638 = vsub.f32 %v504, %v634
  %v639 = vsub.f32 %v505, %v634
  %v640 = vsub.f32 %v506, %v634
  %v641 = vsub.f32 %v507, %v634
  %v642 = vsub.f32 %v508, %v634
  %v643 = vsub.f32 %v509, %v634
  %v644 = vsub.f32 %v510, %v634
  %v645 = vsub.f32 %v511, %v634
  %v646 = vsub.f32 %v512, %v634
  %v647 = vsub.f32 %v513, %v634
  %v648 = vsub.f32 %v514, %v634
  %v649 = vsub.f32 %v515, %v634
  %v650 = vsub.f32 %v516, %v634
  %v651 = vsub.f32 %v517, %v634
  %v652 = vsub.f32 %v518, %v634
  %v653 = vsub.f32 %v519, %v634
  %v654 = vsub.f32 %v520, %v634
  %v655 = vsub.f32 %v521, %v634
  %v656 = vsub.f32 %v522, %v634
  %v657 = vsub.f32 %v523, %v634
  %v658 = vsub.f32 %v524, %v634
  %v659 = vsub.f32 %v525, %v634
  %v660 = vsub.f32 %v526, %v634
  %v661 = vsub.f32 %v527, %v634
  %v662 = vsub.f32 %v528, %v634
  %v663 = vsub.f32 %v529, %v634
  %v664 = vsub.f32 %v530, %v634
  %v665 = vsub.f32 %v531, %v634
  %v666 = vsub.f32 %v532, %v634
  %v667 = vsub.f32 %v533, %v634
  %v668 = vsub.f32 %v534, %v634
  %v669 = vsub.f32 %v535, %v634
  %v670 = vsub.f32 %v536, %v634
  %v671 = vsub.f32 %v537, %v634
  %v672 = vsub.f32 %v538, %v634
  %v673 = vsub.f32 %v539, %v634
  %v674 = vsub.f32 %v540, %v634
  %v675 = vsub.f32 %v541, %v634
  %v676 = vsub.f32 %v542, %v634
  %v677 = vsub.f32 %v543, %v634
  %v678 = vsub.f32 %v544, %v634
  %v679 = vsub.f32 %v545, %v634
  %v680 = vsub.f32 %v546, %v634
  %v681 = vsub.f32 %v547, %v634
  %v682 = vsub.f32 %v548, %v634
  %v683 = vsub.f32 %v549, %v634
  %v684 = vsub.f32 %v550, %v634
  %v685 = vsub.f32 %v551, %v634
  %v686 = vsub.f32 %v552, %v634
  %v687 = vsub.f32 %v553, %v634
  %v688 = vsub.f32 %v554, %v634
  %v689 = vsub.f32 %v555, %v634
  %v690 = vsub.f32 %v556, %v634
  %v691 = vsub.f32 %v557, %v634
  %v692 = vsub.f32 %v558, %v634
  %v693 = vsub.f32 %v559, %v634
  %v694 = vsub.f32 %v560, %v634
  %v695 = vsub.f32 %v561, %v634
  %v696 = vsub.f32 %v562, %v634
  %v697 = vsub.f32 %v563, %v634
  %v698 = vsub.f32 %v564, %v634
  %v699 = vmul.f32 %v635, %v635
  %v700 = vmul.f32 %v636, %v636
  %v701 = vmul.f32 %v637, %v637
  %v702 = vmul.f32 %v638, %v638
  %v703 = vmul.f32 %v639, %v639
  %v704 = vmul.f32 %v640, %v640
  %v705 = vmul.f32 %v641, %v641
  %v706 = vmul.f32 %v642, %v642
  %v707 = vmul.f32 %v643, %v643
  %v708 = vmul.f32 %v644, %v644
  %v709 = vmul.f32 %v645, %v645
  %v710 = vmul.f32 %v646, %v646
  %v711 = vmul.f32 %v647, %v647
  %v712 = vmul.f32 %v648, %v648
  %v713 = vmul.f32 %v649, %v649
  %v714 = vmul.f32 %v650, %v650
  %v715 = vmul.f32 %v651, %v651
  %v716 = vmul.f32 %v652, %v652
  %v717 = vmul.f32 %v653, %v653
  %v718 = vmul.f32 %v654, %v654
  %v719 = vmul.f32 %v655, %v655
  %v720 = vmul.f32 %v656, %v656
  %v721 = vmul.f32 %v657, %v657
  %v722 = vmul.f32 %v658, %v658
  %v723 = vmul.f32 %v659, %v659
  %v724 = vmul.f32 %v660, %v660
  %v725 = vmul.f32 %v661, %v661
  %v726 = vmul.f32 %v662, %v662
  %v727 = vmul.f32 %v663, %v663
  %v728 = vmul.f32 %v664, %v664
  %v729 = vmul.f32 %v665, %v665
  %v730 = vmul.f32 %v666, %v666
  %v731 = vmul.f32 %v667, %v667
  %v732 = vmul.f32 %v668, %v668
  %v733 = vmul.f32 %v669, %v669
  %v734 = vmul.f32 %v670, %v670
  %v735 = vmul.f32 %v671, %v671
  %v736 = vmul.f32 %v672, %v672
  %v737 = vmul.f32 %v673, %v673
  %v738 = vmul.f32 %v674, %v674
  %v739 = vmul.f32 %v675, %v675
  %v740 = vmul.f32 %v676, %v676
  %v741 = vmul.f32 %v677, %v677
  %v742 = vmul.f32 %v678, %v678
  %v743 = vmul.f32 %v679, %v679
  %v744 = vmul.f32 %v680, %v680
  %v745 = vmul.f32 %v681, %v681
  %v746 = vmul.f32 %v682, %v682
  %v747 = vmul.f32 %v683, %v683
  %v748 = vmul.f32 %v684, %v684
  %v749 = vmul.f32 %v685, %v685
  %v750 = vmul.f32 %v686, %v686
  %v751 = vmul.f32 %v687, %v687
  %v752 = vmul.f32 %v688, %v688
  %v753 = vmul.f32 %v689, %v689
  %v754 = vmul.f32 %v690, %v690
  %v755 = vmul.f32 %v691, %v691
  %v756 = vmul.f32 %v692, %v692
  %v757 = vmul.f32 %v693, %v693
  %v758 = vmul.f32 %v694, %v694
  %v759 = vmul.f32 %v695, %v695
  %v760 = vmul.f32 %v696, %v696
  %v761 = vmul.f32 %v697, %v697
  %v762 = vmul.f32 %v698, %v698
  %v763 = vadd.f32 %v699, %v700
  %v764 = vadd.f32 %v763, %v701
  %v765 = vadd.f32 %v764, %v702
  %v766 = vadd.f32 %v765, %v703
  %v767 = vadd.f32 %v766, %v704
  %v768 = vadd.f32 %v767, %v705
  %v769 = vadd.f32 %v768, %v706
  %v770 = vadd.f32 %v769, %v707
  %v771 = vadd.f32 %v770, %v708
  %v772 = vadd.f32 %v771, %v709
  %v773 = vadd.f32 %v772, %v710
  %v774 = vadd.f32 %v773, %v711
  %v775 = vadd.f32 %v774, %v712
  %v776 = vadd.f32 %v775, %v713
  %v777 = vadd.f32 %v776, %v714
  %v778 = vadd.f32 %v777, %v715
  %v779 = vadd.f32 %v778, %v716
  %v780 = vadd.f32 %v779, %v717
  %v781 = vadd.f32 %v780, %v718
  %v782 = vadd.f32 %v781, %v719
  %v783 = vadd.f32 %v782, %v720
  %v784 = vadd.f32 %v783, %v721
  %v785 = vadd.f32 %v784, %v722
  %v786 = vadd.f32 %v785, %v723
  %v787 = vadd.f32 %v786, %v724
  %v788 = vadd.f32 %v787, %v725
  %v789 = vadd.f32 %v788, %v726
  %v790 = vadd.f32 %v789, %v727
  %v791 = vadd.f32 %v790, %v728
  %v792 = vadd.f32 %v791, %v729
  %v793 = vadd.f32 %v792, %v730
  %v794 = vadd.f32 %v793, %v731
  %v795 = vadd.f32 %v794, %v732
  %v796 = vadd.f32 %v795, %v733
  %v797 = vadd.f32 %v796, %v734
  %v798 = vadd.f32 %v797, %v735
  %v799 = vadd.f32 %v798, %v736
  %v800 = vadd.f32 %v799, %v737
  %v801 = vadd.f32 %v800, %v738
  %v802 = vadd.f32 %v801, %v739
  %v803 = vadd.f32 %v802, %v740
  %v804 = vadd.f32 %v803, %v741
  %v805 = vadd.f32 %v804, %v742
  %v806 = vadd.f32 %v805, %v743
  %v807 = vadd.f32 %v806, %v744
  %v808 = vadd.f32 %v807, %v745
  %v809 = vadd.f32 %v808, %v746
  %v810 = vadd.f32 %v809, %v747
  %v811 = vadd.f32 %v810, %v748
  %v812 = vadd.f32 %v811, %v749
  %v813 = vadd.f32 %v812, %v750
  %v814 = vadd.f32 %v813, %v751
  %v815 = vadd.f32 %v814, %v752
  %v816 = vadd.f32 %v815, %v753
  %v817 = vadd.f32 %v816, %v754
  %v818 = vadd.f32 %v817, %v755
  %v819 = vadd.f32 %v818, %v756
  %v820 = vadd.f32 %v819, %v757
  %v821 = vadd.f32 %v820, %v758
  %v822 = vadd.f32 %v821, %v759
  %v823 = vadd.f32 %v822, %v760
  %v824 = vadd.f32 %v823, %v761
  %v825 = vadd.f32 %v824, %v762
  %v826 = vrot.slane %v825, 4
  %v827 = vadd.f32 %v825, %v826
  %v828 = vrot.slane %v827, 2
  %v829 = vadd.f32 %v827, %v828
  %v830 = vrot.slane %v829, 1
  %v831 = vadd.f32 %v829, %v830
  %v832 = vmul.f32 %v831, 0.001953125
  %v833 = vld [vmem:[%s3] sm:$0x1]
  %v834 = vadd.f32 %v832, 1e-05
  %v835 = vrsqrt.pop %v834
  %v836 = vmul.f32 %v833, %v835
  %v838 = vlaneseq
  %v839 = vshrl.u32 %v838, 7
  %v840 = vsub.s32 0, %v839
  %v841 = vrot.slane %v836, %v840
  %v843 = vmul.f32 %v635, %v841
  %v844 = vmul.f32 %v636, %v841
  %v845 = vmul.f32 %v637, %v841
  %v846 = vmul.f32 %v638, %v841
  %v847 = vmul.f32 %v639, %v841
  %v848 = vmul.f32 %v640, %v841
  %v849 = vmul.f32 %v641, %v841
  %v850 = vmul.f32 %v642, %v841
  %v851 = vmul.f32 %v643, %v841
  %v852 = vmul.f32 %v644, %v841
  %v853 = vmul.f32 %v645, %v841
  %v854 = vmul.f32 %v646, %v841
  %v855 = vmul.f32 %v647, %v841
  %v856 = vmul.f32 %v648, %v841
  %v857 = vmul.f32 %v649, %v841
  %v858 = vmul.f32 %v650, %v841
  %v859 = vmul.f32 %v651, %v841
  %v860 = vmul.f32 %v652, %v841
  %v861 = vmul.f32 %v653, %v841
  %v862 = vmul.f32 %v654, %v841
  %v863 = vmul.f32 %v655, %v841
  %v864 = vmul.f32 %v656, %v841
  %v865 = vmul.f32 %v657, %v841
  %v866 = vmul.f32 %v658, %v841
  %v867 = vmul.f32 %v659, %v841
  %v868 = vmul.f32 %v660, %v841
  %v869 = vmul.f32 %v661, %v841
  %v870 = vmul.f32 %v662, %v841
  %v871 = vmul.f32 %v663, %v841
  %v872 = vmul.f32 %v664, %v841
  %v873 = vmul.f32 %v665, %v841
  %v874 = vmul.f32 %v666, %v841
  %v875 = vmul.f32 %v667, %v841
  %v876 = vmul.f32 %v668, %v841
  %v877 = vmul.f32 %v669, %v841
  %v878 = vmul.f32 %v670, %v841
  %v879 = vmul.f32 %v671, %v841
  %v880 = vmul.f32 %v672, %v841
  %v881 = vmul.f32 %v673, %v841
  %v882 = vmul.f32 %v674, %v841
  %v883 = vmul.f32 %v675, %v841
  %v884 = vmul.f32 %v676, %v841
  %v885 = vmul.f32 %v677, %v841
  %v886 = vmul.f32 %v678, %v841
  %v887 = vmul.f32 %v679, %v841
  %v888 = vmul.f32 %v680, %v841
  %v889 = vmul.f32 %v681, %v841
  %v890 = vmul.f32 %v682, %v841
  %v891 = vmul.f32 %v683, %v841
  %v892 = vmul.f32 %v684, %v841
  %v893 = vmul.f32 %v685, %v841
  %v894 = vmul.f32 %v686, %v841
  %v895 = vmul.f32 %v687, %v841
  %v896 = vmul.f32 %v688, %v841
  %v897 = vmul.f32 %v689, %v841
  %v898 = vmul.f32 %v690, %v841
  %v899 = vmul.f32 %v691, %v841
  %v900 = vmul.f32 %v692, %v841
  %v901 = vmul.f32 %v693, %v841
  %v902 = vmul.f32 %v694, %v841
  %v903 = vmul.f32 %v695, %v841
  %v904 = vmul.f32 %v696, %v841
  %v905 = vmul.f32 %v697, %v841
  %v906 = vmul.f32 %v698, %v841
  %v907 = vld [vmem:[%s4] sm:$0x1]
  %v909 = vlaneseq
  %v910 = vshrl.u32 %v909, 7
  %v911 = vsub.s32 0, %v910
  %v912 = vrot.slane %v907, %v911
  %v914 = vadd.f32 %v843, %v912
  %v915 = vadd.f32 %v844, %v912
  %v916 = vadd.f32 %v845, %v912
  %v917 = vadd.f32 %v846, %v912
  %v918 = vadd.f32 %v847, %v912
  %v919 = vadd.f32 %v848, %v912
  %v920 = vadd.f32 %v849, %v912
  %v921 = vadd.f32 %v850, %v912
  %v922 = vadd.f32 %v851, %v912
  %v923 = vadd.f32 %v852, %v912
  %v924 = vadd.f32 %v853, %v912
  %v925 = vadd.f32 %v854, %v912
  %v926 = vadd.f32 %v855, %v912
  %v927 = vadd.f32 %v856, %v912
  %v928 = vadd.f32 %v857, %v912
  %v929 = vadd.f32 %v858, %v912
  %v930 = vadd.f32 %v859, %v912
  %v931 = vadd.f32 %v860, %v912
  %v932 = vadd.f32 %v861, %v912
  %v933 = vadd.f32 %v862, %v912
  %v934 = vadd.f32 %v863, %v912
  %v935 = vadd.f32 %v864, %v912
  %v936 = vadd.f32 %v865, %v912
  %v937 = vadd.f32 %v866, %v912
  %v938 = vadd.f32 %v867, %v912
  %v939 = vadd.f32 %v868, %v912
  %v940 = vadd.f32 %v869, %v912
  %v941 = vadd.f32 %v870, %v912
  %v942 = vadd.f32 %v871, %v912
  %v943 = vadd.f32 %v872, %v912
  %v944 = vadd.f32 %v873, %v912
  %v945 = vadd.f32 %v874, %v912
  %v946 = vadd.f32 %v875, %v912
  %v947 = vadd.f32 %v876, %v912
  %v948 = vadd.f32 %v877, %v912
  %v949 = vadd.f32 %v878, %v912
  %v950 = vadd.f32 %v879, %v912
  %v951 = vadd.f32 %v880, %v912
  %v952 = vadd.f32 %v881, %v912
  %v953 = vadd.f32 %v882, %v912
  %v954 = vadd.f32 %v883, %v912
  %v955 = vadd.f32 %v884, %v912
  %v956 = vadd.f32 %v885, %v912
  %v957 = vadd.f32 %v886, %v912
  %v958 = vadd.f32 %v887, %v912
  %v959 = vadd.f32 %v888, %v912
  %v960 = vadd.f32 %v889, %v912
  %v961 = vadd.f32 %v890, %v912
  %v962 = vadd.f32 %v891, %v912
  %v963 = vadd.f32 %v892, %v912
  %v964 = vadd.f32 %v893, %v912
  %v965 = vadd.f32 %v894, %v912
  %v966 = vadd.f32 %v895, %v912
  %v967 = vadd.f32 %v896, %v912
  %v968 = vadd.f32 %v897, %v912
  %v969 = vadd.f32 %v898, %v912
  %v970 = vadd.f32 %v899, %v912
  %v971 = vadd.f32 %v900, %v912
  %v972 = vadd.f32 %v901, %v912
  %v973 = vadd.f32 %v902, %v912
  %v974 = vadd.f32 %v903, %v912
  %v975 = vadd.f32 %v904, %v912
  %v976 = vadd.f32 %v905, %v912
  %v977 = vadd.f32 %v906, %v912
  %v978 = vrot.slane %v914, 7
  %v979 = vrot.slane %v915, 7
  %v980 = vrot.slane %v916, 7
  %v981 = vrot.slane %v917, 7
  %v982 = vrot.slane %v918, 7
  %v983 = vrot.slane %v919, 7
  %v984 = vrot.slane %v920, 7
  %v985 = vrot.slane %v921, 7
  %v986 = vrot.slane %v922, 7
  %v987 = vrot.slane %v923, 7
  %v988 = vrot.slane %v924, 7
  %v989 = vrot.slane %v925, 7
  %v990 = vrot.slane %v926, 7
  %v991 = vrot.slane %v927, 7
  %v992 = vrot.slane %v928, 7
  %v993 = vrot.slane %v929, 7
  %v994 = vrot.slane %v930, 7
  %v995 = vrot.slane %v931, 7
  %v996 = vrot.slane %v932, 7
  %v997 = vrot.slane %v933, 7
  %v998 = vrot.slane %v934, 7
  %v999 = vrot.slane %v935, 7
  %v1000 = vrot.slane %v936, 7
  %v1001 = vrot.slane %v937, 7
  %v1002 = vrot.slane %v938, 7
  %v1003 = vrot.slane %v939, 7
  %v1004 = vrot.slane %v940, 7
  %v1005 = vrot.slane %v941, 7
  %v1006 = vrot.slane %v942, 7
  %v1007 = vrot.slane %v943, 7
  %v1008 = vrot.slane %v944, 7
  %v1009 = vrot.slane %v945, 7
  %v1010 = vrot.slane %v946, 7
  %v1011 = vrot.slane %v947, 7
  %v1012 = vrot.slane %v948, 7
  %v1013 = vrot.slane %v949, 7
  %v1014 = vrot.slane %v950, 7
  %v1015 = vrot.slane %v951, 7
  %v1016 = vrot.slane %v952, 7
  %v1017 = vrot.slane %v953, 7
  %v1018 = vrot.slane %v954, 7
  %v1019 = vrot.slane %v955, 7
  %v1020 = vrot.slane %v956, 7
  %v1021 = vrot.slane %v957, 7
  %v1022 = vrot.slane %v958, 7
  %v1023 = vrot.slane %v959, 7
  %v1024 = vrot.slane %v960, 7
  %v1025 = vrot.slane %v961, 7
  %v1026 = vrot.slane %v962, 7
  %v1027 = vrot.slane %v963, 7
  %v1028 = vrot.slane %v964, 7
  %v1029 = vrot.slane %v965, 7
  %v1030 = vrot.slane %v966, 7
  %v1031 = vrot.slane %v967, 7
  %v1032 = vrot.slane %v968, 7
  %v1033 = vrot.slane %v969, 7
  %v1034 = vrot.slane %v970, 7
  %v1035 = vrot.slane %v971, 7
  %v1036 = vrot.slane %v972, 7
  %v1037 = vrot.slane %v973, 7
  %v1038 = vrot.slane %v974, 7
  %v1039 = vrot.slane %v975, 7
  %v1040 = vrot.slane %v976, 7
  %v1041 = vrot.slane %v977, 7
  %v1042 = vlaneseq
  %v1043 = vshrl.u32 %v1042, 7
  %vm1044 = vcmp.lt.s32.totalorder %v1043, 1
  %v1045 = vsel %vm1044, %v1040, %v1041
  %v1046 = vsel %vm1044, %v1039, %v1040
  %v1047 = vsel %vm1044, %v1038, %v1039
  %v1048 = vsel %vm1044, %v1037, %v1038
  %v1049 = vsel %vm1044, %v1036, %v1037
  %v1050 = vsel %vm1044, %v1035, %v1036
  %v1051 = vsel %vm1044, %v1034, %v1035
  %v1052 = vsel %vm1044, %v1033, %v1034
  %v1053 = vsel %vm1044, %v1032, %v1033
  %v1054 = vsel %vm1044, %v1031, %v1032
  %v1055 = vsel %vm1044, %v1030, %v1031
  %v1056 = vsel %vm1044, %v1029, %v1030
  %v1057 = vsel %vm1044, %v1028, %v1029
  %v1058 = vsel %vm1044, %v1027, %v1028
  %v1059 = vsel %vm1044, %v1026, %v1027
  %v1060 = vsel %vm1044, %v1025, %v1026
  %v1061 = vsel %vm1044, %v1024, %v1025
  %v1062 = vsel %vm1044, %v1023, %v1024
  %v1063 = vsel %vm1044, %v1022, %v1023
  %v1064 = vsel %vm1044, %v1021, %v1022
  %v1065 = vsel %vm1044, %v1020, %v1021
  %v1066 = vsel %vm1044, %v1019, %v1020
  %v1067 = vsel %vm1044, %v1018, %v1019
  %v1068 = vsel %vm1044, %v1017, %v1018
  %v1069 = vsel %vm1044, %v1016, %v1017
  %v1070 = vsel %vm1044, %v1015, %v1016
  %v1071 = vsel %vm1044, %v1014, %v1015
  %v1072 = vsel %vm1044, %v1013, %v1014
  %v1073 = vsel %vm1044, %v1012, %v1013
  %v1074 = vsel %vm1044, %v1011, %v1012
  %v1075 = vsel %vm1044, %v1010, %v1011
  %v1076 = vsel %vm1044, %v1009, %v1010
  %v1077 = vsel %vm1044, %v1008, %v1009
  %v1078 = vsel %vm1044, %v1007, %v1008
  %v1079 = vsel %vm1044, %v1006, %v1007
  %v1080 = vsel %vm1044, %v1005, %v1006
  %v1081 = vsel %vm1044, %v1004, %v1005
  %v1082 = vsel %vm1044, %v1003, %v1004
  %v1083 = vsel %vm1044, %v1002, %v1003
  %v1084 = vsel %vm1044, %v1001, %v1002
  %v1085 = vsel %vm1044, %v1000, %v1001
  %v1086 = vsel %vm1044, %v999, %v1000
  %v1087 = vsel %vm1044, %v998, %v999
  %v1088 = vsel %vm1044, %v997, %v998
  %v1089 = vsel %vm1044, %v996, %v997
  %v1090 = vsel %vm1044, %v995, %v996
  %v1091 = vsel %vm1044, %v994, %v995
  %v1092 = vsel %vm1044, %v993, %v994
  %v1093 = vsel %vm1044, %v992, %v993
  %v1094 = vsel %vm1044, %v991, %v992
  %v1095 = vsel %vm1044, %v990, %v991
  %v1096 = vsel %vm1044, %v989, %v990
  %v1097 = vsel %vm1044, %v988, %v989
  %v1098 = vsel %vm1044, %v987, %v988
  %v1099 = vsel %vm1044, %v986, %v987
  %v1100 = vsel %vm1044, %v985, %v986
  %v1101 = vsel %vm1044, %v984, %v985
  %v1102 = vsel %vm1044, %v983, %v984
  %v1103 = vsel %vm1044, %v982, %v983
  %v1104 = vsel %vm1044, %v981, %v982
  %v1105 = vsel %vm1044, %v980, %v981
  %v1106 = vsel %vm1044, %v979, %v980
  %v1107 = vsel %vm1044, %v978, %v979
  %v1108 = vsel %vm1044, %v1041, %v978
  %v1109 = vld [vmem:[%s7] sm:$0xff]
  %v1110 = vld [vmem:[%s7 + $0x8] sm:$0xff]
  %v1111 = vld [vmem:[%s7 + $0x10] sm:$0xff]
  %v1112 = vld [vmem:[%s7 + $0x18] sm:$0xff]
  %v1113 = vld [vmem:[%s7 + $0x20] sm:$0xff]
  %v1114 = vld [vmem:[%s7 + $0x28] sm:$0xff]
  %v1115 = vld [vmem:[%s7 + $0x30] sm:$0xff]
  %v1116 = vld [vmem:[%s7 + $0x38] sm:$0xff]
  %v1117 = vld [vmem:[%s7 + $0x40] sm:$0xff]
  %v1118 = vld [vmem:[%s7 + $0x48] sm:$0xff]
  %v1119 = vld [vmem:[%s7 + $0x50] sm:$0xff]
  %v1120 = vld [vmem:[%s7 + $0x58] sm:$0xff]
  %v1121 = vld [vmem:[%s7 + $0x60] sm:$0xff]
  %v1122 = vld [vmem:[%s7 + $0x68] sm:$0xff]
  %v1123 = vld [vmem:[%s7 + $0x70] sm:$0xff]
  %v1124 = vld [vmem:[%s7 + $0x78] sm:$0xff]
  %v1125 = vld [vmem:[%s7 + $0x80] sm:$0xff]
  %v1126 = vld [vmem:[%s7 + $0x88] sm:$0xff]
  %v1127 = vld [vmem:[%s7 + $0x90] sm:$0xff]
  %v1128 = vld [vmem:[%s7 + $0x98] sm:$0xff]
  %v1129 = vld [vmem:[%s7 + $0xa0] sm:$0xff]
  %v1130 = vld [vmem:[%s7 + $0xa8] sm:$0xff]
  %v1131 = vld [vmem:[%s7 + $0xb0] sm:$0xff]
  %v1132 = vld [vmem:[%s7 + $0xb8] sm:$0xff]
  %v1133 = vld [vmem:[%s7 + $0xc0] sm:$0xff]
  %v1134 = vld [vmem:[%s7 + $0xc8] sm:$0xff]
  %v1135 = vld [vmem:[%s7 + $0xd0] sm:$0xff]
  %v1136 = vld [vmem:[%s7 + $0xd8] sm:$0xff]
  %v1137 = vld [vmem:[%s7 + $0xe0] sm:$0xff]
  %v1138 = vld [vmem:[%s7 + $0xe8] sm:$0xff]
  %v1139 = vld [vmem:[%s7 + $0xf0] sm:$0xff]
  %v1140 = vld [vmem:[%s7 + $0xf8] sm:$0xff]
  %v1141 = vld [vmem:[%s7 + $0x100] sm:$0xff]
  %v1142 = vld [vmem:[%s7 + $0x108] sm:$0xff]
  %v1143 = vld [vmem:[%s7 + $0x110] sm:$0xff]
  %v1144 = vld [vmem:[%s7 + $0x118] sm:$0xff]
  %v1145 = vld [vmem:[%s7 + $0x120] sm:$0xff]
  %v1146 = vld [vmem:[%s7 + $0x128] sm:$0xff]
  %v1147 = vld [vmem:[%s7 + $0x130] sm:$0xff]
  %v1148 = vld [vmem:[%s7 + $0x138] sm:$0xff]
  %v1149 = vld [vmem:[%s7 + $0x140] sm:$0xff]
  %v1150 = vld [vmem:[%s7 + $0x148] sm:$0xff]
  %v1151 = vld [vmem:[%s7 + $0x150] sm:$0xff]
  %v1152 = vld [vmem:[%s7 + $0x158] sm:$0xff]
  %v1153 = vld [vmem:[%s7 + $0x160] sm:$0xff]
  %v1154 = vld [vmem:[%s7 + $0x168] sm:$0xff]
  %v1155 = vld [vmem:[%s7 + $0x170] sm:$0xff]
  %v1156 = vld [vmem:[%s7 + $0x178] sm:$0xff]
  %v1157 = vld [vmem:[%s7 + $0x180] sm:$0xff]
  %v1158 = vld [vmem:[%s7 + $0x188] sm:$0xff]
  %v1159 = vld [vmem:[%s7 + $0x190] sm:$0xff]
  %v1160 = vld [vmem:[%s7 + $0x198] sm:$0xff]
  %v1161 = vld [vmem:[%s7 + $0x1a0] sm:$0xff]
  %v1162 = vld [vmem:[%s7 + $0x1a8] sm:$0xff]
  %v1163 = vld [vmem:[%s7 + $0x1b0] sm:$0xff]
  %v1164 = vld [vmem:[%s7 + $0x1b8] sm:$0xff]
  %v1165 = vld [vmem:[%s7 + $0x1c0] sm:$0xff]
  %v1166 = vld [vmem:[%s7 + $0x1c8] sm:$0xff]
  %v1167 = vld [vmem:[%s7 + $0x1d0] sm:$0xff]
  %v1168 = vld [vmem:[%s7 + $0x1d8] sm:$0xff]
  %v1169 = vld [vmem:[%s7 + $0x1e0] sm:$0xff]
  %v1170 = vld [vmem:[%s7 + $0x1e8] sm:$0xff]
  %v1171 = vld [vmem:[%s7 + $0x1f0] sm:$0xff]
  %v1172 = vld [vmem:[%s7 + $0x1f8] sm:$0xff]
  %1174 = vset.pattern.permute.xlu0 0
  %1175 = vperm.xlu0 %1174, %v1109
  %v1176 = vpop.permute.xlu0 %1175
  %1179 = vset.pattern.permute.xlu0 0
  %1180 = vperm.xlu0 %1179, %v1110
  %v1181 = vpop.permute.xlu0 %1180
  %1184 = vset.pattern.permute.xlu0 0
  %1185 = vperm.xlu0 %1184, %v1111
  %v1186 = vpop.permute.xlu0 %1185
  %1189 = vset.pattern.permute.xlu0 0
  %1190 = vperm.xlu0 %1189, %v1112
  %v1191 = vpop.permute.xlu0 %1190
  %1194 = vset.pattern.permute.xlu0 0
  %1195 = vperm.xlu0 %1194, %v1113
  %v1196 = vpop.permute.xlu0 %1195
  %1199 = vset.pattern.permute.xlu0 0
  %1200 = vperm.xlu0 %1199, %v1114
  %v1201 = vpop.permute.xlu0 %1200
  %1204 = vset.pattern.permute.xlu0 0
  %1205 = vperm.xlu0 %1204, %v1115
  %v1206 = vpop.permute.xlu0 %1205
  %1209 = vset.pattern.permute.xlu0 0
  %1210 = vperm.xlu0 %1209, %v1116
  %v1211 = vpop.permute.xlu0 %1210
  %1214 = vset.pattern.permute.xlu0 0
  %1215 = vperm.xlu0 %1214, %v1117
  %v1216 = vpop.permute.xlu0 %1215
  %1219 = vset.pattern.permute.xlu0 0
  %1220 = vperm.xlu0 %1219, %v1118
  %v1221 = vpop.permute.xlu0 %1220
  %1224 = vset.pattern.permute.xlu0 0
  %1225 = vperm.xlu0 %1224, %v1119
  %v1226 = vpop.permute.xlu0 %1225
  %1229 = vset.pattern.permute.xlu0 0
  %1230 = vperm.xlu0 %1229, %v1120
  %v1231 = vpop.permute.xlu0 %1230
  %1234 = vset.pattern.permute.xlu0 0
  %1235 = vperm.xlu0 %1234, %v1121
  %v1236 = vpop.permute.xlu0 %1235
  %1239 = vset.pattern.permute.xlu0 0
  %1240 = vperm.xlu0 %1239, %v1122
  %v1241 = vpop.permute.xlu0 %1240
  %1244 = vset.pattern.permute.xlu0 0
  %1245 = vperm.xlu0 %1244, %v1123
  %v1246 = vpop.permute.xlu0 %1245
  %1249 = vset.pattern.permute.xlu0 0
  %1250 = vperm.xlu0 %1249, %v1124
  %v1251 = vpop.permute.xlu0 %1250
  %1254 = vset.pattern.permute.xlu0 0
  %1255 = vperm.xlu0 %1254, %v1125
  %v1256 = vpop.permute.xlu0 %1255
  %1259 = vset.pattern.permute.xlu0 0
  %1260 = vperm.xlu0 %1259, %v1126
  %v1261 = vpop.permute.xlu0 %1260
  %1264 = vset.pattern.permute.xlu0 0
  %1265 = vperm.xlu0 %1264, %v1127
  %v1266 = vpop.permute.xlu0 %1265
  %1269 = vset.pattern.permute.xlu0 0
  %1270 = vperm.xlu0 %1269, %v1128
  %v1271 = vpop.permute.xlu0 %1270
  %1274 = vset.pattern.permute.xlu0 0
  %1275 = vperm.xlu0 %1274, %v1129
  %v1276 = vpop.permute.xlu0 %1275
  %1279 = vset.pattern.permute.xlu0 0
  %1280 = vperm.xlu0 %1279, %v1130
  %v1281 = vpop.permute.xlu0 %1280
  %1284 = vset.pattern.permute.xlu0 0
  %1285 = vperm.xlu0 %1284, %v1131
  %v1286 = vpop.permute.xlu0 %1285
  %1289 = vset.pattern.permute.xlu0 0
  %1290 = vperm.xlu0 %1289, %v1132
  %v1291 = vpop.permute.xlu0 %1290
  %1294 = vset.pattern.permute.xlu0 0
  %1295 = vperm.xlu0 %1294, %v1133
  %v1296 = vpop.permute.xlu0 %1295
  %1299 = vset.pattern.permute.xlu0 0
  %1300 = vperm.xlu0 %1299, %v1134
  %v1301 = vpop.permute.xlu0 %1300
  %1304 = vset.pattern.permute.xlu0 0
  %1305 = vperm.xlu0 %1304, %v1135
  %v1306 = vpop.permute.xlu0 %1305
  %1309 = vset.pattern.permute.xlu0 0
  %1310 = vperm.xlu0 %1309, %v1136
  %v1311 = vpop.permute.xlu0 %1310
  %1314 = vset.pattern.permute.xlu0 0
  %1315 = vperm.xlu0 %1314, %v1137
  %v1316 = vpop.permute.xlu0 %1315
  %1319 = vset.pattern.permute.xlu0 0
  %1320 = vperm.xlu0 %1319, %v1138
  %v1321 = vpop.permute.xlu0 %1320
  %1324 = vset.pattern.permute.xlu0 0
  %1325 = vperm.xlu0 %1324, %v1139
  %v1326 = vpop.permute.xlu0 %1325
  %1329 = vset.pattern.permute.xlu0 0
  %1330 = vperm.xlu0 %1329, %v1140
  %v1331 = vpop.permute.xlu0 %1330
  %1334 = vset.pattern.permute.xlu0 0
  %1335 = vperm.xlu0 %1334, %v1141
  %v1336 = vpop.permute.xlu0 %1335
  %1339 = vset.pattern.permute.xlu0 0
  %1340 = vperm.xlu0 %1339, %v1142
  %v1341 = vpop.permute.xlu0 %1340
  %1344 = vset.pattern.permute.xlu0 0
  %1345 = vperm.xlu0 %1344, %v1143
  %v1346 = vpop.permute.xlu0 %1345
  %1349 = vset.pattern.permute.xlu0 0
  %1350 = vperm.xlu0 %1349, %v1144
  %v1351 = vpop.permute.xlu0 %1350
  %1354 = vset.pattern.permute.xlu0 0
  %1355 = vperm.xlu0 %1354, %v1145
  %v1356 = vpop.permute.xlu0 %1355
  %1359 = vset.pattern.permute.xlu0 0
  %1360 = vperm.xlu0 %1359, %v1146
  %v1361 = vpop.permute.xlu0 %1360
  %1364 = vset.pattern.permute.xlu0 0
  %1365 = vperm.xlu0 %1364, %v1147
  %v1366 = vpop.permute.xlu0 %1365
  %1369 = vset.pattern.permute.xlu0 0
  %1370 = vperm.xlu0 %1369, %v1148
  %v1371 = vpop.permute.xlu0 %1370
  %1374 = vset.pattern.permute.xlu0 0
  %1375 = vperm.xlu0 %1374, %v1149
  %v1376 = vpop.permute.xlu0 %1375
  %1379 = vset.pattern.permute.xlu0 0
  %1380 = vperm.xlu0 %1379, %v1150
  %v1381 = vpop.permute.xlu0 %1380
  %1384 = vset.pattern.permute.xlu0 0
  %1385 = vperm.xlu0 %1384, %v1151
  %v1386 = vpop.permute.xlu0 %1385
  %1389 = vset.pattern.permute.xlu0 0
  %1390 = vperm.xlu0 %1389, %v1152
  %v1391 = vpop.permute.xlu0 %1390
  %1394 = vset.pattern.permute.xlu0 0
  %1395 = vperm.xlu0 %1394, %v1153
  %v1396 = vpop.permute.xlu0 %1395
  %1399 = vset.pattern.permute.xlu0 0
  %1400 = vperm.xlu0 %1399, %v1154
  %v1401 = vpop.permute.xlu0 %1400
  %1404 = vset.pattern.permute.xlu0 0
  %1405 = vperm.xlu0 %1404, %v1155
  %v1406 = vpop.permute.xlu0 %1405
  %1409 = vset.pattern.permute.xlu0 0
  %1410 = vperm.xlu0 %1409, %v1156
  %v1411 = vpop.permute.xlu0 %1410
  %1414 = vset.pattern.permute.xlu0 0
  %1415 = vperm.xlu0 %1414, %v1157
  %v1416 = vpop.permute.xlu0 %1415
  %1419 = vset.pattern.permute.xlu0 0
  %1420 = vperm.xlu0 %1419, %v1158
  %v1421 = vpop.permute.xlu0 %1420
  %1424 = vset.pattern.permute.xlu0 0
  %1425 = vperm.xlu0 %1424, %v1159
  %v1426 = vpop.permute.xlu0 %1425
  %1429 = vset.pattern.permute.xlu0 0
  %1430 = vperm.xlu0 %1429, %v1160
  %v1431 = vpop.permute.xlu0 %1430
  %1434 = vset.pattern.permute.xlu0 0
  %1435 = vperm.xlu0 %1434, %v1161
  %v1436 = vpop.permute.xlu0 %1435
  %1439 = vset.pattern.permute.xlu0 0
  %1440 = vperm.xlu0 %1439, %v1162
  %v1441 = vpop.permute.xlu0 %1440
  %1444 = vset.pattern.permute.xlu0 0
  %1445 = vperm.xlu0 %1444, %v1163
  %v1446 = vpop.permute.xlu0 %1445
  %1449 = vset.pattern.permute.xlu0 0
  %1450 = vperm.xlu0 %1449, %v1164
  %v1451 = vpop.permute.xlu0 %1450
  %1454 = vset.pattern.permute.xlu0 0
  %1455 = vperm.xlu0 %1454, %v1165
  %v1456 = vpop.permute.xlu0 %1455
  %1459 = vset.pattern.permute.xlu0 0
  %1460 = vperm.xlu0 %1459, %v1166
  %v1461 = vpop.permute.xlu0 %1460
  %1464 = vset.pattern.permute.xlu0 0
  %1465 = vperm.xlu0 %1464, %v1167
  %v1466 = vpop.permute.xlu0 %1465
  %1469 = vset.pattern.permute.xlu0 0
  %1470 = vperm.xlu0 %1469, %v1168
  %v1471 = vpop.permute.xlu0 %1470
  %1474 = vset.pattern.permute.xlu0 0
  %1475 = vperm.xlu0 %1474, %v1169
  %v1476 = vpop.permute.xlu0 %1475
  %1479 = vset.pattern.permute.xlu0 0
  %1480 = vperm.xlu0 %1479, %v1170
  %v1481 = vpop.permute.xlu0 %1480
  %1484 = vset.pattern.permute.xlu0 0
  %1485 = vperm.xlu0 %1484, %v1171
  %v1486 = vpop.permute.xlu0 %1485
  %1489 = vset.pattern.permute.xlu0 0
  %1490 = vperm.xlu0 %1489, %v1172
  %v1491 = vpop.permute.xlu0 %1490
  %v1493 = vmul.f32 %v1046, %v1176
  %v1494 = vmul.f32 %v1045, %v1181
  %v1495 = vmul.f32 %v1108, %v1186
  %v1496 = vmul.f32 %v1107, %v1191
  %v1497 = vmul.f32 %v1106, %v1196
  %v1498 = vmul.f32 %v1105, %v1201
  %v1499 = vmul.f32 %v1104, %v1206
  %v1500 = vmul.f32 %v1103, %v1211
  %v1501 = vmul.f32 %v1102, %v1216
  %v1502 = vmul.f32 %v1101, %v1221
  %v1503 = vmul.f32 %v1100, %v1226
  %v1504 = vmul.f32 %v1099, %v1231
  %v1505 = vmul.f32 %v1098, %v1236
  %v1506 = vmul.f32 %v1097, %v1241
  %v1507 = vmul.f32 %v1096, %v1246
  %v1508 = vmul.f32 %v1095, %v1251
  %v1509 = vmul.f32 %v1094, %v1256
  %v1510 = vmul.f32 %v1093, %v1261
  %v1511 = vmul.f32 %v1092, %v1266
  %v1512 = vmul.f32 %v1091, %v1271
  %v1513 = vmul.f32 %v1090, %v1276
  %v1514 = vmul.f32 %v1089, %v1281
  %v1515 = vmul.f32 %v1088, %v1286
  %v1516 = vmul.f32 %v1087, %v1291
  %v1517 = vmul.f32 %v1086, %v1296
  %v1518 = vmul.f32 %v1085, %v1301
  %v1519 = vmul.f32 %v1084, %v1306
  %v1520 = vmul.f32 %v1083, %v1311
  %v1521 = vmul.f32 %v1082, %v1316
  %v1522 = vmul.f32 %v1081, %v1321
  %v1523 = vmul.f32 %v1080, %v1326
  %v1524 = vmul.f32 %v1079, %v1331
  %v1525 = vmul.f32 %v1078, %v1336
  %v1526 = vmul.f32 %v1077, %v1341
  %v1527 = vmul.f32 %v1076, %v1346
  %v1528 = vmul.f32 %v1075, %v1351
  %v1529 = vmul.f32 %v1074, %v1356
  %v1530 = vmul.f32 %v1073, %v1361
  %v1531 = vmul.f32 %v1072, %v1366
  %v1532 = vmul.f32 %v1071, %v1371
  %v1533 = vmul.f32 %v1070, %v1376
  %v1534 = vmul.f32 %v1069, %v1381
  %v1535 = vmul.f32 %v1068, %v1386
  %v1536 = vmul.f32 %v1067, %v1391
  %v1537 = vmul.f32 %v1066, %v1396
  %v1538 = vmul.f32 %v1065, %v1401
  %v1539 = vmul.f32 %v1064, %v1406
  %v1540 = vmul.f32 %v1063, %v1411
  %v1541 = vmul.f32 %v1062, %v1416
  %v1542 = vmul.f32 %v1061, %v1421
  %v1543 = vmul.f32 %v1060, %v1426
  %v1544 = vmul.f32 %v1059, %v1431
  %v1545 = vmul.f32 %v1058, %v1436
  %v1546 = vmul.f32 %v1057, %v1441
  %v1547 = vmul.f32 %v1056, %v1446
  %v1548 = vmul.f32 %v1055, %v1451
  %v1549 = vmul.f32 %v1054, %v1456
  %v1550 = vmul.f32 %v1053, %v1461
  %v1551 = vmul.f32 %v1052, %v1466
  %v1552 = vmul.f32 %v1051, %v1471
  %v1553 = vmul.f32 %v1050, %v1476
  %v1554 = vmul.f32 %v1049, %v1481
  %v1555 = vmul.f32 %v1048, %v1486
  %v1556 = vmul.f32 %v1047, %v1491
  %1557 = vset.pattern.permute.xlu0 1
  %1558 = vperm.xlu0 %1557, %v1109
  %v1559 = vpop.permute.xlu0 %1558
  %1561 = vset.pattern.permute.xlu0 1
  %1562 = vperm.xlu0 %1561, %v1110
  %v1563 = vpop.permute.xlu0 %1562
  %1565 = vset.pattern.permute.xlu0 1
  %1566 = vperm.xlu0 %1565, %v1111
  %v1567 = vpop.permute.xlu0 %1566
  %1569 = vset.pattern.permute.xlu0 1
  %1570 = vperm.xlu0 %1569, %v1112
  %v1571 = vpop.permute.xlu0 %1570
  %1573 = vset.pattern.permute.xlu0 1
  %1574 = vperm.xlu0 %1573, %v1113
  %v1575 = vpop.permute.xlu0 %1574
  %1577 = vset.pattern.permute.xlu0 1
  %1578 = vperm.xlu0 %1577, %v1114
  %v1579 = vpop.permute.xlu0 %1578
  %1581 = vset.pattern.permute.xlu0 1
  %1582 = vperm.xlu0 %1581, %v1115
  %v1583 = vpop.permute.xlu0 %1582
  %1585 = vset.pattern.permute.xlu0 1
  %1586 = vperm.xlu0 %1585, %v1116
  %v1587 = vpop.permute.xlu0 %1586
  %1589 = vset.pattern.permute.xlu0 1
  %1590 = vperm.xlu0 %1589, %v1117
  %v1591 = vpop.permute.xlu0 %1590
  %1593 = vset.pattern.permute.xlu0 1
  %1594 = vperm.xlu0 %1593, %v1118
  %v1595 = vpop.permute.xlu0 %1594
  %1597 = vset.pattern.permute.xlu0 1
  %1598 = vperm.xlu0 %1597, %v1119
  %v1599 = vpop.permute.xlu0 %1598
  %1601 = vset.pattern.permute.xlu0 1
  %1602 = vperm.xlu0 %1601, %v1120
  %v1603 = vpop.permute.xlu0 %1602
  %1605 = vset.pattern.permute.xlu0 1
  %1606 = vperm.xlu0 %1605, %v1121
  %v1607 = vpop.permute.xlu0 %1606
  %1609 = vset.pattern.permute.xlu0 1
  %1610 = vperm.xlu0 %1609, %v1122
  %v1611 = vpop.permute.xlu0 %1610
  %1613 = vset.pattern.permute.xlu0 1
  %1614 = vperm.xlu0 %1613, %v1123
  %v1615 = vpop.permute.xlu0 %1614
  %1617 = vset.pattern.permute.xlu0 1
  %1618 = vperm.xlu0 %1617, %v1124
  %v1619 = vpop.permute.xlu0 %1618
  %1621 = vset.pattern.permute.xlu0 1
  %1622 = vperm.xlu0 %1621, %v1125
  %v1623 = vpop.permute.xlu0 %1622
  %1625 = vset.pattern.permute.xlu0 1
  %1626 = vperm.xlu0 %1625, %v1126
  %v1627 = vpop.permute.xlu0 %1626
  %1629 = vset.pattern.permute.xlu0 1
  %1630 = vperm.xlu0 %1629, %v1127
  %v1631 = vpop.permute.xlu0 %1630
  %1633 = vset.pattern.permute.xlu0 1
  %1634 = vperm.xlu0 %1633, %v1128
  %v1635 = vpop.permute.xlu0 %1634
  %1637 = vset.pattern.permute.xlu0 1
  %1638 = vperm.xlu0 %1637, %v1129
  %v1639 = vpop.permute.xlu0 %1638
  %1641 = vset.pattern.permute.xlu0 1
  %1642 = vperm.xlu0 %1641, %v1130
  %v1643 = vpop.permute.xlu0 %1642
  %1645 = vset.pattern.permute.xlu0 1
  %1646 = vperm.xlu0 %1645, %v1131
  %v1647 = vpop.permute.xlu0 %1646
  %1649 = vset.pattern.permute.xlu0 1
  %1650 = vperm.xlu0 %1649, %v1132
  %v1651 = vpop.permute.xlu0 %1650
  %1653 = vset.pattern.permute.xlu0 1
  %1654 = vperm.xlu0 %1653, %v1133
  %v1655 = vpop.permute.xlu0 %1654
  %1657 = vset.pattern.permute.xlu0 1
  %1658 = vperm.xlu0 %1657, %v1134
  %v1659 = vpop.permute.xlu0 %1658
  %1661 = vset.pattern.permute.xlu0 1
  %1662 = vperm.xlu0 %1661, %v1135
  %v1663 = vpop.permute.xlu0 %1662
  %1665 = vset.pattern.permute.xlu0 1
  %1666 = vperm.xlu0 %1665, %v1136
  %v1667 = vpop.permute.xlu0 %1666
  %1669 = vset.pattern.permute.xlu0 1
  %1670 = vperm.xlu0 %1669, %v1137
  %v1671 = vpop.permute.xlu0 %1670
  %1673 = vset.pattern.permute.xlu0 1
  %1674 = vperm.xlu0 %1673, %v1138
  %v1675 = vpop.permute.xlu0 %1674
  %1677 = vset.pattern.permute.xlu0 1
  %1678 = vperm.xlu0 %1677, %v1139
  %v1679 = vpop.permute.xlu0 %1678
  %1681 = vset.pattern.permute.xlu0 1
  %1682 = vperm.xlu0 %1681, %v1140
  %v1683 = vpop.permute.xlu0 %1682
  %1685 = vset.pattern.permute.xlu0 1
  %1686 = vperm.xlu0 %1685, %v1141
  %v1687 = vpop.permute.xlu0 %1686
  %1689 = vset.pattern.permute.xlu0 1
  %1690 = vperm.xlu0 %1689, %v1142
  %v1691 = vpop.permute.xlu0 %1690
  %1693 = vset.pattern.permute.xlu0 1
  %1694 = vperm.xlu0 %1693, %v1143
  %v1695 = vpop.permute.xlu0 %1694
  %1697 = vset.pattern.permute.xlu0 1
  %1698 = vperm.xlu0 %1697, %v1144
  %v1699 = vpop.permute.xlu0 %1698
  %1701 = vset.pattern.permute.xlu0 1
  %1702 = vperm.xlu0 %1701, %v1145
  %v1703 = vpop.permute.xlu0 %1702
  %1705 = vset.pattern.permute.xlu0 1
  %1706 = vperm.xlu0 %1705, %v1146
  %v1707 = vpop.permute.xlu0 %1706
  %1709 = vset.pattern.permute.xlu0 1
  %1710 = vperm.xlu0 %1709, %v1147
  %v1711 = vpop.permute.xlu0 %1710
  %1713 = vset.pattern.permute.xlu0 1
  %1714 = vperm.xlu0 %1713, %v1148
  %v1715 = vpop.permute.xlu0 %1714
  %1717 = vset.pattern.permute.xlu0 1
  %1718 = vperm.xlu0 %1717, %v1149
  %v1719 = vpop.permute.xlu0 %1718
  %1721 = vset.pattern.permute.xlu0 1
  %1722 = vperm.xlu0 %1721, %v1150
  %v1723 = vpop.permute.xlu0 %1722
  %1725 = vset.pattern.permute.xlu0 1
  %1726 = vperm.xlu0 %1725, %v1151
  %v1727 = vpop.permute.xlu0 %1726
  %1729 = vset.pattern.permute.xlu0 1
  %1730 = vperm.xlu0 %1729, %v1152
  %v1731 = vpop.permute.xlu0 %1730
  %1733 = vset.pattern.permute.xlu0 1
  %1734 = vperm.xlu0 %1733, %v1153
  %v1735 = vpop.permute.xlu0 %1734
  %1737 = vset.pattern.permute.xlu0 1
  %1738 = vperm.xlu0 %1737, %v1154
  %v1739 = vpop.permute.xlu0 %1738
  %1741 = vset.pattern.permute.xlu0 1
  %1742 = vperm.xlu0 %1741, %v1155
  %v1743 = vpop.permute.xlu0 %1742
  %1745 = vset.pattern.permute.xlu0 1
  %1746 = vperm.xlu0 %1745, %v1156
  %v1747 = vpop.permute.xlu0 %1746
  %1749 = vset.pattern.permute.xlu0 1
  %1750 = vperm.xlu0 %1749, %v1157
  %v1751 = vpop.permute.xlu0 %1750
  %1753 = vset.pattern.permute.xlu0 1
  %1754 = vperm.xlu0 %1753, %v1158
  %v1755 = vpop.permute.xlu0 %1754
  %1757 = vset.pattern.permute.xlu0 1
  %1758 = vperm.xlu0 %1757, %v1159
  %v1759 = vpop.permute.xlu0 %1758
  %1761 = vset.pattern.permute.xlu0 1
  %1762 = vperm.xlu0 %1761, %v1160
  %v1763 = vpop.permute.xlu0 %1762
  %1765 = vset.pattern.permute.xlu0 1
  %1766 = vperm.xlu0 %1765, %v1161
  %v1767 = vpop.permute.xlu0 %1766
  %1769 = vset.pattern.permute.xlu0 1
  %1770 = vperm.xlu0 %1769, %v1162
  %v1771 = vpop.permute.xlu0 %1770
  %1773 = vset.pattern.permute.xlu0 1
  %1774 = vperm.xlu0 %1773, %v1163
  %v1775 = vpop.permute.xlu0 %1774
  %1777 = vset.pattern.permute.xlu0 1
  %1778 = vperm.xlu0 %1777, %v1164
  %v1779 = vpop.permute.xlu0 %1778
  %1781 = vset.pattern.permute.xlu0 1
  %1782 = vperm.xlu0 %1781, %v1165
  %v1783 = vpop.permute.xlu0 %1782
  %1785 = vset.pattern.permute.xlu0 1
  %1786 = vperm.xlu0 %1785, %v1166
  %v1787 = vpop.permute.xlu0 %1786
  %1789 = vset.pattern.permute.xlu0 1
  %1790 = vperm.xlu0 %1789, %v1167
  %v1791 = vpop.permute.xlu0 %1790
  %1793 = vset.pattern.permute.xlu0 1
  %1794 = vperm.xlu0 %1793, %v1168
  %v1795 = vpop.permute.xlu0 %1794
  %1797 = vset.pattern.permute.xlu0 1
  %1798 = vperm.xlu0 %1797, %v1169
  %v1799 = vpop.permute.xlu0 %1798
  %1801 = vset.pattern.permute.xlu0 1
  %1802 = vperm.xlu0 %1801, %v1170
  %v1803 = vpop.permute.xlu0 %1802
  %1805 = vset.pattern.permute.xlu0 1
  %1806 = vperm.xlu0 %1805, %v1171
  %v1807 = vpop.permute.xlu0 %1806
  %1809 = vset.pattern.permute.xlu0 1
  %1810 = vperm.xlu0 %1809, %v1172
  %v1811 = vpop.permute.xlu0 %1810
  %v1813 = vmul.f32 %v976, %v1559
  %v1814 = vmul.f32 %v977, %v1563
  %v1815 = vmul.f32 %v914, %v1567
  %v1816 = vmul.f32 %v915, %v1571
  %v1817 = vmul.f32 %v916, %v1575
  %v1818 = vmul.f32 %v917, %v1579
  %v1819 = vmul.f32 %v918, %v1583
  %v1820 = vmul.f32 %v919, %v1587
  %v1821 = vmul.f32 %v920, %v1591
  %v1822 = vmul.f32 %v921, %v1595
  %v1823 = vmul.f32 %v922, %v1599
  %v1824 = vmul.f32 %v923, %v1603
  %v1825 = vmul.f32 %v924, %v1607
  %v1826 = vmul.f32 %v925, %v1611
  %v1827 = vmul.f32 %v926, %v1615
  %v1828 = vmul.f32 %v927, %v1619
  %v1829 = vmul.f32 %v928, %v1623
  %v1830 = vmul.f32 %v929, %v1627
  %v1831 = vmul.f32 %v930, %v1631
  %v1832 = vmul.f32 %v931, %v1635
  %v1833 = vmul.f32 %v932, %v1639
  %v1834 = vmul.f32 %v933, %v1643
  %v1835 = vmul.f32 %v934, %v1647
  %v1836 = vmul.f32 %v935, %v1651
  %v1837 = vmul.f32 %v936, %v1655
  %v1838 = vmul.f32 %v937, %v1659
  %v1839 = vmul.f32 %v938, %v1663
  %v1840 = vmul.f32 %v939, %v1667
  %v1841 = vmul.f32 %v940, %v1671
  %v1842 = vmul.f32 %v941, %v1675
  %v1843 = vmul.f32 %v942, %v1679
  %v1844 = vmul.f32 %v943, %v1683
  %v1845 = vmul.f32 %v944, %v1687
  %v1846 = vmul.f32 %v945, %v1691
  %v1847 = vmul.f32 %v946, %v1695
  %v1848 = vmul.f32 %v947, %v1699
  %v1849 = vmul.f32 %v948, %v1703
  %v1850 = vmul.f32 %v949, %v1707
  %v1851 = vmul.f32 %v950, %v1711
  %v1852 = vmul.f32 %v951, %v1715
  %v1853 = vmul.f32 %v952, %v1719
  %v1854 = vmul.f32 %v953, %v1723
  %v1855 = vmul.f32 %v954, %v1727
  %v1856 = vmul.f32 %v955, %v1731
  %v1857 = vmul.f32 %v956, %v1735
  %v1858 = vmul.f32 %v957, %v1739
  %v1859 = vmul.f32 %v958, %v1743
  %v1860 = vmul.f32 %v959, %v1747
  %v1861 = vmul.f32 %v960, %v1751
  %v1862 = vmul.f32 %v961, %v1755
  %v1863 = vmul.f32 %v962, %v1759
  %v1864 = vmul.f32 %v963, %v1763
  %v1865 = vmul.f32 %v964, %v1767
  %v1866 = vmul.f32 %v965, %v1771
  %v1867 = vmul.f32 %v966, %v1775
  %v1868 = vmul.f32 %v967, %v1779
  %v1869 = vmul.f32 %v968, %v1783
  %v1870 = vmul.f32 %v969, %v1787
  %v1871 = vmul.f32 %v970, %v1791
  %v1872 = vmul.f32 %v971, %v1795
  %v1873 = vmul.f32 %v972, %v1799
  %v1874 = vmul.f32 %v973, %v1803
  %v1875 = vmul.f32 %v974, %v1807
  %v1876 = vmul.f32 %v975, %v1811
  %v1877 = vrot.slane %v914, 1
  %v1878 = vrot.slane %v915, 1
  %v1879 = vrot.slane %v916, 1
  %v1880 = vrot.slane %v917, 1
  %v1881 = vrot.slane %v918, 1
  %v1882 = vrot.slane %v919, 1
  %v1883 = vrot.slane %v920, 1
  %v1884 = vrot.slane %v921, 1
  %v1885 = vrot.slane %v922, 1
  %v1886 = vrot.slane %v923, 1
  %v1887 = vrot.slane %v924, 1
  %v1888 = vrot.slane %v925, 1
  %v1889 = vrot.slane %v926, 1
  %v1890 = vrot.slane %v927, 1
  %v1891 = vrot.slane %v928, 1
  %v1892 = vrot.slane %v929, 1
  %v1893 = vrot.slane %v930, 1
  %v1894 = vrot.slane %v931, 1
  %v1895 = vrot.slane %v932, 1
  %v1896 = vrot.slane %v933, 1
  %v1897 = vrot.slane %v934, 1
  %v1898 = vrot.slane %v935, 1
  %v1899 = vrot.slane %v936, 1
  %v1900 = vrot.slane %v937, 1
  %v1901 = vrot.slane %v938, 1
  %v1902 = vrot.slane %v939, 1
  %v1903 = vrot.slane %v940, 1
  %v1904 = vrot.slane %v941, 1
  %v1905 = vrot.slane %v942, 1
  %v1906 = vrot.slane %v943, 1
  %v1907 = vrot.slane %v944, 1
  %v1908 = vrot.slane %v945, 1
  %v1909 = vrot.slane %v946, 1
  %v1910 = vrot.slane %v947, 1
  %v1911 = vrot.slane %v948, 1
  %v1912 = vrot.slane %v949, 1
  %v1913 = vrot.slane %v950, 1
  %v1914 = vrot.slane %v951, 1
  %v1915 = vrot.slane %v952, 1
  %v1916 = vrot.slane %v953, 1
  %v1917 = vrot.slane %v954, 1
  %v1918 = vrot.slane %v955, 1
  %v1919 = vrot.slane %v956, 1
  %v1920 = vrot.slane %v957, 1
  %v1921 = vrot.slane %v958, 1
  %v1922 = vrot.slane %v959, 1
  %v1923 = vrot.slane %v960, 1
  %v1924 = vrot.slane %v961, 1
  %v1925 = vrot.slane %v962, 1
  %v1926 = vrot.slane %v963, 1
  %v1927 = vrot.slane %v964, 1
  %v1928 = vrot.slane %v965, 1
  %v1929 = vrot.slane %v966, 1
  %v1930 = vrot.slane %v967, 1
  %v1931 = vrot.slane %v968, 1
  %v1932 = vrot.slane %v969, 1
  %v1933 = vrot.slane %v970, 1
  %v1934 = vrot.slane %v971, 1
  %v1935 = vrot.slane %v972, 1
  %v1936 = vrot.slane %v973, 1
  %v1937 = vrot.slane %v974, 1
  %v1938 = vrot.slane %v975, 1
  %v1939 = vrot.slane %v976, 1
  %v1940 = vrot.slane %v977, 1
  %vm1941 = vcmp.lt.s32.totalorder %v1043, 7
  %v1942 = vsel %vm1941, %v1939, %v1940
  %v1943 = vsel %vm1941, %v1938, %v1939
  %v1944 = vsel %vm1941, %v1937, %v1938
  %v1945 = vsel %vm1941, %v1936, %v1937
  %v1946 = vsel %vm1941, %v1935, %v1936
  %v1947 = vsel %vm1941, %v1934, %v1935
  %v1948 = vsel %vm1941, %v1933, %v1934
  %v1949 = vsel %vm1941, %v1932, %v1933
  %v1950 = vsel %vm1941, %v1931, %v1932
  %v1951 = vsel %vm1941, %v1930, %v1931
  %v1952 = vsel %vm1941, %v1929, %v1930
  %v1953 = vsel %vm1941, %v1928, %v1929
  %v1954 = vsel %vm1941, %v1927, %v1928
  %v1955 = vsel %vm1941, %v1926, %v1927
  %v1956 = vsel %vm1941, %v1925, %v1926
  %v1957 = vsel %vm1941, %v1924, %v1925
  %v1958 = vsel %vm1941, %v1923, %v1924
  %v1959 = vsel %vm1941, %v1922, %v1923
  %v1960 = vsel %vm1941, %v1921, %v1922
  %v1961 = vsel %vm1941, %v1920, %v1921
  %v1962 = vsel %vm1941, %v1919, %v1920
  %v1963 = vsel %vm1941, %v1918, %v1919
  %v1964 = vsel %vm1941, %v1917, %v1918
  %v1965 = vsel %vm1941, %v1916, %v1917
  %v1966 = vsel %vm1941, %v1915, %v1916
  %v1967 = vsel %vm1941, %v1914, %v1915
  %v1968 = vsel %vm1941, %v1913, %v1914
  %v1969 = vsel %vm1941, %v1912, %v1913
  %v1970 = vsel %vm1941, %v1911, %v1912
  %v1971 = vsel %vm1941, %v1910, %v1911
  %v1972 = vsel %vm1941, %v1909, %v1910
  %v1973 = vsel %vm1941, %v1908, %v1909
  %v1974 = vsel %vm1941, %v1907, %v1908
  %v1975 = vsel %vm1941, %v1906, %v1907
  %v1976 = vsel %vm1941, %v1905, %v1906
  %v1977 = vsel %vm1941, %v1904, %v1905
  %v1978 = vsel %vm1941, %v1903, %v1904
  %v1979 = vsel %vm1941, %v1902, %v1903
  %v1980 = vsel %vm1941, %v1901, %v1902
  %v1981 = vsel %vm1941, %v1900, %v1901
  %v1982 = vsel %vm1941, %v1899, %v1900
  %v1983 = vsel %vm1941, %v1898, %v1899
  %v1984 = vsel %vm1941, %v1897, %v1898
  %v1985 = vsel %vm1941, %v1896, %v1897
  %v1986 = vsel %vm1941, %v1895, %v1896
  %v1987 = vsel %vm1941, %v1894, %v1895
  %v1988 = vsel %vm1941, %v1893, %v1894
  %v1989 = vsel %vm1941, %v1892, %v1893
  %v1990 = vsel %vm1941, %v1891, %v1892
  %v1991 = vsel %vm1941, %v1890, %v1891
  %v1992 = vsel %vm1941, %v1889, %v1890
  %v1993 = vsel %vm1941, %v1888, %v1889
  %v1994 = vsel %vm1941, %v1887, %v1888
  %v1995 = vsel %vm1941, %v1886, %v1887
  %v1996 = vsel %vm1941, %v1885, %v1886
  %v1997 = vsel %vm1941, %v1884, %v1885
  %v1998 = vsel %vm1941, %v1883, %v1884
  %v1999 = vsel %vm1941, %v1882, %v1883
  %v2000 = vsel %vm1941, %v1881, %v1882
  %v2001 = vsel %vm1941, %v1880, %v1881
  %v2002 = vsel %vm1941, %v1879, %v1880
  %v2003 = vsel %vm1941, %v1878, %v1879
  %v2004 = vsel %vm1941, %v1877, %v1878
  %v2005 = vsel %vm1941, %v1940, %v1877
  %2006 = vset.pattern.permute.xlu0 2
  %2007 = vperm.xlu0 %2006, %v1109
  %v2008 = vpop.permute.xlu0 %2007
  %2010 = vset.pattern.permute.xlu0 2
  %2011 = vperm.xlu0 %2010, %v1110
  %v2012 = vpop.permute.xlu0 %2011
  %2014 = vset.pattern.permute.xlu0 2
  %2015 = vperm.xlu0 %2014, %v1111
  %v2016 = vpop.permute.xlu0 %2015
  %2018 = vset.pattern.permute.xlu0 2
  %2019 = vperm.xlu0 %2018, %v1112
  %v2020 = vpop.permute.xlu0 %2019
  %2022 = vset.pattern.permute.xlu0 2
  %2023 = vperm.xlu0 %2022, %v1113
  %v2024 = vpop.permute.xlu0 %2023
  %2026 = vset.pattern.permute.xlu0 2
  %2027 = vperm.xlu0 %2026, %v1114
  %v2028 = vpop.permute.xlu0 %2027
  %2030 = vset.pattern.permute.xlu0 2
  %2031 = vperm.xlu0 %2030, %v1115
  %v2032 = vpop.permute.xlu0 %2031
  %2034 = vset.pattern.permute.xlu0 2
  %2035 = vperm.xlu0 %2034, %v1116
  %v2036 = vpop.permute.xlu0 %2035
  %2038 = vset.pattern.permute.xlu0 2
  %2039 = vperm.xlu0 %2038, %v1117
  %v2040 = vpop.permute.xlu0 %2039
  %2042 = vset.pattern.permute.xlu0 2
  %2043 = vperm.xlu0 %2042, %v1118
  %v2044 = vpop.permute.xlu0 %2043
  %2046 = vset.pattern.permute.xlu0 2
  %2047 = vperm.xlu0 %2046, %v1119
  %v2048 = vpop.permute.xlu0 %2047
  %2050 = vset.pattern.permute.xlu0 2
  %2051 = vperm.xlu0 %2050, %v1120
  %v2052 = vpop.permute.xlu0 %2051
  %2054 = vset.pattern.permute.xlu0 2
  %2055 = vperm.xlu0 %2054, %v1121
  %v2056 = vpop.permute.xlu0 %2055
  %2058 = vset.pattern.permute.xlu0 2
  %2059 = vperm.xlu0 %2058, %v1122
  %v2060 = vpop.permute.xlu0 %2059
  %2062 = vset.pattern.permute.xlu0 2
  %2063 = vperm.xlu0 %2062, %v1123
  %v2064 = vpop.permute.xlu0 %2063
  %2066 = vset.pattern.permute.xlu0 2
  %2067 = vperm.xlu0 %2066, %v1124
  %v2068 = vpop.permute.xlu0 %2067
  %2070 = vset.pattern.permute.xlu0 2
  %2071 = vperm.xlu0 %2070, %v1125
  %v2072 = vpop.permute.xlu0 %2071
  %2074 = vset.pattern.permute.xlu0 2
  %2075 = vperm.xlu0 %2074, %v1126
  %v2076 = vpop.permute.xlu0 %2075
  %2078 = vset.pattern.permute.xlu0 2
  %2079 = vperm.xlu0 %2078, %v1127
  %v2080 = vpop.permute.xlu0 %2079
  %2082 = vset.pattern.permute.xlu0 2
  %2083 = vperm.xlu0 %2082, %v1128
  %v2084 = vpop.permute.xlu0 %2083
  %2086 = vset.pattern.permute.xlu0 2
  %2087 = vperm.xlu0 %2086, %v1129
  %v2088 = vpop.permute.xlu0 %2087
  %2090 = vset.pattern.permute.xlu0 2
  %2091 = vperm.xlu0 %2090, %v1130
  %v2092 = vpop.permute.xlu0 %2091
  %2094 = vset.pattern.permute.xlu0 2
  %2095 = vperm.xlu0 %2094, %v1131
  %v2096 = vpop.permute.xlu0 %2095
  %2098 = vset.pattern.permute.xlu0 2
  %2099 = vperm.xlu0 %2098, %v1132
  %v2100 = vpop.permute.xlu0 %2099
  %2102 = vset.pattern.permute.xlu0 2
  %2103 = vperm.xlu0 %2102, %v1133
  %v2104 = vpop.permute.xlu0 %2103
  %2106 = vset.pattern.permute.xlu0 2
  %2107 = vperm.xlu0 %2106, %v1134
  %v2108 = vpop.permute.xlu0 %2107
  %2110 = vset.pattern.permute.xlu0 2
  %2111 = vperm.xlu0 %2110, %v1135
  %v2112 = vpop.permute.xlu0 %2111
  %2114 = vset.pattern.permute.xlu0 2
  %2115 = vperm.xlu0 %2114, %v1136
  %v2116 = vpop.permute.xlu0 %2115
  %2118 = vset.pattern.permute.xlu0 2
  %2119 = vperm.xlu0 %2118, %v1137
  %v2120 = vpop.permute.xlu0 %2119
  %2122 = vset.pattern.permute.xlu0 2
  %2123 = vperm.xlu0 %2122, %v1138
  %v2124 = vpop.permute.xlu0 %2123
  %2126 = vset.pattern.permute.xlu0 2
  %2127 = vperm.xlu0 %2126, %v1139
  %v2128 = vpop.permute.xlu0 %2127
  %2130 = vset.pattern.permute.xlu0 2
  %2131 = vperm.xlu0 %2130, %v1140
  %v2132 = vpop.permute.xlu0 %2131
  %2134 = vset.pattern.permute.xlu0 2
  %2135 = vperm.xlu0 %2134, %v1141
  %v2136 = vpop.permute.xlu0 %2135
  %2138 = vset.pattern.permute.xlu0 2
  %2139 = vperm.xlu0 %2138, %v1142
  %v2140 = vpop.permute.xlu0 %2139
  %2142 = vset.pattern.permute.xlu0 2
  %2143 = vperm.xlu0 %2142, %v1143
  %v2144 = vpop.permute.xlu0 %2143
  %2146 = vset.pattern.permute.xlu0 2
  %2147 = vperm.xlu0 %2146, %v1144
  %v2148 = vpop.permute.xlu0 %2147
  %2150 = vset.pattern.permute.xlu0 2
  %2151 = vperm.xlu0 %2150, %v1145
  %v2152 = vpop.permute.xlu0 %2151
  %2154 = vset.pattern.permute.xlu0 2
  %2155 = vperm.xlu0 %2154, %v1146
  %v2156 = vpop.permute.xlu0 %2155
  %2158 = vset.pattern.permute.xlu0 2
  %2159 = vperm.xlu0 %2158, %v1147
  %v2160 = vpop.permute.xlu0 %2159
  %2162 = vset.pattern.permute.xlu0 2
  %2163 = vperm.xlu0 %2162, %v1148
  %v2164 = vpop.permute.xlu0 %2163
  %2166 = vset.pattern.permute.xlu0 2
  %2167 = vperm.xlu0 %2166, %v1149
  %v2168 = vpop.permute.xlu0 %2167
  %2170 = vset.pattern.permute.xlu0 2
  %2171 = vperm.xlu0 %2170, %v1150
  %v2172 = vpop.permute.xlu0 %2171
  %2174 = vset.pattern.permute.xlu0 2
  %2175 = vperm.xlu0 %2174, %v1151
  %v2176 = vpop.permute.xlu0 %2175
  %2178 = vset.pattern.permute.xlu0 2
  %2179 = vperm.xlu0 %2178, %v1152
  %v2180 = vpop.permute.xlu0 %2179
  %2182 = vset.pattern.permute.xlu0 2
  %2183 = vperm.xlu0 %2182, %v1153
  %v2184 = vpop.permute.xlu0 %2183
  %2186 = vset.pattern.permute.xlu0 2
  %2187 = vperm.xlu0 %2186, %v1154
  %v2188 = vpop.permute.xlu0 %2187
  %2190 = vset.pattern.permute.xlu0 2
  %2191 = vperm.xlu0 %2190, %v1155
  %v2192 = vpop.permute.xlu0 %2191
  %2194 = vset.pattern.permute.xlu0 2
  %2195 = vperm.xlu0 %2194, %v1156
  %v2196 = vpop.permute.xlu0 %2195
  %2198 = vset.pattern.permute.xlu0 2
  %2199 = vperm.xlu0 %2198, %v1157
  %v2200 = vpop.permute.xlu0 %2199
  %2202 = vset.pattern.permute.xlu0 2
  %2203 = vperm.xlu0 %2202, %v1158
  %v2204 = vpop.permute.xlu0 %2203
  %2206 = vset.pattern.permute.xlu0 2
  %2207 = vperm.xlu0 %2206, %v1159
  %v2208 = vpop.permute.xlu0 %2207
  %2210 = vset.pattern.permute.xlu0 2
  %2211 = vperm.xlu0 %2210, %v1160
  %v2212 = vpop.permute.xlu0 %2211
  %2214 = vset.pattern.permute.xlu0 2
  %2215 = vperm.xlu0 %2214, %v1161
  %v2216 = vpop.permute.xlu0 %2215
  %2218 = vset.pattern.permute.xlu0 2
  %2219 = vperm.xlu0 %2218, %v1162
  %v2220 = vpop.permute.xlu0 %2219
  %2222 = vset.pattern.permute.xlu0 2
  %2223 = vperm.xlu0 %2222, %v1163
  %v2224 = vpop.permute.xlu0 %2223
  %2226 = vset.pattern.permute.xlu0 2
  %2227 = vperm.xlu0 %2226, %v1164
  %v2228 = vpop.permute.xlu0 %2227
  %2230 = vset.pattern.permute.xlu0 2
  %2231 = vperm.xlu0 %2230, %v1165
  %v2232 = vpop.permute.xlu0 %2231
  %2234 = vset.pattern.permute.xlu0 2
  %2235 = vperm.xlu0 %2234, %v1166
  %v2236 = vpop.permute.xlu0 %2235
  %2238 = vset.pattern.permute.xlu0 2
  %2239 = vperm.xlu0 %2238, %v1167
  %v2240 = vpop.permute.xlu0 %2239
  %2242 = vset.pattern.permute.xlu0 2
  %2243 = vperm.xlu0 %2242, %v1168
  %v2244 = vpop.permute.xlu0 %2243
  %2246 = vset.pattern.permute.xlu0 2
  %2247 = vperm.xlu0 %2246, %v1169
  %v2248 = vpop.permute.xlu0 %2247
  %2250 = vset.pattern.permute.xlu0 2
  %2251 = vperm.xlu0 %2250, %v1170
  %v2252 = vpop.permute.xlu0 %2251
  %2254 = vset.pattern.permute.xlu0 2
  %2255 = vperm.xlu0 %2254, %v1171
  %v2256 = vpop.permute.xlu0 %2255
  %2258 = vset.pattern.permute.xlu0 2
  %2259 = vperm.xlu0 %2258, %v1172
  %v2260 = vpop.permute.xlu0 %2259
  %v2262 = vmul.f32 %v1942, %v2008
  %v2263 = vmul.f32 %v2005, %v2012
  %v2264 = vmul.f32 %v2004, %v2016
  %v2265 = vmul.f32 %v2003, %v2020
  %v2266 = vmul.f32 %v2002, %v2024
  %v2267 = vmul.f32 %v2001, %v2028
  %v2268 = vmul.f32 %v2000, %v2032
  %v2269 = vmul.f32 %v1999, %v2036
  %v2270 = vmul.f32 %v1998, %v2040
  %v2271 = vmul.f32 %v1997, %v2044
  %v2272 = vmul.f32 %v1996, %v2048
  %v2273 = vmul.f32 %v1995, %v2052
  %v2274 = vmul.f32 %v1994, %v2056
  %v2275 = vmul.f32 %v1993, %v2060
  %v2276 = vmul.f32 %v1992, %v2064
  %v2277 = vmul.f32 %v1991, %v2068
  %v2278 = vmul.f32 %v1990, %v2072
  %v2279 = vmul.f32 %v1989, %v2076
  %v2280 = vmul.f32 %v1988, %v2080
  %v2281 = vmul.f32 %v1987, %v2084
  %v2282 = vmul.f32 %v1986, %v2088
  %v2283 = vmul.f32 %v1985, %v2092
  %v2284 = vmul.f32 %v1984, %v2096
  %v2285 = vmul.f32 %v1983, %v2100
  %v2286 = vmul.f32 %v1982, %v2104
  %v2287 = vmul.f32 %v1981, %v2108
  %v2288 = vmul.f32 %v1980, %v2112
  %v2289 = vmul.f32 %v1979, %v2116
  %v2290 = vmul.f32 %v1978, %v2120
  %v2291 = vmul.f32 %v1977, %v2124
  %v2292 = vmul.f32 %v1976, %v2128
  %v2293 = vmul.f32 %v1975, %v2132
  %v2294 = vmul.f32 %v1974, %v2136
  %v2295 = vmul.f32 %v1973, %v2140
  %v2296 = vmul.f32 %v1972, %v2144
  %v2297 = vmul.f32 %v1971, %v2148
  %v2298 = vmul.f32 %v1970, %v2152
  %v2299 = vmul.f32 %v1969, %v2156
  %v2300 = vmul.f32 %v1968, %v2160
  %v2301 = vmul.f32 %v1967, %v2164
  %v2302 = vmul.f32 %v1966, %v2168
  %v2303 = vmul.f32 %v1965, %v2172
  %v2304 = vmul.f32 %v1964, %v2176
  %v2305 = vmul.f32 %v1963, %v2180
  %v2306 = vmul.f32 %v1962, %v2184
  %v2307 = vmul.f32 %v1961, %v2188
  %v2308 = vmul.f32 %v1960, %v2192
  %v2309 = vmul.f32 %v1959, %v2196
  %v2310 = vmul.f32 %v1958, %v2200
  %v2311 = vmul.f32 %v1957, %v2204
  %v2312 = vmul.f32 %v1956, %v2208
  %v2313 = vmul.f32 %v1955, %v2212
  %v2314 = vmul.f32 %v1954, %v2216
  %v2315 = vmul.f32 %v1953, %v2220
  %v2316 = vmul.f32 %v1952, %v2224
  %v2317 = vmul.f32 %v1951, %v2228
  %v2318 = vmul.f32 %v1950, %v2232
  %v2319 = vmul.f32 %v1949, %v2236
  %v2320 = vmul.f32 %v1948, %v2240
  %v2321 = vmul.f32 %v1947, %v2244
  %v2322 = vmul.f32 %v1946, %v2248
  %v2323 = vmul.f32 %v1945, %v2252
  %v2324 = vmul.f32 %v1944, %v2256
  %v2325 = vmul.f32 %v1943, %v2260
  %2326 = vset.pattern.permute.xlu0 3
  %2327 = vperm.xlu0 %2326, %v1109
  %v2328 = vpop.permute.xlu0 %2327
  %2330 = vset.pattern.permute.xlu0 3
  %2331 = vperm.xlu0 %2330, %v1110
  %v2332 = vpop.permute.xlu0 %2331
  %2334 = vset.pattern.permute.xlu0 3
  %2335 = vperm.xlu0 %2334, %v1111
  %v2336 = vpop.permute.xlu0 %2335
  %2338 = vset.pattern.permute.xlu0 3
  %2339 = vperm.xlu0 %2338, %v1112
  %v2340 = vpop.permute.xlu0 %2339
  %2342 = vset.pattern.permute.xlu0 3
  %2343 = vperm.xlu0 %2342, %v1113
  %v2344 = vpop.permute.xlu0 %2343
  %2346 = vset.pattern.permute.xlu0 3
  %2347 = vperm.xlu0 %2346, %v1114
  %v2348 = vpop.permute.xlu0 %2347
  %2350 = vset.pattern.permute.xlu0 3
  %2351 = vperm.xlu0 %2350, %v1115
  %v2352 = vpop.permute.xlu0 %2351
  %2354 = vset.pattern.permute.xlu0 3
  %2355 = vperm.xlu0 %2354, %v1116
  %v2356 = vpop.permute.xlu0 %2355
  %2358 = vset.pattern.permute.xlu0 3
  %2359 = vperm.xlu0 %2358, %v1117
  %v2360 = vpop.permute.xlu0 %2359
  %2362 = vset.pattern.permute.xlu0 3
  %2363 = vperm.xlu0 %2362, %v1118
  %v2364 = vpop.permute.xlu0 %2363
  %2366 = vset.pattern.permute.xlu0 3
  %2367 = vperm.xlu0 %2366, %v1119
  %v2368 = vpop.permute.xlu0 %2367
  %2370 = vset.pattern.permute.xlu0 3
  %2371 = vperm.xlu0 %2370, %v1120
  %v2372 = vpop.permute.xlu0 %2371
  %2374 = vset.pattern.permute.xlu0 3
  %2375 = vperm.xlu0 %2374, %v1121
  %v2376 = vpop.permute.xlu0 %2375
  %2378 = vset.pattern.permute.xlu0 3
  %2379 = vperm.xlu0 %2378, %v1122
  %v2380 = vpop.permute.xlu0 %2379
  %2382 = vset.pattern.permute.xlu0 3
  %2383 = vperm.xlu0 %2382, %v1123
  %v2384 = vpop.permute.xlu0 %2383
  %2386 = vset.pattern.permute.xlu0 3
  %2387 = vperm.xlu0 %2386, %v1124
  %v2388 = vpop.permute.xlu0 %2387
  %2390 = vset.pattern.permute.xlu0 3
  %2391 = vperm.xlu0 %2390, %v1125
  %v2392 = vpop.permute.xlu0 %2391
  %2394 = vset.pattern.permute.xlu0 3
  %2395 = vperm.xlu0 %2394, %v1126
  %v2396 = vpop.permute.xlu0 %2395
  %2398 = vset.pattern.permute.xlu0 3
  %2399 = vperm.xlu0 %2398, %v1127
  %v2400 = vpop.permute.xlu0 %2399
  %2402 = vset.pattern.permute.xlu0 3
  %2403 = vperm.xlu0 %2402, %v1128
  %v2404 = vpop.permute.xlu0 %2403
  %2406 = vset.pattern.permute.xlu0 3
  %2407 = vperm.xlu0 %2406, %v1129
  %v2408 = vpop.permute.xlu0 %2407
  %2410 = vset.pattern.permute.xlu0 3
  %2411 = vperm.xlu0 %2410, %v1130
  %v2412 = vpop.permute.xlu0 %2411
  %2414 = vset.pattern.permute.xlu0 3
  %2415 = vperm.xlu0 %2414, %v1131
  %v2416 = vpop.permute.xlu0 %2415
  %2418 = vset.pattern.permute.xlu0 3
  %2419 = vperm.xlu0 %2418, %v1132
  %v2420 = vpop.permute.xlu0 %2419
  %2422 = vset.pattern.permute.xlu0 3
  %2423 = vperm.xlu0 %2422, %v1133
  %v2424 = vpop.permute.xlu0 %2423
  %2426 = vset.pattern.permute.xlu0 3
  %2427 = vperm.xlu0 %2426, %v1134
  %v2428 = vpop.permute.xlu0 %2427
  %2430 = vset.pattern.permute.xlu0 3
  %2431 = vperm.xlu0 %2430, %v1135
  %v2432 = vpop.permute.xlu0 %2431
  %2434 = vset.pattern.permute.xlu0 3
  %2435 = vperm.xlu0 %2434, %v1136
  %v2436 = vpop.permute.xlu0 %2435
  %2438 = vset.pattern.permute.xlu0 3
  %2439 = vperm.xlu0 %2438, %v1137
  %v2440 = vpop.permute.xlu0 %2439
  %2442 = vset.pattern.permute.xlu0 3
  %2443 = vperm.xlu0 %2442, %v1138
  %v2444 = vpop.permute.xlu0 %2443
  %2446 = vset.pattern.permute.xlu0 3
  %2447 = vperm.xlu0 %2446, %v1139
  %v2448 = vpop.permute.xlu0 %2447
  %2450 = vset.pattern.permute.xlu0 3
  %2451 = vperm.xlu0 %2450, %v1140
  %v2452 = vpop.permute.xlu0 %2451
  %2454 = vset.pattern.permute.xlu0 3
  %2455 = vperm.xlu0 %2454, %v1141
  %v2456 = vpop.permute.xlu0 %2455
  %2458 = vset.pattern.permute.xlu0 3
  %2459 = vperm.xlu0 %2458, %v1142
  %v2460 = vpop.permute.xlu0 %2459
  %2462 = vset.pattern.permute.xlu0 3
  %2463 = vperm.xlu0 %2462, %v1143
  %v2464 = vpop.permute.xlu0 %2463
  %2466 = vset.pattern.permute.xlu0 3
  %2467 = vperm.xlu0 %2466, %v1144
  %v2468 = vpop.permute.xlu0 %2467
  %2470 = vset.pattern.permute.xlu0 3
  %2471 = vperm.xlu0 %2470, %v1145
  %v2472 = vpop.permute.xlu0 %2471
  %2474 = vset.pattern.permute.xlu0 3
  %2475 = vperm.xlu0 %2474, %v1146
  %v2476 = vpop.permute.xlu0 %2475
  %2478 = vset.pattern.permute.xlu0 3
  %2479 = vperm.xlu0 %2478, %v1147
  %v2480 = vpop.permute.xlu0 %2479
  %2482 = vset.pattern.permute.xlu0 3
  %2483 = vperm.xlu0 %2482, %v1148
  %v2484 = vpop.permute.xlu0 %2483
  %2486 = vset.pattern.permute.xlu0 3
  %2487 = vperm.xlu0 %2486, %v1149
  %v2488 = vpop.permute.xlu0 %2487
  %2490 = vset.pattern.permute.xlu0 3
  %2491 = vperm.xlu0 %2490, %v1150
  %v2492 = vpop.permute.xlu0 %2491
  %2494 = vset.pattern.permute.xlu0 3
  %2495 = vperm.xlu0 %2494, %v1151
  %v2496 = vpop.permute.xlu0 %2495
  %2498 = vset.pattern.permute.xlu0 3
  %2499 = vperm.xlu0 %2498, %v1152
  %v2500 = vpop.permute.xlu0 %2499
  %2502 = vset.pattern.permute.xlu0 3
  %2503 = vperm.xlu0 %2502, %v1153
  %v2504 = vpop.permute.xlu0 %2503
  %2506 = vset.pattern.permute.xlu0 3
  %2507 = vperm.xlu0 %2506, %v1154
  %v2508 = vpop.permute.xlu0 %2507
  %2510 = vset.pattern.permute.xlu0 3
  %2511 = vperm.xlu0 %2510, %v1155
  %v2512 = vpop.permute.xlu0 %2511
  %2514 = vset.pattern.permute.xlu0 3
  %2515 = vperm.xlu0 %2514, %v1156
  %v2516 = vpop.permute.xlu0 %2515
  %2518 = vset.pattern.permute.xlu0 3
  %2519 = vperm.xlu0 %2518, %v1157
  %v2520 = vpop.permute.xlu0 %2519
  %2522 = vset.pattern.permute.xlu0 3
  %2523 = vperm.xlu0 %2522, %v1158
  %v2524 = vpop.permute.xlu0 %2523
  %2526 = vset.pattern.permute.xlu0 3
  %2527 = vperm.xlu0 %2526, %v1159
  %v2528 = vpop.permute.xlu0 %2527
  %2530 = vset.pattern.permute.xlu0 3
  %2531 = vperm.xlu0 %2530, %v1160
  %v2532 = vpop.permute.xlu0 %2531
  %2534 = vset.pattern.permute.xlu0 3
  %2535 = vperm.xlu0 %2534, %v1161
  %v2536 = vpop.permute.xlu0 %2535
  %2538 = vset.pattern.permute.xlu0 3
  %2539 = vperm.xlu0 %2538, %v1162
  %v2540 = vpop.permute.xlu0 %2539
  %2542 = vset.pattern.permute.xlu0 3
  %2543 = vperm.xlu0 %2542, %v1163
  %v2544 = vpop.permute.xlu0 %2543
  %2546 = vset.pattern.permute.xlu0 3
  %2547 = vperm.xlu0 %2546, %v1164
  %v2548 = vpop.permute.xlu0 %2547
  %2550 = vset.pattern.permute.xlu0 3
  %2551 = vperm.xlu0 %2550, %v1165
  %v2552 = vpop.permute.xlu0 %2551
  %2554 = vset.pattern.permute.xlu0 3
  %2555 = vperm.xlu0 %2554, %v1166
  %v2556 = vpop.permute.xlu0 %2555
  %2558 = vset.pattern.permute.xlu0 3
  %2559 = vperm.xlu0 %2558, %v1167
  %v2560 = vpop.permute.xlu0 %2559
  %2562 = vset.pattern.permute.xlu0 3
  %2563 = vperm.xlu0 %2562, %v1168
  %v2564 = vpop.permute.xlu0 %2563
  %2566 = vset.pattern.permute.xlu0 3
  %2567 = vperm.xlu0 %2566, %v1169
  %v2568 = vpop.permute.xlu0 %2567
  %2570 = vset.pattern.permute.xlu0 3
  %2571 = vperm.xlu0 %2570, %v1170
  %v2572 = vpop.permute.xlu0 %2571
  %2574 = vset.pattern.permute.xlu0 3
  %2575 = vperm.xlu0 %2574, %v1171
  %v2576 = vpop.permute.xlu0 %2575
  %2578 = vset.pattern.permute.xlu0 3
  %2579 = vperm.xlu0 %2578, %v1172
  %v2580 = vpop.permute.xlu0 %2579
  %v2582 = vmul.f32 %v1108, %v2328
  %v2583 = vmul.f32 %v1107, %v2332
  %v2584 = vmul.f32 %v1106, %v2336
  %v2585 = vmul.f32 %v1105, %v2340
  %v2586 = vmul.f32 %v1104, %v2344
  %v2587 = vmul.f32 %v1103, %v2348
  %v2588 = vmul.f32 %v1102, %v2352
  %v2589 = vmul.f32 %v1101, %v2356
  %v2590 = vmul.f32 %v1100, %v2360
  %v2591 = vmul.f32 %v1099, %v2364
  %v2592 = vmul.f32 %v1098, %v2368
  %v2593 = vmul.f32 %v1097, %v2372
  %v2594 = vmul.f32 %v1096, %v2376
  %v2595 = vmul.f32 %v1095, %v2380
  %v2596 = vmul.f32 %v1094, %v2384
  %v2597 = vmul.f32 %v1093, %v2388
  %v2598 = vmul.f32 %v1092, %v2392
  %v2599 = vmul.f32 %v1091, %v2396
  %v2600 = vmul.f32 %v1090, %v2400
  %v2601 = vmul.f32 %v1089, %v2404
  %v2602 = vmul.f32 %v1088, %v2408
  %v2603 = vmul.f32 %v1087, %v2412
  %v2604 = vmul.f32 %v1086, %v2416
  %v2605 = vmul.f32 %v1085, %v2420
  %v2606 = vmul.f32 %v1084, %v2424
  %v2607 = vmul.f32 %v1083, %v2428
  %v2608 = vmul.f32 %v1082, %v2432
  %v2609 = vmul.f32 %v1081, %v2436
  %v2610 = vmul.f32 %v1080, %v2440
  %v2611 = vmul.f32 %v1079, %v2444
  %v2612 = vmul.f32 %v1078, %v2448
  %v2613 = vmul.f32 %v1077, %v2452
  %v2614 = vmul.f32 %v1076, %v2456
  %v2615 = vmul.f32 %v1075, %v2460
  %v2616 = vmul.f32 %v1074, %v2464
  %v2617 = vmul.f32 %v1073, %v2468
  %v2618 = vmul.f32 %v1072, %v2472
  %v2619 = vmul.f32 %v1071, %v2476
  %v2620 = vmul.f32 %v1070, %v2480
  %v2621 = vmul.f32 %v1069, %v2484
  %v2622 = vmul.f32 %v1068, %v2488
  %v2623 = vmul.f32 %v1067, %v2492
  %v2624 = vmul.f32 %v1066, %v2496
  %v2625 = vmul.f32 %v1065, %v2500
  %v2626 = vmul.f32 %v1064, %v2504
  %v2627 = vmul.f32 %v1063, %v2508
  %v2628 = vmul.f32 %v1062, %v2512
  %v2629 = vmul.f32 %v1061, %v2516
  %v2630 = vmul.f32 %v1060, %v2520
  %v2631 = vmul.f32 %v1059, %v2524
  %v2632 = vmul.f32 %v1058, %v2528
  %v2633 = vmul.f32 %v1057, %v2532
  %v2634 = vmul.f32 %v1056, %v2536
  %v2635 = vmul.f32 %v1055, %v2540
  %v2636 = vmul.f32 %v1054, %v2544
  %v2637 = vmul.f32 %v1053, %v2548
  %v2638 = vmul.f32 %v1052, %v2552
  %v2639 = vmul.f32 %v1051, %v2556
  %v2640 = vmul.f32 %v1050, %v2560
  %v2641 = vmul.f32 %v1049, %v2564
  %v2642 = vmul.f32 %v1048, %v2568
  %v2643 = vmul.f32 %v1047, %v2572
  %v2644 = vmul.f32 %v1046, %v2576
  %v2645 = vmul.f32 %v1045, %v2580
  %2646 = vset.pattern.permute.xlu0 5
  %2647 = vperm.xlu0 %2646, %v1109
  %v2648 = vpop.permute.xlu0 %2647
  %2650 = vset.pattern.permute.xlu0 5
  %2651 = vperm.xlu0 %2650, %v1110
  %v2652 = vpop.permute.xlu0 %2651
  %2654 = vset.pattern.permute.xlu0 5
  %2655 = vperm.xlu0 %2654, %v1111
  %v2656 = vpop.permute.xlu0 %2655
  %2658 = vset.pattern.permute.xlu0 5
  %2659 = vperm.xlu0 %2658, %v1112
  %v2660 = vpop.permute.xlu0 %2659
  %2662 = vset.pattern.permute.xlu0 5
  %2663 = vperm.xlu0 %2662, %v1113
  %v2664 = vpop.permute.xlu0 %2663
  %2666 = vset.pattern.permute.xlu0 5
  %2667 = vperm.xlu0 %2666, %v1114
  %v2668 = vpop.permute.xlu0 %2667
  %2670 = vset.pattern.permute.xlu0 5
  %2671 = vperm.xlu0 %2670, %v1115
  %v2672 = vpop.permute.xlu0 %2671
  %2674 = vset.pattern.permute.xlu0 5
  %2675 = vperm.xlu0 %2674, %v1116
  %v2676 = vpop.permute.xlu0 %2675
  %2678 = vset.pattern.permute.xlu0 5
  %2679 = vperm.xlu0 %2678, %v1117
  %v2680 = vpop.permute.xlu0 %2679
  %2682 = vset.pattern.permute.xlu0 5
  %2683 = vperm.xlu0 %2682, %v1118
  %v2684 = vpop.permute.xlu0 %2683
  %2686 = vset.pattern.permute.xlu0 5
  %2687 = vperm.xlu0 %2686, %v1119
  %v2688 = vpop.permute.xlu0 %2687
  %2690 = vset.pattern.permute.xlu0 5
  %2691 = vperm.xlu0 %2690, %v1120
  %v2692 = vpop.permute.xlu0 %2691
  %2694 = vset.pattern.permute.xlu0 5
  %2695 = vperm.xlu0 %2694, %v1121
  %v2696 = vpop.permute.xlu0 %2695
  %2698 = vset.pattern.permute.xlu0 5
  %2699 = vperm.xlu0 %2698, %v1122
  %v2700 = vpop.permute.xlu0 %2699
  %2702 = vset.pattern.permute.xlu0 5
  %2703 = vperm.xlu0 %2702, %v1123
  %v2704 = vpop.permute.xlu0 %2703
  %2706 = vset.pattern.permute.xlu0 5
  %2707 = vperm.xlu0 %2706, %v1124
  %v2708 = vpop.permute.xlu0 %2707
  %2710 = vset.pattern.permute.xlu0 5
  %2711 = vperm.xlu0 %2710, %v1125
  %v2712 = vpop.permute.xlu0 %2711
  %2714 = vset.pattern.permute.xlu0 5
  %2715 = vperm.xlu0 %2714, %v1126
  %v2716 = vpop.permute.xlu0 %2715
  %2718 = vset.pattern.permute.xlu0 5
  %2719 = vperm.xlu0 %2718, %v1127
  %v2720 = vpop.permute.xlu0 %2719
  %2722 = vset.pattern.permute.xlu0 5
  %2723 = vperm.xlu0 %2722, %v1128
  %v2724 = vpop.permute.xlu0 %2723
  %2726 = vset.pattern.permute.xlu0 5
  %2727 = vperm.xlu0 %2726, %v1129
  %v2728 = vpop.permute.xlu0 %2727
  %2730 = vset.pattern.permute.xlu0 5
  %2731 = vperm.xlu0 %2730, %v1130
  %v2732 = vpop.permute.xlu0 %2731
  %2734 = vset.pattern.permute.xlu0 5
  %2735 = vperm.xlu0 %2734, %v1131
  %v2736 = vpop.permute.xlu0 %2735
  %2738 = vset.pattern.permute.xlu0 5
  %2739 = vperm.xlu0 %2738, %v1132
  %v2740 = vpop.permute.xlu0 %2739
  %2742 = vset.pattern.permute.xlu0 5
  %2743 = vperm.xlu0 %2742, %v1133
  %v2744 = vpop.permute.xlu0 %2743
  %2746 = vset.pattern.permute.xlu0 5
  %2747 = vperm.xlu0 %2746, %v1134
  %v2748 = vpop.permute.xlu0 %2747
  %2750 = vset.pattern.permute.xlu0 5
  %2751 = vperm.xlu0 %2750, %v1135
  %v2752 = vpop.permute.xlu0 %2751
  %2754 = vset.pattern.permute.xlu0 5
  %2755 = vperm.xlu0 %2754, %v1136
  %v2756 = vpop.permute.xlu0 %2755
  %2758 = vset.pattern.permute.xlu0 5
  %2759 = vperm.xlu0 %2758, %v1137
  %v2760 = vpop.permute.xlu0 %2759
  %2762 = vset.pattern.permute.xlu0 5
  %2763 = vperm.xlu0 %2762, %v1138
  %v2764 = vpop.permute.xlu0 %2763
  %2766 = vset.pattern.permute.xlu0 5
  %2767 = vperm.xlu0 %2766, %v1139
  %v2768 = vpop.permute.xlu0 %2767
  %2770 = vset.pattern.permute.xlu0 5
  %2771 = vperm.xlu0 %2770, %v1140
  %v2772 = vpop.permute.xlu0 %2771
  %2774 = vset.pattern.permute.xlu0 5
  %2775 = vperm.xlu0 %2774, %v1141
  %v2776 = vpop.permute.xlu0 %2775
  %2778 = vset.pattern.permute.xlu0 5
  %2779 = vperm.xlu0 %2778, %v1142
  %v2780 = vpop.permute.xlu0 %2779
  %2782 = vset.pattern.permute.xlu0 5
  %2783 = vperm.xlu0 %2782, %v1143
  %v2784 = vpop.permute.xlu0 %2783
  %2786 = vset.pattern.permute.xlu0 5
  %2787 = vperm.xlu0 %2786, %v1144
  %v2788 = vpop.permute.xlu0 %2787
  %2790 = vset.pattern.permute.xlu0 5
  %2791 = vperm.xlu0 %2790, %v1145
  %v2792 = vpop.permute.xlu0 %2791
  %2794 = vset.pattern.permute.xlu0 5
  %2795 = vperm.xlu0 %2794, %v1146
  %v2796 = vpop.permute.xlu0 %2795
  %2798 = vset.pattern.permute.xlu0 5
  %2799 = vperm.xlu0 %2798, %v1147
  %v2800 = vpop.permute.xlu0 %2799
  %2802 = vset.pattern.permute.xlu0 5
  %2803 = vperm.xlu0 %2802, %v1148
  %v2804 = vpop.permute.xlu0 %2803
  %2806 = vset.pattern.permute.xlu0 5
  %2807 = vperm.xlu0 %2806, %v1149
  %v2808 = vpop.permute.xlu0 %2807
  %2810 = vset.pattern.permute.xlu0 5
  %2811 = vperm.xlu0 %2810, %v1150
  %v2812 = vpop.permute.xlu0 %2811
  %2814 = vset.pattern.permute.xlu0 5
  %2815 = vperm.xlu0 %2814, %v1151
  %v2816 = vpop.permute.xlu0 %2815
  %2818 = vset.pattern.permute.xlu0 5
  %2819 = vperm.xlu0 %2818, %v1152
  %v2820 = vpop.permute.xlu0 %2819
  %2822 = vset.pattern.permute.xlu0 5
  %2823 = vperm.xlu0 %2822, %v1153
  %v2824 = vpop.permute.xlu0 %2823
  %2826 = vset.pattern.permute.xlu0 5
  %2827 = vperm.xlu0 %2826, %v1154
  %v2828 = vpop.permute.xlu0 %2827
  %2830 = vset.pattern.permute.xlu0 5
  %2831 = vperm.xlu0 %2830, %v1155
  %v2832 = vpop.permute.xlu0 %2831
  %2834 = vset.pattern.permute.xlu0 5
  %2835 = vperm.xlu0 %2834, %v1156
  %v2836 = vpop.permute.xlu0 %2835
  %2838 = vset.pattern.permute.xlu0 5
  %2839 = vperm.xlu0 %2838, %v1157
  %v2840 = vpop.permute.xlu0 %2839
  %2842 = vset.pattern.permute.xlu0 5
  %2843 = vperm.xlu0 %2842, %v1158
  %v2844 = vpop.permute.xlu0 %2843
  %2846 = vset.pattern.permute.xlu0 5
  %2847 = vperm.xlu0 %2846, %v1159
  %v2848 = vpop.permute.xlu0 %2847
  %2850 = vset.pattern.permute.xlu0 5
  %2851 = vperm.xlu0 %2850, %v1160
  %v2852 = vpop.permute.xlu0 %2851
  %2854 = vset.pattern.permute.xlu0 5
  %2855 = vperm.xlu0 %2854, %v1161
  %v2856 = vpop.permute.xlu0 %2855
  %2858 = vset.pattern.permute.xlu0 5
  %2859 = vperm.xlu0 %2858, %v1162
  %v2860 = vpop.permute.xlu0 %2859
  %2862 = vset.pattern.permute.xlu0 5
  %2863 = vperm.xlu0 %2862, %v1163
  %v2864 = vpop.permute.xlu0 %2863
  %2866 = vset.pattern.permute.xlu0 5
  %2867 = vperm.xlu0 %2866, %v1164
  %v2868 = vpop.permute.xlu0 %2867
  %2870 = vset.pattern.permute.xlu0 5
  %2871 = vperm.xlu0 %2870, %v1165
  %v2872 = vpop.permute.xlu0 %2871
  %2874 = vset.pattern.permute.xlu0 5
  %2875 = vperm.xlu0 %2874, %v1166
  %v2876 = vpop.permute.xlu0 %2875
  %2878 = vset.pattern.permute.xlu0 5
  %2879 = vperm.xlu0 %2878, %v1167
  %v2880 = vpop.permute.xlu0 %2879
  %2882 = vset.pattern.permute.xlu0 5
  %2883 = vperm.xlu0 %2882, %v1168
  %v2884 = vpop.permute.xlu0 %2883
  %2886 = vset.pattern.permute.xlu0 5
  %2887 = vperm.xlu0 %2886, %v1169
  %v2888 = vpop.permute.xlu0 %2887
  %2890 = vset.pattern.permute.xlu0 5
  %2891 = vperm.xlu0 %2890, %v1170
  %v2892 = vpop.permute.xlu0 %2891
  %2894 = vset.pattern.permute.xlu0 5
  %2895 = vperm.xlu0 %2894, %v1171
  %v2896 = vpop.permute.xlu0 %2895
  %2898 = vset.pattern.permute.xlu0 5
  %2899 = vperm.xlu0 %2898, %v1172
  %v2900 = vpop.permute.xlu0 %2899
  %v2902 = vmul.f32 %v2004, %v2648
  %v2903 = vmul.f32 %v2003, %v2652
  %v2904 = vmul.f32 %v2002, %v2656
  %v2905 = vmul.f32 %v2001, %v2660
  %v2906 = vmul.f32 %v2000, %v2664
  %v2907 = vmul.f32 %v1999, %v2668
  %v2908 = vmul.f32 %v1998, %v2672
  %v2909 = vmul.f32 %v1997, %v2676
  %v2910 = vmul.f32 %v1996, %v2680
  %v2911 = vmul.f32 %v1995, %v2684
  %v2912 = vmul.f32 %v1994, %v2688
  %v2913 = vmul.f32 %v1993, %v2692
  %v2914 = vmul.f32 %v1992, %v2696
  %v2915 = vmul.f32 %v1991, %v2700
  %v2916 = vmul.f32 %v1990, %v2704
  %v2917 = vmul.f32 %v1989, %v2708
  %v2918 = vmul.f32 %v1988, %v2712
  %v2919 = vmul.f32 %v1987, %v2716
  %v2920 = vmul.f32 %v1986, %v2720
  %v2921 = vmul.f32 %v1985, %v2724
  %v2922 = vmul.f32 %v1984, %v2728
  %v2923 = vmul.f32 %v1983, %v2732
  %v2924 = vmul.f32 %v1982, %v2736
  %v2925 = vmul.f32 %v1981, %v2740
  %v2926 = vmul.f32 %v1980, %v2744
  %v2927 = vmul.f32 %v1979, %v2748
  %v2928 = vmul.f32 %v1978, %v2752
  %v2929 = vmul.f32 %v1977, %v2756
  %v2930 = vmul.f32 %v1976, %v2760
  %v2931 = vmul.f32 %v1975, %v2764
  %v2932 = vmul.f32 %v1974, %v2768
  %v2933 = vmul.f32 %v1973, %v2772
  %v2934 = vmul.f32 %v1972, %v2776
  %v2935 = vmul.f32 %v1971, %v2780
  %v2936 = vmul.f32 %v1970, %v2784
  %v2937 = vmul.f32 %v1969, %v2788
  %v2938 = vmul.f32 %v1968, %v2792
  %v2939 = vmul.f32 %v1967, %v2796
  %v2940 = vmul.f32 %v1966, %v2800
  %v2941 = vmul.f32 %v1965, %v2804
  %v2942 = vmul.f32 %v1964, %v2808
  %v2943 = vmul.f32 %v1963, %v2812
  %v2944 = vmul.f32 %v1962, %v2816
  %v2945 = vmul.f32 %v1961, %v2820
  %v2946 = vmul.f32 %v1960, %v2824
  %v2947 = vmul.f32 %v1959, %v2828
  %v2948 = vmul.f32 %v1958, %v2832
  %v2949 = vmul.f32 %v1957, %v2836
  %v2950 = vmul.f32 %v1956, %v2840
  %v2951 = vmul.f32 %v1955, %v2844
  %v2952 = vmul.f32 %v1954, %v2848
  %v2953 = vmul.f32 %v1953, %v2852
  %v2954 = vmul.f32 %v1952, %v2856
  %v2955 = vmul.f32 %v1951, %v2860
  %v2956 = vmul.f32 %v1950, %v2864
  %v2957 = vmul.f32 %v1949, %v2868
  %v2958 = vmul.f32 %v1948, %v2872
  %v2959 = vmul.f32 %v1947, %v2876
  %v2960 = vmul.f32 %v1946, %v2880
  %v2961 = vmul.f32 %v1945, %v2884
  %v2962 = vmul.f32 %v1944, %v2888
  %v2963 = vmul.f32 %v1943, %v2892
  %v2964 = vmul.f32 %v1942, %v2896
  %v2965 = vmul.f32 %v2005, %v2900
  %2966 = vset.pattern.permute.xlu0 6
  %2967 = vperm.xlu0 %2966, %v1109
  %v2968 = vpop.permute.xlu0 %2967
  %2970 = vset.pattern.permute.xlu0 6
  %2971 = vperm.xlu0 %2970, %v1110
  %v2972 = vpop.permute.xlu0 %2971
  %2974 = vset.pattern.permute.xlu0 6
  %2975 = vperm.xlu0 %2974, %v1111
  %v2976 = vpop.permute.xlu0 %2975
  %2978 = vset.pattern.permute.xlu0 6
  %2979 = vperm.xlu0 %2978, %v1112
  %v2980 = vpop.permute.xlu0 %2979
  %2982 = vset.pattern.permute.xlu0 6
  %2983 = vperm.xlu0 %2982, %v1113
  %v2984 = vpop.permute.xlu0 %2983
  %2986 = vset.pattern.permute.xlu0 6
  %2987 = vperm.xlu0 %2986, %v1114
  %v2988 = vpop.permute.xlu0 %2987
  %2990 = vset.pattern.permute.xlu0 6
  %2991 = vperm.xlu0 %2990, %v1115
  %v2992 = vpop.permute.xlu0 %2991
  %2994 = vset.pattern.permute.xlu0 6
  %2995 = vperm.xlu0 %2994, %v1116
  %v2996 = vpop.permute.xlu0 %2995
  %2998 = vset.pattern.permute.xlu0 6
  %2999 = vperm.xlu0 %2998, %v1117
  %v3000 = vpop.permute.xlu0 %2999
  %3002 = vset.pattern.permute.xlu0 6
  %3003 = vperm.xlu0 %3002, %v1118
  %v3004 = vpop.permute.xlu0 %3003
  %3006 = vset.pattern.permute.xlu0 6
  %3007 = vperm.xlu0 %3006, %v1119
  %v3008 = vpop.permute.xlu0 %3007
  %3010 = vset.pattern.permute.xlu0 6
  %3011 = vperm.xlu0 %3010, %v1120
  %v3012 = vpop.permute.xlu0 %3011
  %3014 = vset.pattern.permute.xlu0 6
  %3015 = vperm.xlu0 %3014, %v1121
  %v3016 = vpop.permute.xlu0 %3015
  %3018 = vset.pattern.permute.xlu0 6
  %3019 = vperm.xlu0 %3018, %v1122
  %v3020 = vpop.permute.xlu0 %3019
  %3022 = vset.pattern.permute.xlu0 6
  %3023 = vperm.xlu0 %3022, %v1123
  %v3024 = vpop.permute.xlu0 %3023
  %3026 = vset.pattern.permute.xlu0 6
  %3027 = vperm.xlu0 %3026, %v1124
  %v3028 = vpop.permute.xlu0 %3027
  %3030 = vset.pattern.permute.xlu0 6
  %3031 = vperm.xlu0 %3030, %v1125
  %v3032 = vpop.permute.xlu0 %3031
  %3034 = vset.pattern.permute.xlu0 6
  %3035 = vperm.xlu0 %3034, %v1126
  %v3036 = vpop.permute.xlu0 %3035
  %3038 = vset.pattern.permute.xlu0 6
  %3039 = vperm.xlu0 %3038, %v1127
  %v3040 = vpop.permute.xlu0 %3039
  %3042 = vset.pattern.permute.xlu0 6
  %3043 = vperm.xlu0 %3042, %v1128
  %v3044 = vpop.permute.xlu0 %3043
  %3046 = vset.pattern.permute.xlu0 6
  %3047 = vperm.xlu0 %3046, %v1129
  %v3048 = vpop.permute.xlu0 %3047
  %3050 = vset.pattern.permute.xlu0 6
  %3051 = vperm.xlu0 %3050, %v1130
  %v3052 = vpop.permute.xlu0 %3051
  %3054 = vset.pattern.permute.xlu0 6
  %3055 = vperm.xlu0 %3054, %v1131
  %v3056 = vpop.permute.xlu0 %3055
  %3058 = vset.pattern.permute.xlu0 6
  %3059 = vperm.xlu0 %3058, %v1132
  %v3060 = vpop.permute.xlu0 %3059
  %3062 = vset.pattern.permute.xlu0 6
  %3063 = vperm.xlu0 %3062, %v1133
  %v3064 = vpop.permute.xlu0 %3063
  %3066 = vset.pattern.permute.xlu0 6
  %3067 = vperm.xlu0 %3066, %v1134
  %v3068 = vpop.permute.xlu0 %3067
  %3070 = vset.pattern.permute.xlu0 6
  %3071 = vperm.xlu0 %3070, %v1135
  %v3072 = vpop.permute.xlu0 %3071
  %3074 = vset.pattern.permute.xlu0 6
  %3075 = vperm.xlu0 %3074, %v1136
  %v3076 = vpop.permute.xlu0 %3075
  %3078 = vset.pattern.permute.xlu0 6
  %3079 = vperm.xlu0 %3078, %v1137
  %v3080 = vpop.permute.xlu0 %3079
  %3082 = vset.pattern.permute.xlu0 6
  %3083 = vperm.xlu0 %3082, %v1138
  %v3084 = vpop.permute.xlu0 %3083
  %3086 = vset.pattern.permute.xlu0 6
  %3087 = vperm.xlu0 %3086, %v1139
  %v3088 = vpop.permute.xlu0 %3087
  %3090 = vset.pattern.permute.xlu0 6
  %3091 = vperm.xlu0 %3090, %v1140
  %v3092 = vpop.permute.xlu0 %3091
  %3094 = vset.pattern.permute.xlu0 6
  %3095 = vperm.xlu0 %3094, %v1141
  %v3096 = vpop.permute.xlu0 %3095
  %3098 = vset.pattern.permute.xlu0 6
  %3099 = vperm.xlu0 %3098, %v1142
  %v3100 = vpop.permute.xlu0 %3099
  %3102 = vset.pattern.permute.xlu0 6
  %3103 = vperm.xlu0 %3102, %v1143
  %v3104 = vpop.permute.xlu0 %3103
  %3106 = vset.pattern.permute.xlu0 6
  %3107 = vperm.xlu0 %3106, %v1144
  %v3108 = vpop.permute.xlu0 %3107
  %3110 = vset.pattern.permute.xlu0 6
  %3111 = vperm.xlu0 %3110, %v1145
  %v3112 = vpop.permute.xlu0 %3111
  %3114 = vset.pattern.permute.xlu0 6
  %3115 = vperm.xlu0 %3114, %v1146
  %v3116 = vpop.permute.xlu0 %3115
  %3118 = vset.pattern.permute.xlu0 6
  %3119 = vperm.xlu0 %3118, %v1147
  %v3120 = vpop.permute.xlu0 %3119
  %3122 = vset.pattern.permute.xlu0 6
  %3123 = vperm.xlu0 %3122, %v1148
  %v3124 = vpop.permute.xlu0 %3123
  %3126 = vset.pattern.permute.xlu0 6
  %3127 = vperm.xlu0 %3126, %v1149
  %v3128 = vpop.permute.xlu0 %3127
  %3130 = vset.pattern.permute.xlu0 6
  %3131 = vperm.xlu0 %3130, %v1150
  %v3132 = vpop.permute.xlu0 %3131
  %3134 = vset.pattern.permute.xlu0 6
  %3135 = vperm.xlu0 %3134, %v1151
  %v3136 = vpop.permute.xlu0 %3135
  %3138 = vset.pattern.permute.xlu0 6
  %3139 = vperm.xlu0 %3138, %v1152
  %v3140 = vpop.permute.xlu0 %3139
  %3142 = vset.pattern.permute.xlu0 6
  %3143 = vperm.xlu0 %3142, %v1153
  %v3144 = vpop.permute.xlu0 %3143
  %3146 = vset.pattern.permute.xlu0 6
  %3147 = vperm.xlu0 %3146, %v1154
  %v3148 = vpop.permute.xlu0 %3147
  %3150 = vset.pattern.permute.xlu0 6
  %3151 = vperm.xlu0 %3150, %v1155
  %v3152 = vpop.permute.xlu0 %3151
  %3154 = vset.pattern.permute.xlu0 6
  %3155 = vperm.xlu0 %3154, %v1156
  %v3156 = vpop.permute.xlu0 %3155
  %3158 = vset.pattern.permute.xlu0 6
  %3159 = vperm.xlu0 %3158, %v1157
  %v3160 = vpop.permute.xlu0 %3159
  %3162 = vset.pattern.permute.xlu0 6
  %3163 = vperm.xlu0 %3162, %v1158
  %v3164 = vpop.permute.xlu0 %3163
  %3166 = vset.pattern.permute.xlu0 6
  %3167 = vperm.xlu0 %3166, %v1159
  %v3168 = vpop.permute.xlu0 %3167
  %3170 = vset.pattern.permute.xlu0 6
  %3171 = vperm.xlu0 %3170, %v1160
  %v3172 = vpop.permute.xlu0 %3171
  %3174 = vset.pattern.permute.xlu0 6
  %3175 = vperm.xlu0 %3174, %v1161
  %v3176 = vpop.permute.xlu0 %3175
  %3178 = vset.pattern.permute.xlu0 6
  %3179 = vperm.xlu0 %3178, %v1162
  %v3180 = vpop.permute.xlu0 %3179
  %3182 = vset.pattern.permute.xlu0 6
  %3183 = vperm.xlu0 %3182, %v1163
  %v3184 = vpop.permute.xlu0 %3183
  %3186 = vset.pattern.permute.xlu0 6
  %3187 = vperm.xlu0 %3186, %v1164
  %v3188 = vpop.permute.xlu0 %3187
  %3190 = vset.pattern.permute.xlu0 6
  %3191 = vperm.xlu0 %3190, %v1165
  %v3192 = vpop.permute.xlu0 %3191
  %3194 = vset.pattern.permute.xlu0 6
  %3195 = vperm.xlu0 %3194, %v1166
  %v3196 = vpop.permute.xlu0 %3195
  %3198 = vset.pattern.permute.xlu0 6
  %3199 = vperm.xlu0 %3198, %v1167
  %v3200 = vpop.permute.xlu0 %3199
  %3202 = vset.pattern.permute.xlu0 6
  %3203 = vperm.xlu0 %3202, %v1168
  %v3204 = vpop.permute.xlu0 %3203
  %3206 = vset.pattern.permute.xlu0 6
  %3207 = vperm.xlu0 %3206, %v1169
  %v3208 = vpop.permute.xlu0 %3207
  %3210 = vset.pattern.permute.xlu0 6
  %3211 = vperm.xlu0 %3210, %v1170
  %v3212 = vpop.permute.xlu0 %3211
  %3214 = vset.pattern.permute.xlu0 6
  %3215 = vperm.xlu0 %3214, %v1171
  %v3216 = vpop.permute.xlu0 %3215
  %3218 = vset.pattern.permute.xlu0 6
  %3219 = vperm.xlu0 %3218, %v1172
  %v3220 = vpop.permute.xlu0 %3219
  %v3222 = vmul.f32 %v1106, %v2968
  %v3223 = vmul.f32 %v1105, %v2972
  %v3224 = vmul.f32 %v1104, %v2976
  %v3225 = vmul.f32 %v1103, %v2980
  %v3226 = vmul.f32 %v1102, %v2984
  %v3227 = vmul.f32 %v1101, %v2988
  %v3228 = vmul.f32 %v1100, %v2992
  %v3229 = vmul.f32 %v1099, %v2996
  %v3230 = vmul.f32 %v1098, %v3000
  %v3231 = vmul.f32 %v1097, %v3004
  %v3232 = vmul.f32 %v1096, %v3008
  %v3233 = vmul.f32 %v1095, %v3012
  %v3234 = vmul.f32 %v1094, %v3016
  %v3235 = vmul.f32 %v1093, %v3020
  %v3236 = vmul.f32 %v1092, %v3024
  %v3237 = vmul.f32 %v1091, %v3028
  %v3238 = vmul.f32 %v1090, %v3032
  %v3239 = vmul.f32 %v1089, %v3036
  %v3240 = vmul.f32 %v1088, %v3040
  %v3241 = vmul.f32 %v1087, %v3044
  %v3242 = vmul.f32 %v1086, %v3048
  %v3243 = vmul.f32 %v1085, %v3052
  %v3244 = vmul.f32 %v1084, %v3056
  %v3245 = vmul.f32 %v1083, %v3060
  %v3246 = vmul.f32 %v1082, %v3064
  %v3247 = vmul.f32 %v1081, %v3068
  %v3248 = vmul.f32 %v1080, %v3072
  %v3249 = vmul.f32 %v1079, %v3076
  %v3250 = vmul.f32 %v1078, %v3080
  %v3251 = vmul.f32 %v1077, %v3084
  %v3252 = vmul.f32 %v1076, %v3088
  %v3253 = vmul.f32 %v1075, %v3092
  %v3254 = vmul.f32 %v1074, %v3096
  %v3255 = vmul.f32 %v1073, %v3100
  %v3256 = vmul.f32 %v1072, %v3104
  %v3257 = vmul.f32 %v1071, %v3108
  %v3258 = vmul.f32 %v1070, %v3112
  %v3259 = vmul.f32 %v1069, %v3116
  %v3260 = vmul.f32 %v1068, %v3120
  %v3261 = vmul.f32 %v1067, %v3124
  %v3262 = vmul.f32 %v1066, %v3128
  %v3263 = vmul.f32 %v1065, %v3132
  %v3264 = vmul.f32 %v1064, %v3136
  %v3265 = vmul.f32 %v1063, %v3140
  %v3266 = vmul.f32 %v1062, %v3144
  %v3267 = vmul.f32 %v1061, %v3148
  %v3268 = vmul.f32 %v1060, %v3152
  %v3269 = vmul.f32 %v1059, %v3156
  %v3270 = vmul.f32 %v1058, %v3160
  %v3271 = vmul.f32 %v1057, %v3164
  %v3272 = vmul.f32 %v1056, %v3168
  %v3273 = vmul.f32 %v1055, %v3172
  %v3274 = vmul.f32 %v1054, %v3176
  %v3275 = vmul.f32 %v1053, %v3180
  %v3276 = vmul.f32 %v1052, %v3184
  %v3277 = vmul.f32 %v1051, %v3188
  %v3278 = vmul.f32 %v1050, %v3192
  %v3279 = vmul.f32 %v1049, %v3196
  %v3280 = vmul.f32 %v1048, %v3200
  %v3281 = vmul.f32 %v1047, %v3204
  %v3282 = vmul.f32 %v1046, %v3208
  %v3283 = vmul.f32 %v1045, %v3212
  %v3284 = vmul.f32 %v1108, %v3216
  %v3285 = vmul.f32 %v1107, %v3220
  %3286 = vset.pattern.permute.xlu0 7
  %3287 = vperm.xlu0 %3286, %v1109
  %v3288 = vpop.permute.xlu0 %3287
  %3290 = vset.pattern.permute.xlu0 7
  %3291 = vperm.xlu0 %3290, %v1110
  %v3292 = vpop.permute.xlu0 %3291
  %3294 = vset.pattern.permute.xlu0 7
  %3295 = vperm.xlu0 %3294, %v1111
  %v3296 = vpop.permute.xlu0 %3295
  %3298 = vset.pattern.permute.xlu0 7
  %3299 = vperm.xlu0 %3298, %v1112
  %v3300 = vpop.permute.xlu0 %3299
  %3302 = vset.pattern.permute.xlu0 7
  %3303 = vperm.xlu0 %3302, %v1113
  %v3304 = vpop.permute.xlu0 %3303
  %3306 = vset.pattern.permute.xlu0 7
  %3307 = vperm.xlu0 %3306, %v1114
  %v3308 = vpop.permute.xlu0 %3307
  %3310 = vset.pattern.permute.xlu0 7
  %3311 = vperm.xlu0 %3310, %v1115
  %v3312 = vpop.permute.xlu0 %3311
  %3314 = vset.pattern.permute.xlu0 7
  %3315 = vperm.xlu0 %3314, %v1116
  %v3316 = vpop.permute.xlu0 %3315
  %3318 = vset.pattern.permute.xlu0 7
  %3319 = vperm.xlu0 %3318, %v1117
  %v3320 = vpop.permute.xlu0 %3319
  %3322 = vset.pattern.permute.xlu0 7
  %3323 = vperm.xlu0 %3322, %v1118
  %v3324 = vpop.permute.xlu0 %3323
  %3326 = vset.pattern.permute.xlu0 7
  %3327 = vperm.xlu0 %3326, %v1119
  %v3328 = vpop.permute.xlu0 %3327
  %3330 = vset.pattern.permute.xlu0 7
  %3331 = vperm.xlu0 %3330, %v1120
  %v3332 = vpop.permute.xlu0 %3331
  %3334 = vset.pattern.permute.xlu0 7
  %3335 = vperm.xlu0 %3334, %v1121
  %v3336 = vpop.permute.xlu0 %3335
  %3338 = vset.pattern.permute.xlu0 7
  %3339 = vperm.xlu0 %3338, %v1122
  %v3340 = vpop.permute.xlu0 %3339
  %3342 = vset.pattern.permute.xlu0 7
  %3343 = vperm.xlu0 %3342, %v1123
  %v3344 = vpop.permute.xlu0 %3343
  %3346 = vset.pattern.permute.xlu0 7
  %3347 = vperm.xlu0 %3346, %v1124
  %v3348 = vpop.permute.xlu0 %3347
  %3350 = vset.pattern.permute.xlu0 7
  %3351 = vperm.xlu0 %3350, %v1125
  %v3352 = vpop.permute.xlu0 %3351
  %3354 = vset.pattern.permute.xlu0 7
  %3355 = vperm.xlu0 %3354, %v1126
  %v3356 = vpop.permute.xlu0 %3355
  %3358 = vset.pattern.permute.xlu0 7
  %3359 = vperm.xlu0 %3358, %v1127
  %v3360 = vpop.permute.xlu0 %3359
  %3362 = vset.pattern.permute.xlu0 7
  %3363 = vperm.xlu0 %3362, %v1128
  %v3364 = vpop.permute.xlu0 %3363
  %3366 = vset.pattern.permute.xlu0 7
  %3367 = vperm.xlu0 %3366, %v1129
  %v3368 = vpop.permute.xlu0 %3367
  %3370 = vset.pattern.permute.xlu0 7
  %3371 = vperm.xlu0 %3370, %v1130
  %v3372 = vpop.permute.xlu0 %3371
  %3374 = vset.pattern.permute.xlu0 7
  %3375 = vperm.xlu0 %3374, %v1131
  %v3376 = vpop.permute.xlu0 %3375
  %3378 = vset.pattern.permute.xlu0 7
  %3379 = vperm.xlu0 %3378, %v1132
  %v3380 = vpop.permute.xlu0 %3379
  %3382 = vset.pattern.permute.xlu0 7
  %3383 = vperm.xlu0 %3382, %v1133
  %v3384 = vpop.permute.xlu0 %3383
  %3386 = vset.pattern.permute.xlu0 7
  %3387 = vperm.xlu0 %3386, %v1134
  %v3388 = vpop.permute.xlu0 %3387
  %3390 = vset.pattern.permute.xlu0 7
  %3391 = vperm.xlu0 %3390, %v1135
  %v3392 = vpop.permute.xlu0 %3391
  %3394 = vset.pattern.permute.xlu0 7
  %3395 = vperm.xlu0 %3394, %v1136
  %v3396 = vpop.permute.xlu0 %3395
  %3398 = vset.pattern.permute.xlu0 7
  %3399 = vperm.xlu0 %3398, %v1137
  %v3400 = vpop.permute.xlu0 %3399
  %3402 = vset.pattern.permute.xlu0 7
  %3403 = vperm.xlu0 %3402, %v1138
  %v3404 = vpop.permute.xlu0 %3403
  %3406 = vset.pattern.permute.xlu0 7
  %3407 = vperm.xlu0 %3406, %v1139
  %v3408 = vpop.permute.xlu0 %3407
  %3410 = vset.pattern.permute.xlu0 7
  %3411 = vperm.xlu0 %3410, %v1140
  %v3412 = vpop.permute.xlu0 %3411
  %3414 = vset.pattern.permute.xlu0 7
  %3415 = vperm.xlu0 %3414, %v1141
  %v3416 = vpop.permute.xlu0 %3415
  %3418 = vset.pattern.permute.xlu0 7
  %3419 = vperm.xlu0 %3418, %v1142
  %v3420 = vpop.permute.xlu0 %3419
  %3422 = vset.pattern.permute.xlu0 7
  %3423 = vperm.xlu0 %3422, %v1143
  %v3424 = vpop.permute.xlu0 %3423
  %3426 = vset.pattern.permute.xlu0 7
  %3427 = vperm.xlu0 %3426, %v1144
  %v3428 = vpop.permute.xlu0 %3427
  %3430 = vset.pattern.permute.xlu0 7
  %3431 = vperm.xlu0 %3430, %v1145
  %v3432 = vpop.permute.xlu0 %3431
  %3434 = vset.pattern.permute.xlu0 7
  %3435 = vperm.xlu0 %3434, %v1146
  %v3436 = vpop.permute.xlu0 %3435
  %3438 = vset.pattern.permute.xlu0 7
  %3439 = vperm.xlu0 %3438, %v1147
  %v3440 = vpop.permute.xlu0 %3439
  %3442 = vset.pattern.permute.xlu0 7
  %3443 = vperm.xlu0 %3442, %v1148
  %v3444 = vpop.permute.xlu0 %3443
  %3446 = vset.pattern.permute.xlu0 7
  %3447 = vperm.xlu0 %3446, %v1149
  %v3448 = vpop.permute.xlu0 %3447
  %3450 = vset.pattern.permute.xlu0 7
  %3451 = vperm.xlu0 %3450, %v1150
  %v3452 = vpop.permute.xlu0 %3451
  %3454 = vset.pattern.permute.xlu0 7
  %3455 = vperm.xlu0 %3454, %v1151
  %v3456 = vpop.permute.xlu0 %3455
  %3458 = vset.pattern.permute.xlu0 7
  %3459 = vperm.xlu0 %3458, %v1152
  %v3460 = vpop.permute.xlu0 %3459
  %3462 = vset.pattern.permute.xlu0 7
  %3463 = vperm.xlu0 %3462, %v1153
  %v3464 = vpop.permute.xlu0 %3463
  %3466 = vset.pattern.permute.xlu0 7
  %3467 = vperm.xlu0 %3466, %v1154
  %v3468 = vpop.permute.xlu0 %3467
  %3470 = vset.pattern.permute.xlu0 7
  %3471 = vperm.xlu0 %3470, %v1155
  %v3472 = vpop.permute.xlu0 %3471
  %3474 = vset.pattern.permute.xlu0 7
  %3475 = vperm.xlu0 %3474, %v1156
  %v3476 = vpop.permute.xlu0 %3475
  %3478 = vset.pattern.permute.xlu0 7
  %3479 = vperm.xlu0 %3478, %v1157
  %v3480 = vpop.permute.xlu0 %3479
  %3482 = vset.pattern.permute.xlu0 7
  %3483 = vperm.xlu0 %3482, %v1158
  %v3484 = vpop.permute.xlu0 %3483
  %3486 = vset.pattern.permute.xlu0 7
  %3487 = vperm.xlu0 %3486, %v1159
  %v3488 = vpop.permute.xlu0 %3487
  %3490 = vset.pattern.permute.xlu0 7
  %3491 = vperm.xlu0 %3490, %v1160
  %v3492 = vpop.permute.xlu0 %3491
  %3494 = vset.pattern.permute.xlu0 7
  %3495 = vperm.xlu0 %3494, %v1161
  %v3496 = vpop.permute.xlu0 %3495
  %3498 = vset.pattern.permute.xlu0 7
  %3499 = vperm.xlu0 %3498, %v1162
  %v3500 = vpop.permute.xlu0 %3499
  %3502 = vset.pattern.permute.xlu0 7
  %3503 = vperm.xlu0 %3502, %v1163
  %v3504 = vpop.permute.xlu0 %3503
  %3506 = vset.pattern.permute.xlu0 7
  %3507 = vperm.xlu0 %3506, %v1164
  %v3508 = vpop.permute.xlu0 %3507
  %3510 = vset.pattern.permute.xlu0 7
  %3511 = vperm.xlu0 %3510, %v1165
  %v3512 = vpop.permute.xlu0 %3511
  %3514 = vset.pattern.permute.xlu0 7
  %3515 = vperm.xlu0 %3514, %v1166
  %v3516 = vpop.permute.xlu0 %3515
  %3518 = vset.pattern.permute.xlu0 7
  %3519 = vperm.xlu0 %3518, %v1167
  %v3520 = vpop.permute.xlu0 %3519
  %3522 = vset.pattern.permute.xlu0 7
  %3523 = vperm.xlu0 %3522, %v1168
  %v3524 = vpop.permute.xlu0 %3523
  %3526 = vset.pattern.permute.xlu0 7
  %3527 = vperm.xlu0 %3526, %v1169
  %v3528 = vpop.permute.xlu0 %3527
  %3530 = vset.pattern.permute.xlu0 7
  %3531 = vperm.xlu0 %3530, %v1170
  %v3532 = vpop.permute.xlu0 %3531
  %3534 = vset.pattern.permute.xlu0 7
  %3535 = vperm.xlu0 %3534, %v1171
  %v3536 = vpop.permute.xlu0 %3535
  %3538 = vset.pattern.permute.xlu0 7
  %3539 = vperm.xlu0 %3538, %v1172
  %v3540 = vpop.permute.xlu0 %3539
  %v3542 = vmul.f32 %v916, %v3288
  %v3543 = vmul.f32 %v917, %v3292
  %v3544 = vmul.f32 %v918, %v3296
  %v3545 = vmul.f32 %v919, %v3300
  %v3546 = vmul.f32 %v920, %v3304
  %v3547 = vmul.f32 %v921, %v3308
  %v3548 = vmul.f32 %v922, %v3312
  %v3549 = vmul.f32 %v923, %v3316
  %v3550 = vmul.f32 %v924, %v3320
  %v3551 = vmul.f32 %v925, %v3324
  %v3552 = vmul.f32 %v926, %v3328
  %v3553 = vmul.f32 %v927, %v3332
  %v3554 = vmul.f32 %v928, %v3336
  %v3555 = vmul.f32 %v929, %v3340
  %v3556 = vmul.f32 %v930, %v3344
  %v3557 = vmul.f32 %v931, %v3348
  %v3558 = vmul.f32 %v932, %v3352
  %v3559 = vmul.f32 %v933, %v3356
  %v3560 = vmul.f32 %v934, %v3360
  %v3561 = vmul.f32 %v935, %v3364
  %v3562 = vmul.f32 %v936, %v3368
  %v3563 = vmul.f32 %v937, %v3372
  %v3564 = vmul.f32 %v938, %v3376
  %v3565 = vmul.f32 %v939, %v3380
  %v3566 = vmul.f32 %v940, %v3384
  %v3567 = vmul.f32 %v941, %v3388
  %v3568 = vmul.f32 %v942, %v3392
  %v3569 = vmul.f32 %v943, %v3396
  %v3570 = vmul.f32 %v944, %v3400
  %v3571 = vmul.f32 %v945, %v3404
  %v3572 = vmul.f32 %v946, %v3408
  %v3573 = vmul.f32 %v947, %v3412
  %v3574 = vmul.f32 %v948, %v3416
  %v3575 = vmul.f32 %v949, %v3420
  %v3576 = vmul.f32 %v950, %v3424
  %v3577 = vmul.f32 %v951, %v3428
  %v3578 = vmul.f32 %v952, %v3432
  %v3579 = vmul.f32 %v953, %v3436
  %v3580 = vmul.f32 %v954, %v3440
  %v3581 = vmul.f32 %v955, %v3444
  %v3582 = vmul.f32 %v956, %v3448
  %v3583 = vmul.f32 %v957, %v3452
  %v3584 = vmul.f32 %v958, %v3456
  %v3585 = vmul.f32 %v959, %v3460
  %v3586 = vmul.f32 %v960, %v3464
  %v3587 = vmul.f32 %v961, %v3468
  %v3588 = vmul.f32 %v962, %v3472
  %v3589 = vmul.f32 %v963, %v3476
  %v3590 = vmul.f32 %v964, %v3480
  %v3591 = vmul.f32 %v965, %v3484
  %v3592 = vmul.f32 %v966, %v3488
  %v3593 = vmul.f32 %v967, %v3492
  %v3594 = vmul.f32 %v968, %v3496
  %v3595 = vmul.f32 %v969, %v3500
  %v3596 = vmul.f32 %v970, %v3504
  %v3597 = vmul.f32 %v971, %v3508
  %v3598 = vmul.f32 %v972, %v3512
  %v3599 = vmul.f32 %v973, %v3516
  %v3600 = vmul.f32 %v974, %v3520
  %v3601 = vmul.f32 %v975, %v3524
  %v3602 = vmul.f32 %v976, %v3528
  %v3603 = vmul.f32 %v977, %v3532
  %v3604 = vmul.f32 %v914, %v3536
  %v3605 = vmul.f32 %v915, %v3540
  %3606 = vset.pattern.permute.xlu0 8
  %3607 = vperm.xlu0 %3606, %v1109
  %v3608 = vpop.permute.xlu0 %3607
  %3610 = vset.pattern.permute.xlu0 8
  %3611 = vperm.xlu0 %3610, %v1110
  %v3612 = vpop.permute.xlu0 %3611
  %3614 = vset.pattern.permute.xlu0 8
  %3615 = vperm.xlu0 %3614, %v1111
  %v3616 = vpop.permute.xlu0 %3615
  %3618 = vset.pattern.permute.xlu0 8
  %3619 = vperm.xlu0 %3618, %v1112
  %v3620 = vpop.permute.xlu0 %3619
  %3622 = vset.pattern.permute.xlu0 8
  %3623 = vperm.xlu0 %3622, %v1113
  %v3624 = vpop.permute.xlu0 %3623
  %3626 = vset.pattern.permute.xlu0 8
  %3627 = vperm.xlu0 %3626, %v1114
  %v3628 = vpop.permute.xlu0 %3627
  %3630 = vset.pattern.permute.xlu0 8
  %3631 = vperm.xlu0 %3630, %v1115
  %v3632 = vpop.permute.xlu0 %3631
  %3634 = vset.pattern.permute.xlu0 8
  %3635 = vperm.xlu0 %3634, %v1116
  %v3636 = vpop.permute.xlu0 %3635
  %3638 = vset.pattern.permute.xlu0 8
  %3639 = vperm.xlu0 %3638, %v1117
  %v3640 = vpop.permute.xlu0 %3639
  %3642 = vset.pattern.permute.xlu0 8
  %3643 = vperm.xlu0 %3642, %v1118
  %v3644 = vpop.permute.xlu0 %3643
  %3646 = vset.pattern.permute.xlu0 8
  %3647 = vperm.xlu0 %3646, %v1119
  %v3648 = vpop.permute.xlu0 %3647
  %3650 = vset.pattern.permute.xlu0 8
  %3651 = vperm.xlu0 %3650, %v1120
  %v3652 = vpop.permute.xlu0 %3651
  %3654 = vset.pattern.permute.xlu0 8
  %3655 = vperm.xlu0 %3654, %v1121
  %v3656 = vpop.permute.xlu0 %3655
  %3658 = vset.pattern.permute.xlu0 8
  %3659 = vperm.xlu0 %3658, %v1122
  %v3660 = vpop.permute.xlu0 %3659
  %3662 = vset.pattern.permute.xlu0 8
  %3663 = vperm.xlu0 %3662, %v1123
  %v3664 = vpop.permute.xlu0 %3663
  %3666 = vset.pattern.permute.xlu0 8
  %3667 = vperm.xlu0 %3666, %v1124
  %v3668 = vpop.permute.xlu0 %3667
  %3670 = vset.pattern.permute.xlu0 8
  %3671 = vperm.xlu0 %3670, %v1125
  %v3672 = vpop.permute.xlu0 %3671
  %3674 = vset.pattern.permute.xlu0 8
  %3675 = vperm.xlu0 %3674, %v1126
  %v3676 = vpop.permute.xlu0 %3675
  %3678 = vset.pattern.permute.xlu0 8
  %3679 = vperm.xlu0 %3678, %v1127
  %v3680 = vpop.permute.xlu0 %3679
  %3682 = vset.pattern.permute.xlu0 8
  %3683 = vperm.xlu0 %3682, %v1128
  %v3684 = vpop.permute.xlu0 %3683
  %3686 = vset.pattern.permute.xlu0 8
  %3687 = vperm.xlu0 %3686, %v1129
  %v3688 = vpop.permute.xlu0 %3687
  %3690 = vset.pattern.permute.xlu0 8
  %3691 = vperm.xlu0 %3690, %v1130
  %v3692 = vpop.permute.xlu0 %3691
  %3694 = vset.pattern.permute.xlu0 8
  %3695 = vperm.xlu0 %3694, %v1131
  %v3696 = vpop.permute.xlu0 %3695
  %3698 = vset.pattern.permute.xlu0 8
  %3699 = vperm.xlu0 %3698, %v1132
  %v3700 = vpop.permute.xlu0 %3699
  %3702 = vset.pattern.permute.xlu0 8
  %3703 = vperm.xlu0 %3702, %v1133
  %v3704 = vpop.permute.xlu0 %3703
  %3706 = vset.pattern.permute.xlu0 8
  %3707 = vperm.xlu0 %3706, %v1134
  %v3708 = vpop.permute.xlu0 %3707
  %3710 = vset.pattern.permute.xlu0 8
  %3711 = vperm.xlu0 %3710, %v1135
  %v3712 = vpop.permute.xlu0 %3711
  %3714 = vset.pattern.permute.xlu0 8
  %3715 = vperm.xlu0 %3714, %v1136
  %v3716 = vpop.permute.xlu0 %3715
  %3718 = vset.pattern.permute.xlu0 8
  %3719 = vperm.xlu0 %3718, %v1137
  %v3720 = vpop.permute.xlu0 %3719
  %3722 = vset.pattern.permute.xlu0 8
  %3723 = vperm.xlu0 %3722, %v1138
  %v3724 = vpop.permute.xlu0 %3723
  %3726 = vset.pattern.permute.xlu0 8
  %3727 = vperm.xlu0 %3726, %v1139
  %v3728 = vpop.permute.xlu0 %3727
  %3730 = vset.pattern.permute.xlu0 8
  %3731 = vperm.xlu0 %3730, %v1140
  %v3732 = vpop.permute.xlu0 %3731
  %3734 = vset.pattern.permute.xlu0 8
  %3735 = vperm.xlu0 %3734, %v1141
  %v3736 = vpop.permute.xlu0 %3735
  %3738 = vset.pattern.permute.xlu0 8
  %3739 = vperm.xlu0 %3738, %v1142
  %v3740 = vpop.permute.xlu0 %3739
  %3742 = vset.pattern.permute.xlu0 8
  %3743 = vperm.xlu0 %3742, %v1143
  %v3744 = vpop.permute.xlu0 %3743
  %3746 = vset.pattern.permute.xlu0 8
  %3747 = vperm.xlu0 %3746, %v1144
  %v3748 = vpop.permute.xlu0 %3747
  %3750 = vset.pattern.permute.xlu0 8
  %3751 = vperm.xlu0 %3750, %v1145
  %v3752 = vpop.permute.xlu0 %3751
  %3754 = vset.pattern.permute.xlu0 8
  %3755 = vperm.xlu0 %3754, %v1146
  %v3756 = vpop.permute.xlu0 %3755
  %3758 = vset.pattern.permute.xlu0 8
  %3759 = vperm.xlu0 %3758, %v1147
  %v3760 = vpop.permute.xlu0 %3759
  %3762 = vset.pattern.permute.xlu0 8
  %3763 = vperm.xlu0 %3762, %v1148
  %v3764 = vpop.permute.xlu0 %3763
  %3766 = vset.pattern.permute.xlu0 8
  %3767 = vperm.xlu0 %3766, %v1149
  %v3768 = vpop.permute.xlu0 %3767
  %3770 = vset.pattern.permute.xlu0 8
  %3771 = vperm.xlu0 %3770, %v1150
  %v3772 = vpop.permute.xlu0 %3771
  %3774 = vset.pattern.permute.xlu0 8
  %3775 = vperm.xlu0 %3774, %v1151
  %v3776 = vpop.permute.xlu0 %3775
  %3778 = vset.pattern.permute.xlu0 8
  %3779 = vperm.xlu0 %3778, %v1152
  %v3780 = vpop.permute.xlu0 %3779
  %3782 = vset.pattern.permute.xlu0 8
  %3783 = vperm.xlu0 %3782, %v1153
  %v3784 = vpop.permute.xlu0 %3783
  %3786 = vset.pattern.permute.xlu0 8
  %3787 = vperm.xlu0 %3786, %v1154
  %v3788 = vpop.permute.xlu0 %3787
  %3790 = vset.pattern.permute.xlu0 8
  %3791 = vperm.xlu0 %3790, %v1155
  %v3792 = vpop.permute.xlu0 %3791
  %3794 = vset.pattern.permute.xlu0 8
  %3795 = vperm.xlu0 %3794, %v1156
  %v3796 = vpop.permute.xlu0 %3795
  %3798 = vset.pattern.permute.xlu0 8
  %3799 = vperm.xlu0 %3798, %v1157
  %v3800 = vpop.permute.xlu0 %3799
  %3802 = vset.pattern.permute.xlu0 8
  %3803 = vperm.xlu0 %3802, %v1158
  %v3804 = vpop.permute.xlu0 %3803
  %3806 = vset.pattern.permute.xlu0 8
  %3807 = vperm.xlu0 %3806, %v1159
  %v3808 = vpop.permute.xlu0 %3807
  %3810 = vset.pattern.permute.xlu0 8
  %3811 = vperm.xlu0 %3810, %v1160
  %v3812 = vpop.permute.xlu0 %3811
  %3814 = vset.pattern.permute.xlu0 8
  %3815 = vperm.xlu0 %3814, %v1161
  %v3816 = vpop.permute.xlu0 %3815
  %3818 = vset.pattern.permute.xlu0 8
  %3819 = vperm.xlu0 %3818, %v1162
  %v3820 = vpop.permute.xlu0 %3819
  %3822 = vset.pattern.permute.xlu0 8
  %3823 = vperm.xlu0 %3822, %v1163
  %v3824 = vpop.permute.xlu0 %3823
  %3826 = vset.pattern.permute.xlu0 8
  %3827 = vperm.xlu0 %3826, %v1164
  %v3828 = vpop.permute.xlu0 %3827
  %3830 = vset.pattern.permute.xlu0 8
  %3831 = vperm.xlu0 %3830, %v1165
  %v3832 = vpop.permute.xlu0 %3831
  %3834 = vset.pattern.permute.xlu0 8
  %3835 = vperm.xlu0 %3834, %v1166
  %v3836 = vpop.permute.xlu0 %3835
  %3838 = vset.pattern.permute.xlu0 8
  %3839 = vperm.xlu0 %3838, %v1167
  %v3840 = vpop.permute.xlu0 %3839
  %3842 = vset.pattern.permute.xlu0 8
  %3843 = vperm.xlu0 %3842, %v1168
  %v3844 = vpop.permute.xlu0 %3843
  %3846 = vset.pattern.permute.xlu0 8
  %3847 = vperm.xlu0 %3846, %v1169
  %v3848 = vpop.permute.xlu0 %3847
  %3850 = vset.pattern.permute.xlu0 8
  %3851 = vperm.xlu0 %3850, %v1170
  %v3852 = vpop.permute.xlu0 %3851
  %3854 = vset.pattern.permute.xlu0 8
  %3855 = vperm.xlu0 %3854, %v1171
  %v3856 = vpop.permute.xlu0 %3855
  %3858 = vset.pattern.permute.xlu0 8
  %3859 = vperm.xlu0 %3858, %v1172
  %v3860 = vpop.permute.xlu0 %3859
  %v3862 = vmul.f32 %v2002, %v3608
  %v3863 = vmul.f32 %v2001, %v3612
  %v3864 = vmul.f32 %v2000, %v3616
  %v3865 = vmul.f32 %v1999, %v3620
  %v3866 = vmul.f32 %v1998, %v3624
  %v3867 = vmul.f32 %v1997, %v3628
  %v3868 = vmul.f32 %v1996, %v3632
  %v3869 = vmul.f32 %v1995, %v3636
  %v3870 = vmul.f32 %v1994, %v3640
  %v3871 = vmul.f32 %v1993, %v3644
  %v3872 = vmul.f32 %v1992, %v3648
  %v3873 = vmul.f32 %v1991, %v3652
  %v3874 = vmul.f32 %v1990, %v3656
  %v3875 = vmul.f32 %v1989, %v3660
  %v3876 = vmul.f32 %v1988, %v3664
  %v3877 = vmul.f32 %v1987, %v3668
  %v3878 = vmul.f32 %v1986, %v3672
  %v3879 = vmul.f32 %v1985, %v3676
  %v3880 = vmul.f32 %v1984, %v3680
  %v3881 = vmul.f32 %v1983, %v3684
  %v3882 = vmul.f32 %v1982, %v3688
  %v3883 = vmul.f32 %v1981, %v3692
  %v3884 = vmul.f32 %v1980, %v3696
  %v3885 = vmul.f32 %v1979, %v3700
  %v3886 = vmul.f32 %v1978, %v3704
  %v3887 = vmul.f32 %v1977, %v3708
  %v3888 = vmul.f32 %v1976, %v3712
  %v3889 = vmul.f32 %v1975, %v3716
  %v3890 = vmul.f32 %v1974, %v3720
  %v3891 = vmul.f32 %v1973, %v3724
  %v3892 = vmul.f32 %v1972, %v3728
  %v3893 = vmul.f32 %v1971, %v3732
  %v3894 = vmul.f32 %v1970, %v3736
  %v3895 = vmul.f32 %v1969, %v3740
  %v3896 = vmul.f32 %v1968, %v3744
  %v3897 = vmul.f32 %v1967, %v3748
  %v3898 = vmul.f32 %v1966, %v3752
  %v3899 = vmul.f32 %v1965, %v3756
  %v3900 = vmul.f32 %v1964, %v3760
  %v3901 = vmul.f32 %v1963, %v3764
  %v3902 = vmul.f32 %v1962, %v3768
  %v3903 = vmul.f32 %v1961, %v3772
  %v3904 = vmul.f32 %v1960, %v3776
  %v3905 = vmul.f32 %v1959, %v3780
  %v3906 = vmul.f32 %v1958, %v3784
  %v3907 = vmul.f32 %v1957, %v3788
  %v3908 = vmul.f32 %v1956, %v3792
  %v3909 = vmul.f32 %v1955, %v3796
  %v3910 = vmul.f32 %v1954, %v3800
  %v3911 = vmul.f32 %v1953, %v3804
  %v3912 = vmul.f32 %v1952, %v3808
  %v3913 = vmul.f32 %v1951, %v3812
  %v3914 = vmul.f32 %v1950, %v3816
  %v3915 = vmul.f32 %v1949, %v3820
  %v3916 = vmul.f32 %v1948, %v3824
  %v3917 = vmul.f32 %v1947, %v3828
  %v3918 = vmul.f32 %v1946, %v3832
  %v3919 = vmul.f32 %v1945, %v3836
  %v3920 = vmul.f32 %v1944, %v3840
  %v3921 = vmul.f32 %v1943, %v3844
  %v3922 = vmul.f32 %v1942, %v3848
  %v3923 = vmul.f32 %v2005, %v3852
  %v3924 = vmul.f32 %v2004, %v3856
  %v3925 = vmul.f32 %v2003, %v3860
  %v3926 = vld [vmem:[%s5] sm:$0xff]
  %v3927 = vld [vmem:[%s5 + $0x8] sm:$0xff]
  %v3928 = vld [vmem:[%s5 + $0x10] sm:$0xff]
  %v3929 = vld [vmem:[%s5 + $0x18] sm:$0xff]
  %v3930 = vld [vmem:[%s5 + $0x20] sm:$0xff]
  %v3931 = vld [vmem:[%s5 + $0x28] sm:$0xff]
  %v3932 = vld [vmem:[%s5 + $0x30] sm:$0xff]
  %v3933 = vld [vmem:[%s5 + $0x38] sm:$0xff]
  %v3934 = vld [vmem:[%s5 + $0x40] sm:$0xff]
  %v3935 = vld [vmem:[%s5 + $0x48] sm:$0xff]
  %v3936 = vld [vmem:[%s5 + $0x50] sm:$0xff]
  %v3937 = vld [vmem:[%s5 + $0x58] sm:$0xff]
  %v3938 = vld [vmem:[%s5 + $0x60] sm:$0xff]
  %v3939 = vld [vmem:[%s5 + $0x68] sm:$0xff]
  %v3940 = vld [vmem:[%s5 + $0x70] sm:$0xff]
  %v3941 = vld [vmem:[%s5 + $0x78] sm:$0xff]
  %v3942 = vld [vmem:[%s5 + $0x80] sm:$0xff]
  %v3943 = vld [vmem:[%s5 + $0x88] sm:$0xff]
  %v3944 = vld [vmem:[%s5 + $0x90] sm:$0xff]
  %v3945 = vld [vmem:[%s5 + $0x98] sm:$0xff]
  %v3946 = vld [vmem:[%s5 + $0xa0] sm:$0xff]
  %v3947 = vld [vmem:[%s5 + $0xa8] sm:$0xff]
  %v3948 = vld [vmem:[%s5 + $0xb0] sm:$0xff]
  %v3949 = vld [vmem:[%s5 + $0xb8] sm:$0xff]
  %v3950 = vld [vmem:[%s5 + $0xc0] sm:$0xff]
  %v3951 = vld [vmem:[%s5 + $0xc8] sm:$0xff]
  %v3952 = vld [vmem:[%s5 + $0xd0] sm:$0xff]
  %v3953 = vld [vmem:[%s5 + $0xd8] sm:$0xff]
  %v3954 = vld [vmem:[%s5 + $0xe0] sm:$0xff]
  %v3955 = vld [vmem:[%s5 + $0xe8] sm:$0xff]
  %v3956 = vld [vmem:[%s5 + $0xf0] sm:$0xff]
  %v3957 = vld [vmem:[%s5 + $0xf8] sm:$0xff]
  %v3958 = vld [vmem:[%s5 + $0x100] sm:$0xff]
  %v3959 = vld [vmem:[%s5 + $0x108] sm:$0xff]
  %v3960 = vld [vmem:[%s5 + $0x110] sm:$0xff]
  %v3961 = vld [vmem:[%s5 + $0x118] sm:$0xff]
  %v3962 = vld [vmem:[%s5 + $0x120] sm:$0xff]
  %v3963 = vld [vmem:[%s5 + $0x128] sm:$0xff]
  %v3964 = vld [vmem:[%s5 + $0x130] sm:$0xff]
  %v3965 = vld [vmem:[%s5 + $0x138] sm:$0xff]
  %v3966 = vld [vmem:[%s5 + $0x140] sm:$0xff]
  %v3967 = vld [vmem:[%s5 + $0x148] sm:$0xff]
  %v3968 = vld [vmem:[%s5 + $0x150] sm:$0xff]
  %v3969 = vld [vmem:[%s5 + $0x158] sm:$0xff]
  %v3970 = vld [vmem:[%s5 + $0x160] sm:$0xff]
  %v3971 = vld [vmem:[%s5 + $0x168] sm:$0xff]
  %v3972 = vld [vmem:[%s5 + $0x170] sm:$0xff]
  %v3973 = vld [vmem:[%s5 + $0x178] sm:$0xff]
  %v3974 = vld [vmem:[%s5 + $0x180] sm:$0xff]
  %v3975 = vld [vmem:[%s5 + $0x188] sm:$0xff]
  %v3976 = vld [vmem:[%s5 + $0x190] sm:$0xff]
  %v3977 = vld [vmem:[%s5 + $0x198] sm:$0xff]
  %v3978 = vld [vmem:[%s5 + $0x1a0] sm:$0xff]
  %v3979 = vld [vmem:[%s5 + $0x1a8] sm:$0xff]
  %v3980 = vld [vmem:[%s5 + $0x1b0] sm:$0xff]
  %v3981 = vld [vmem:[%s5 + $0x1b8] sm:$0xff]
  %v3982 = vld [vmem:[%s5 + $0x1c0] sm:$0xff]
  %v3983 = vld [vmem:[%s5 + $0x1c8] sm:$0xff]
  %v3984 = vld [vmem:[%s5 + $0x1d0] sm:$0xff]
  %v3985 = vld [vmem:[%s5 + $0x1d8] sm:$0xff]
  %v3986 = vld [vmem:[%s5 + $0x1e0] sm:$0xff]
  %v3987 = vld [vmem:[%s5 + $0x1e8] sm:$0xff]
  %v3988 = vld [vmem:[%s5 + $0x1f0] sm:$0xff]
  %v3989 = vld [vmem:[%s5 + $0x1f8] sm:$0xff]
  %v3990 = vld [vmem:[%s5 + $0x200] sm:$0xff]
  %v3991 = vld [vmem:[%s5 + $0x208] sm:$0xff]
  %v3992 = vld [vmem:[%s5 + $0x210] sm:$0xff]
  %v3993 = vld [vmem:[%s5 + $0x218] sm:$0xff]
  %v3994 = vld [vmem:[%s5 + $0x220] sm:$0xff]
  %v3995 = vld [vmem:[%s5 + $0x228] sm:$0xff]
  %v3996 = vld [vmem:[%s5 + $0x230] sm:$0xff]
  %v3997 = vld [vmem:[%s5 + $0x238] sm:$0xff]
  %v3998 = vld [vmem:[%s5 + $0x240] sm:$0xff]
  %v3999 = vld [vmem:[%s5 + $0x248] sm:$0xff]
  %v4000 = vld [vmem:[%s5 + $0x250] sm:$0xff]
  %v4001 = vld [vmem:[%s5 + $0x258] sm:$0xff]
  %v4002 = vld [vmem:[%s5 + $0x260] sm:$0xff]
  %v4003 = vld [vmem:[%s5 + $0x268] sm:$0xff]
  %v4004 = vld [vmem:[%s5 + $0x270] sm:$0xff]
  %v4005 = vld [vmem:[%s5 + $0x278] sm:$0xff]
  %v4006 = vld [vmem:[%s5 + $0x280] sm:$0xff]
  %v4007 = vld [vmem:[%s5 + $0x288] sm:$0xff]
  %v4008 = vld [vmem:[%s5 + $0x290] sm:$0xff]
  %v4009 = vld [vmem:[%s5 + $0x298] sm:$0xff]
  %v4010 = vld [vmem:[%s5 + $0x2a0] sm:$0xff]
  %v4011 = vld [vmem:[%s5 + $0x2a8] sm:$0xff]
  %v4012 = vld [vmem:[%s5 + $0x2b0] sm:$0xff]
  %v4013 = vld [vmem:[%s5 + $0x2b8] sm:$0xff]
  %v4014 = vld [vmem:[%s5 + $0x2c0] sm:$0xff]
  %v4015 = vld [vmem:[%s5 + $0x2c8] sm:$0xff]
  %v4016 = vld [vmem:[%s5 + $0x2d0] sm:$0xff]
  %v4017 = vld [vmem:[%s5 + $0x2d8] sm:$0xff]
  %v4018 = vld [vmem:[%s5 + $0x2e0] sm:$0xff]
  %v4019 = vld [vmem:[%s5 + $0x2e8] sm:$0xff]
  %v4020 = vld [vmem:[%s5 + $0x2f0] sm:$0xff]
  %v4021 = vld [vmem:[%s5 + $0x2f8] sm:$0xff]
  %v4022 = vld [vmem:[%s5 + $0x300] sm:$0xff]
  %v4023 = vld [vmem:[%s5 + $0x308] sm:$0xff]
  %v4024 = vld [vmem:[%s5 + $0x310] sm:$0xff]
  %v4025 = vld [vmem:[%s5 + $0x318] sm:$0xff]
  %v4026 = vld [vmem:[%s5 + $0x320] sm:$0xff]
  %v4027 = vld [vmem:[%s5 + $0x328] sm:$0xff]
  %v4028 = vld [vmem:[%s5 + $0x330] sm:$0xff]
  %v4029 = vld [vmem:[%s5 + $0x338] sm:$0xff]
  %v4030 = vld [vmem:[%s5 + $0x340] sm:$0xff]
  %v4031 = vld [vmem:[%s5 + $0x348] sm:$0xff]
  %v4032 = vld [vmem:[%s5 + $0x350] sm:$0xff]
  %v4033 = vld [vmem:[%s5 + $0x358] sm:$0xff]
  %v4034 = vld [vmem:[%s5 + $0x360] sm:$0xff]
  %v4035 = vld [vmem:[%s5 + $0x368] sm:$0xff]
  %v4036 = vld [vmem:[%s5 + $0x370] sm:$0xff]
  %v4037 = vld [vmem:[%s5 + $0x378] sm:$0xff]
  %v4038 = vld [vmem:[%s5 + $0x380] sm:$0xff]
  %v4039 = vld [vmem:[%s5 + $0x388] sm:$0xff]
  %v4040 = vld [vmem:[%s5 + $0x390] sm:$0xff]
  %v4041 = vld [vmem:[%s5 + $0x398] sm:$0xff]
  %v4042 = vld [vmem:[%s5 + $0x3a0] sm:$0xff]
  %v4043 = vld [vmem:[%s5 + $0x3a8] sm:$0xff]
  %v4044 = vld [vmem:[%s5 + $0x3b0] sm:$0xff]
  %v4045 = vld [vmem:[%s5 + $0x3b8] sm:$0xff]
  %v4046 = vld [vmem:[%s5 + $0x3c0] sm:$0xff]
  %v4047 = vld [vmem:[%s5 + $0x3c8] sm:$0xff]
  %v4048 = vld [vmem:[%s5 + $0x3d0] sm:$0xff]
  %v4049 = vld [vmem:[%s5 + $0x3d8] sm:$0xff]
  %v4050 = vld [vmem:[%s5 + $0x3e0] sm:$0xff]
  %v4051 = vld [vmem:[%s5 + $0x3e8] sm:$0xff]
  %v4052 = vld [vmem:[%s5 + $0x3f0] sm:$0xff]
  %v4053 = vld [vmem:[%s5 + $0x3f8] sm:$0xff]
  %v4054 = vld [vmem:[%s5 + $0x400] sm:$0xff]
  %v4055 = vld [vmem:[%s5 + $0x408] sm:$0xff]
  %v4056 = vld [vmem:[%s5 + $0x410] sm:$0xff]
  %v4057 = vld [vmem:[%s5 + $0x418] sm:$0xff]
  %v4058 = vld [vmem:[%s5 + $0x420] sm:$0xff]
  %v4059 = vld [vmem:[%s5 + $0x428] sm:$0xff]
  %v4060 = vld [vmem:[%s5 + $0x430] sm:$0xff]
  %v4061 = vld [vmem:[%s5 + $0x438] sm:$0xff]
  %v4062 = vld [vmem:[%s5 + $0x440] sm:$0xff]
  %v4063 = vld [vmem:[%s5 + $0x448] sm:$0xff]
  %v4064 = vld [vmem:[%s5 + $0x450] sm:$0xff]
  %v4065 = vld [vmem:[%s5 + $0x458] sm:$0xff]
  %v4066 = vld [vmem:[%s5 + $0x460] sm:$0xff]
  %v4067 = vld [vmem:[%s5 + $0x468] sm:$0xff]
  %v4068 = vld [vmem:[%s5 + $0x470] sm:$0xff]
  %v4069 = vld [vmem:[%s5 + $0x478] sm:$0xff]
  %v4070 = vld [vmem:[%s6] sm:$0x1]
  %v4072 = vlaneseq
  %v4073 = vshrl.u32 %v4072, 7
  %v4074 = vsub.s32 0, %v4073
  %v4075 = vrot.slane %v4070, %v4074
  %4077 = vmatprep.subr.mxu0 0.0
  %4078 = vmatpush1.msra.mxu0 %v3926
  %4079 = vmatprep.subr.mxu0 0.0
  %4080 = vmatpush1.msra.mxu0 %v3927
  %4081 = vmatprep.subr.mxu0 0.0
  %4082 = vmatpush1.msra.mxu0 %v3928
  %4083 = vmatprep.subr.mxu0 0.0
  %4084 = vmatpush1.msra.mxu0 %v3929
  %4085 = vmatprep.subr.mxu0 0.0
  %4086 = vmatpush1.msra.mxu0 %v3930
  %4087 = vmatprep.subr.mxu0 0.0
  %4088 = vmatpush1.msra.mxu0 %v3931
  %4089 = vmatprep.subr.mxu0 0.0
  %4090 = vmatpush1.msra.mxu0 %v3932
  %4091 = vmatprep.subr.mxu0 0.0
  %4092 = vmatpush1.msra.mxu0 %v3933
  %4093 = vmatprep.subr.mxu0 0.0
  %4094 = vmatpush1.msra.mxu0 %v3934
  %4095 = vmatprep.subr.mxu0 0.0
  %4096 = vmatpush1.msra.mxu0 %v3935
  %4097 = vmatprep.subr.mxu0 0.0
  %4098 = vmatpush1.msra.mxu0 %v3936
  %4099 = vmatprep.subr.mxu0 0.0
  %4100 = vmatpush1.msra.mxu0 %v3937
  %4101 = vmatprep.subr.mxu0 0.0
  %4102 = vmatpush1.msra.mxu0 %v3938
  %4103 = vmatprep.subr.mxu0 0.0
  %4104 = vmatpush1.msra.mxu0 %v3939
  %4105 = vmatprep.subr.mxu0 0.0
  %4106 = vmatpush1.msra.mxu0 %v3940
  %4107 = vmatprep.subr.mxu0 0.0
  %4108 = vmatpush1.msra.mxu0 %v3941
  %4109 = vmatprep.subr.mxu0 0.0
  %4110 = vmatpush1.msra.mxu0 %v3942
  %4111 = vmatprep.subr.mxu0 0.0
  %4112 = vmatpush1.msra.mxu0 %v3943
  %4113 = vmatprep.subr.mxu0 0.0
  %4114 = vmatpush1.msra.mxu0 %v3944
  %4115 = vmatprep.subr.mxu0 0.0
  %4116 = vmatpush1.msra.mxu0 %v3945
  %4117 = vmatprep.subr.mxu0 0.0
  %4118 = vmatpush1.msra.mxu0 %v3946
  %4119 = vmatprep.subr.mxu0 0.0
  %4120 = vmatpush1.msra.mxu0 %v3947
  %4121 = vmatprep.subr.mxu0 0.0
  %4122 = vmatpush1.msra.mxu0 %v3948
  %4123 = vmatprep.subr.mxu0 0.0
  %4124 = vmatpush1.msra.mxu0 %v3949
  %4125 = vmatprep.subr.mxu0 0.0
  %4126 = vmatpush1.msra.mxu0 %v3950
  %4127 = vmatprep.subr.mxu0 0.0
  %4128 = vmatpush1.msra.mxu0 %v3951
  %4129 = vmatprep.subr.mxu0 0.0
  %4130 = vmatpush1.msra.mxu0 %v3952
  %4131 = vmatprep.subr.mxu0 0.0
  %4132 = vmatpush1.msra.mxu0 %v3953
  %4133 = vmatprep.subr.mxu0 0.0
  %4134 = vmatpush1.msra.mxu0 %v3954
  %4135 = vmatprep.subr.mxu0 0.0
  %4136 = vmatpush1.msra.mxu0 %v3955
  %4137 = vmatprep.subr.mxu0 0.0
  %4138 = vmatpush1.msra.mxu0 %v3956
  %4139 = vmatprep.subr.mxu0 0.0
  %4140 = vmatpush1.msra.mxu0 %v3957
  %4141 = vmatprep.mubr.f32.mxu0 %v1813
  %4142 = vmatmul.mubr.f32.gmra.mrb[0].mxu0 %v1493
  %v4143 = vpop.f32.mrb[0].mxu0
  %v4144 = vadd.f32 %v4075, %v4143
  %v4145 = vpop.f32.mrb[0].mxu0
  %4146 = vmatprep.mubr.f32.mxu0 %v1814
  %4147 = vmatmul.mubr.f32.gmra.mrb[0].mxu0 %v1494
  %v4148 = vpop.f32.mrb[0].mxu0
  %v4149 = vadd.f32 %v4075, %v4148
  %v4150 = vpop.f32.mrb[0].mxu0
  %4151 = vmatprep.mubr.f32.mxu0 %v1815
  %4152 = vmatmul.mubr.f32.gmra.mrb[0].mxu0 %v1495
  %v4153 = vpop.f32.mrb[0].mxu0
  %v4154 = vadd.f32 %v4075, %v4153
  %v4155 = vpop.f32.mrb[0].mxu0
  %4156 = vmatprep.mubr.f32.mxu0 %v1816
  %4157 = vmatmul.mubr.f32.gmra.mrb[0].mxu0 %v1496
  %v4158 = vpop.f32.mrb[0].mxu0
  %v4159 = vadd.f32 %v4075, %v4158
  %v4160 = vpop.f32.mrb[0].mxu0
  %4161 = vmatprep.mubr.f32.mxu0 %v1817
  %4162 = vmatmul.mubr.f32.gmra.mrb[0].mxu0 %v1497
  %v4163 = vpop.f32.mrb[0].mxu0
  %v4164 = vadd.f32 %v4075, %v4163
  %v4165 = vpop.f32.mrb[0].mxu0
  %4166 = vmatprep.mubr.f32.mxu0 %v1818
  %4167 = vmatmul.mubr.f32.gmra.mrb[0].mxu0 %v1498
  %v4168 = vpop.f32.mrb[0].mxu0
  %v4169 = vadd.f32 %v4075, %v4168
  %v4170 = vpop.f32.mrb[0].mxu0
  %4171 = vmatprep.mubr.f32.mxu0 %v1819
  %4172 = vmatmul.mubr.f32.gmra.mrb[0].mxu0 %v1499
  %v4173 = vpop.f32.mrb[0].mxu0
  %v4174 = vadd.f32 %v4075, %v4173
  %v4175 = vpop.f32.mrb[0].mxu0
  %4176 = vmatprep.mubr.f32.mxu0 %v1820
  %4177 = vmatmul.mubr.f32.gmra.mrb[0].mxu0 %v1500
  %v4178 = vpop.f32.mrb[0].mxu0
  %v4179 = vadd.f32 %v4075, %v4178
  %v4180 = vpop.f32.mrb[0].mxu0
  %4181 = vmatprep.mubr.f32.mxu0 %v1821
  %4182 = vmatmul.mubr.f32.gmra.mrb[0].mxu0 %v1501
  %v4183 = vpop.f32.mrb[0].mxu0
  %v4184 = vadd.f32 %v4075, %v4183
  %v4185 = vpop.f32.mrb[0].mxu0
  %4186 = vmatprep.mubr.f32.mxu0 %v1822
  %4187 = vmatmul.mubr.f32.gmra.mrb[0].mxu0 %v1502
  %v4188 = vpop.f32.mrb[0].mxu0
  %v4189 = vadd.f32 %v4075, %v4188
  %v4190 = vpop.f32.mrb[0].mxu0
  %4191 = vmatprep.mubr.f32.mxu0 %v1823
  %4192 = vmatmul.mubr.f32.gmra.mrb[0].mxu0 %v1503
  %v4193 = vpop.f32.mrb[0].mxu0
  %v4194 = vadd.f32 %v4075, %v4193
  %v4195 = vpop.f32.mrb[0].mxu0
  %4196 = vmatprep.mubr.f32.mxu0 %v1824
  %4197 = vmatmul.mubr.f32.gmra.mrb[0].mxu0 %v1504
  %v4198 = vpop.f32.mrb[0].mxu0
  %v4199 = vadd.f32 %v4075, %v4198
  %v4200 = vpop.f32.mrb[0].mxu0
  %4201 = vmatprep.mubr.f32.mxu0 %v1825
  %4202 = vmatmul.mubr.f32.gmra.mrb[0].mxu0 %v1505
  %v4203 = vpop.f32.mrb[0].mxu0
  %v4204 = vadd.f32 %v4075, %v4203
  %v4205 = vpop.f32.mrb[0].mxu0
  %4206 = vmatprep.mubr.f32.mxu0 %v1826
  %4207 = vmatmul.mubr.f32.gmra.mrb[0].mxu0 %v1506
  %v4208 = vpop.f32.mrb[0].mxu0
  %v4209 = vadd.f32 %v4075, %v4208
  %v4210 = vpop.f32.mrb[0].mxu0
  %4211 = vmatprep.mubr.f32.mxu0 %v1827
  %4212 = vmatmul.mubr.f32.gmra.mrb[0].mxu0 %v1507
  %v4213 = vpop.f32.mrb[0].mxu0
  %v4214 = vadd.f32 %v4075, %v4213
  %v4215 = vpop.f32.mrb[0].mxu0
  %4216 = vmatprep.mubr.f32.mxu0 %v1828
  %4217 = vmatmul.mubr.f32.gmra.mrb[0].mxu0 %v1508
  %v4218 = vpop.f32.mrb[0].mxu0
  %v4219 = vadd.f32 %v4075, %v4218
  %v4220 = vpop.f32.mrb[0].mxu0
  %4221 = vmatprep.mubr.f32.mxu0 %v1829
  %4222 = vmatmul.mubr.f32.gmra.mrb[0].mxu0 %v1509
  %v4223 = vpop.f32.mrb[0].mxu0
  %v4224 = vadd.f32 %v4075, %v4223
  %v4225 = vpop.f32.mrb[0].mxu0
  %4226 = vmatprep.mubr.f32.mxu0 %v1830
  %4227 = vmatmul.mubr.f32.gmra.mrb[0].mxu0 %v1510
  %v4228 = vpop.f32.mrb[0].mxu0
  %v4229 = vadd.f32 %v4075, %v4228
  %v4230 = vpop.f32.mrb[0].mxu0
  %4231 = vmatprep.mubr.f32.mxu0 %v1831
  %4232 = vmatmul.mubr.f32.gmra.mrb[0].mxu0 %v1511
  %v4233 = vpop.f32.mrb[0].mxu0
  %v4234 = vadd.f32 %v4075, %v4233
  %v4235 = vpop.f32.mrb[0].mxu0
  %4236 = vmatprep.mubr.f32.mxu0 %v1832
  %4237 = vmatmul.mubr.f32.gmra.mrb[0].mxu0 %v1512
  %v4238 = vpop.f32.mrb[0].mxu0
  %v4239 = vadd.f32 %v4075, %v4238
  %v4240 = vpop.f32.mrb[0].mxu0
  %4241 = vmatprep.mubr.f32.mxu0 %v1833
  %4242 = vmatmul.mubr.f32.gmra.mrb[0].mxu0 %v1513
  %v4243 = vpop.f32.mrb[0].mxu0
  %v4244 = vadd.f32 %v4075, %v4243
  %v4245 = vpop.f32.mrb[0].mxu0
  %4246 = vmatprep.mubr.f32.mxu0 %v1834
  %4247 = vmatmul.mubr.f32.gmra.mrb[0].mxu0 %v1514
  %v4248 = vpop.f32.mrb[0].mxu0
  %v4249 = vadd.f32 %v4075, %v4248
  %v4250 = vpop.f32.mrb[0].mxu0
  %4251 = vmatprep.mubr.f32.mxu0 %v1835
  %4252 = vmatmul.mubr.f32.gmra.mrb[0].mxu0 %v1515
  %v4253 = vpop.f32.mrb[0].mxu0
  %v4254 = vadd.f32 %v4075, %v4253
  %v4255 = vpop.f32.mrb[0].mxu0
  %4256 = vmatprep.mubr.f32.mxu0 %v1836
  %4257 = vmatmul.mubr.f32.gmra.mrb[0].mxu0 %v1516
  %v4258 = vpop.f32.mrb[0].mxu0
  %v4259 = vadd.f32 %v4075, %v4258
  %v4260 = vpop.f32.mrb[0].mxu0
  %4261 = vmatprep.mubr.f32.mxu0 %v1837
  %4262 = vmatmul.mubr.f32.gmra.mrb[0].mxu0 %v1517
  %v4263 = vpop.f32.mrb[0].mxu0
  %v4264 = vadd.f32 %v4075, %v4263
  %v4265 = vpop.f32.mrb[0].mxu0
  %4266 = vmatprep.mubr.f32.mxu0 %v1838
  %4267 = vmatmul.mubr.f32.gmra.mrb[0].mxu0 %v1518
  %v4268 = vpop.f32.mrb[0].mxu0
  %v4269 = vadd.f32 %v4075, %v4268
  %v4270 = vpop.f32.mrb[0].mxu0
  %4271 = vmatprep.mubr.f32.mxu0 %v1839
  %4272 = vmatmul.mubr.f32.gmra.mrb[0].mxu0 %v1519
  %v4273 = vpop.f32.mrb[0].mxu0
  %v4274 = vadd.f32 %v4075, %v4273
  %v4275 = vpop.f32.mrb[0].mxu0
  %4276 = vmatprep.mubr.f32.mxu0 %v1840
  %4277 = vmatmul.mubr.f32.gmra.mrb[0].mxu0 %v1520
  %v4278 = vpop.f32.mrb[0].mxu0
  %v4279 = vadd.f32 %v4075, %v4278
  %v4280 = vpop.f32.mrb[0].mxu0
  %4281 = vmatprep.mubr.f32.mxu0 %v1841
  %4282 = vmatmul.mubr.f32.gmra.mrb[0].mxu0 %v1521
  %v4283 = vpop.f32.mrb[0].mxu0
  %v4284 = vadd.f32 %v4075, %v4283
  %v4285 = vpop.f32.mrb[0].mxu0
  %4286 = vmatprep.mubr.f32.mxu0 %v1842
  %4287 = vmatmul.mubr.f32.gmra.mrb[0].mxu0 %v1522
  %v4288 = vpop.f32.mrb[0].mxu0
  %v4289 = vadd.f32 %v4075, %v4288
  %v4290 = vpop.f32.mrb[0].mxu0
  %4291 = vmatprep.mubr.f32.mxu0 %v1843
  %4292 = vmatmul.mubr.f32.gmra.mrb[0].mxu0 %v1523
  %v4293 = vpop.f32.mrb[0].mxu0
  %v4294 = vadd.f32 %v4075, %v4293
  %v4295 = vpop.f32.mrb[0].mxu0
  %4296 = vmatprep.mubr.f32.mxu0 %v1844
  %4297 = vmatmul.mubr.f32.gmra.mrb[0].mxu0 %v1524
  %v4298 = vpop.f32.mrb[0].mxu0
  %v4299 = vadd.f32 %v4075, %v4298
  %v4300 = vpop.f32.mrb[0].mxu0
  %4301 = vmatprep.mubr.f32.mxu0 %v1845
  %4302 = vmatmul.mubr.f32.gmra.mrb[0].mxu0 %v1525
  %v4303 = vpop.f32.mrb[0].mxu0
  %v4304 = vadd.f32 %v4075, %v4303
  %v4305 = vpop.f32.mrb[0].mxu0
  %4306 = vmatprep.mubr.f32.mxu0 %v1846
  %4307 = vmatmul.mubr.f32.gmra.mrb[0].mxu0 %v1526
  %v4308 = vpop.f32.mrb[0].mxu0
  %v4309 = vadd.f32 %v4075, %v4308
  %v4310 = vpop.f32.mrb[0].mxu0
  %4311 = vmatprep.mubr.f32.mxu0 %v1847
  %4312 = vmatmul.mubr.f32.gmra.mrb[0].mxu0 %v1527
  %v4313 = vpop.f32.mrb[0].mxu0
  %v4314 = vadd.f32 %v4075, %v4313
  %v4315 = vpop.f32.mrb[0].mxu0
  %4316 = vmatprep.mubr.f32.mxu0 %v1848
  %4317 = vmatmul.mubr.f32.gmra.mrb[0].mxu0 %v1528
  %v4318 = vpop.f32.mrb[0].mxu0
  %v4319 = vadd.f32 %v4075, %v4318
  %v4320 = vpop.f32.mrb[0].mxu0
  %4321 = vmatprep.mubr.f32.mxu0 %v1849
  %4322 = vmatmul.mubr.f32.gmra.mrb[0].mxu0 %v1529
  %v4323 = vpop.f32.mrb[0].mxu0
  %v4324 = vadd.f32 %v4075, %v4323
  %v4325 = vpop.f32.mrb[0].mxu0
  %4326 = vmatprep.mubr.f32.mxu0 %v1850
  %4327 = vmatmul.mubr.f32.gmra.mrb[0].mxu0 %v1530
  %v4328 = vpop.f32.mrb[0].mxu0
  %v4329 = vadd.f32 %v4075, %v4328
  %v4330 = vpop.f32.mrb[0].mxu0
  %4331 = vmatprep.mubr.f32.mxu0 %v1851
  %4332 = vmatmul.mubr.f32.gmra.mrb[0].mxu0 %v1531
  %v4333 = vpop.f32.mrb[0].mxu0
  %v4334 = vadd.f32 %v4075, %v4333
  %v4335 = vpop.f32.mrb[0].mxu0
  %4336 = vmatprep.mubr.f32.mxu0 %v1852
  %4337 = vmatmul.mubr.f32.gmra.mrb[0].mxu0 %v1532
  %v4338 = vpop.f32.mrb[0].mxu0
  %v4339 = vadd.f32 %v4075, %v4338
  %v4340 = vpop.f32.mrb[0].mxu0
  %4341 = vmatprep.mubr.f32.mxu0 %v1853
  %4342 = vmatmul.mubr.f32.gmra.mrb[0].mxu0 %v1533
  %v4343 = vpop.f32.mrb[0].mxu0
  %v4344 = vadd.f32 %v4075, %v4343
  %v4345 = vpop.f32.mrb[0].mxu0
  %4346 = vmatprep.mubr.f32.mxu0 %v1854
  %4347 = vmatmul.mubr.f32.gmra.mrb[0].mxu0 %v1534
  %v4348 = vpop.f32.mrb[0].mxu0
  %v4349 = vadd.f32 %v4075, %v4348
  %v4350 = vpop.f32.mrb[0].mxu0
  %4351 = vmatprep.mubr.f32.mxu0 %v1855
  %4352 = vmatmul.mubr.f32.gmra.mrb[0].mxu0 %v1535
  %v4353 = vpop.f32.mrb[0].mxu0
  %v4354 = vadd.f32 %v4075, %v4353
  %v4355 = vpop.f32.mrb[0].mxu0
  %4356 = vmatprep.mubr.f32.mxu0 %v1856
  %4357 = vmatmul.mubr.f32.gmra.mrb[0].mxu0 %v1536
  %v4358 = vpop.f32.mrb[0].mxu0
  %v4359 = vadd.f32 %v4075, %v4358
  %v4360 = vpop.f32.mrb[0].mxu0
  %4361 = vmatprep.mubr.f32.mxu0 %v1857
  %4362 = vmatmul.mubr.f32.gmra.mrb[0].mxu0 %v1537
  %v4363 = vpop.f32.mrb[0].mxu0
  %v4364 = vadd.f32 %v4075, %v4363
  %v4365 = vpop.f32.mrb[0].mxu0
  %4366 = vmatprep.mubr.f32.mxu0 %v1858
  %4367 = vmatmul.mubr.f32.gmra.mrb[0].mxu0 %v1538
  %v4368 = vpop.f32.mrb[0].mxu0
  %v4369 = vadd.f32 %v4075, %v4368
  %v4370 = vpop.f32.mrb[0].mxu0
  %4371 = vmatprep.mubr.f32.mxu0 %v1859
  %4372 = vmatmul.mubr.f32.gmra.mrb[0].mxu0 %v1539
  %v4373 = vpop.f32.mrb[0].mxu0
  %v4374 = vadd.f32 %v4075, %v4373
  %v4375 = vpop.f32.mrb[0].mxu0
  %4376 = vmatprep.mubr.f32.mxu0 %v1860
  %4377 = vmatmul.mubr.f32.gmra.mrb[0].mxu0 %v1540
  %v4378 = vpop.f32.mrb[0].mxu0
  %v4379 = vadd.f32 %v4075, %v4378
  %v4380 = vpop.f32.mrb[0].mxu0
  %4381 = vmatprep.mubr.f32.mxu0 %v1861
  %4382 = vmatmul.mubr.f32.gmra.mrb[0].mxu0 %v1541
  %v4383 = vpop.f32.mrb[0].mxu0
  %v4384 = vadd.f32 %v4075, %v4383
  %v4385 = vpop.f32.mrb[0].mxu0
  %4386 = vmatprep.mubr.f32.mxu0 %v1862
  %4387 = vmatmul.mubr.f32.gmra.mrb[0].mxu0 %v1542
  %v4388 = vpop.f32.mrb[0].mxu0
  %v4389 = vadd.f32 %v4075, %v4388
  %v4390 = vpop.f32.mrb[0].mxu0
  %4391 = vmatprep.mubr.f32.mxu0 %v1863
  %4392 = vmatmul.mubr.f32.gmra.mrb[0].mxu0 %v1543
  %v4393 = vpop.f32.mrb[0].mxu0
  %v4394 = vadd.f32 %v4075, %v4393
  %v4395 = vpop.f32.mrb[0].mxu0
  %4396 = vmatprep.mubr.f32.mxu0 %v1864
  %4397 = vmatmul.mubr.f32.gmra.mrb[0].mxu0 %v1544
  %v4398 = vpop.f32.mrb[0].mxu0
  %v4399 = vadd.f32 %v4075, %v4398
  %v4400 = vpop.f32.mrb[0].mxu0
  %4401 = vmatprep.mubr.f32.mxu0 %v1865
  %4402 = vmatmul.mubr.f32.gmra.mrb[0].mxu0 %v1545
  %v4403 = vpop.f32.mrb[0].mxu0
  %v4404 = vadd.f32 %v4075, %v4403
  %v4405 = vpop.f32.mrb[0].mxu0
  %4406 = vmatprep.mubr.f32.mxu0 %v1866
  %4407 = vmatmul.mubr.f32.gmra.mrb[0].mxu0 %v1546
  %v4408 = vpop.f32.mrb[0].mxu0
  %v4409 = vadd.f32 %v4075, %v4408
  %v4410 = vpop.f32.mrb[0].mxu0
  %4411 = vmatprep.mubr.f32.mxu0 %v1867
  %4412 = vmatmul.mubr.f32.gmra.mrb[0].mxu0 %v1547
  %v4413 = vpop.f32.mrb[0].mxu0
  %v4414 = vadd.f32 %v4075, %v4413
  %v4415 = vpop.f32.mrb[0].mxu0
  %4416 = vmatprep.mubr.f32.mxu0 %v1868
  %4417 = vmatmul.mubr.f32.gmra.mrb[0].mxu0 %v1548
  %v4418 = vpop.f32.mrb[0].mxu0
  %v4419 = vadd.f32 %v4075, %v4418
  %v4420 = vpop.f32.mrb[0].mxu0
  %4421 = vmatprep.mubr.f32.mxu0 %v1869
  %4422 = vmatmul.mubr.f32.gmra.mrb[0].mxu0 %v1549
  %v4423 = vpop.f32.mrb[0].mxu0
  %v4424 = vadd.f32 %v4075, %v4423
  %v4425 = vpop.f32.mrb[0].mxu0
  %4426 = vmatprep.mubr.f32.mxu0 %v1870
  %4427 = vmatmul.mubr.f32.gmra.mrb[0].mxu0 %v1550
  %v4428 = vpop.f32.mrb[0].mxu0
  %v4429 = vadd.f32 %v4075, %v4428
  %v4430 = vpop.f32.mrb[0].mxu0
  %4431 = vmatprep.mubr.f32.mxu0 %v1871
  %4432 = vmatmul.mubr.f32.gmra.mrb[0].mxu0 %v1551
  %v4433 = vpop.f32.mrb[0].mxu0
  %v4434 = vadd.f32 %v4075, %v4433
  %v4435 = vpop.f32.mrb[0].mxu0
  %4436 = vmatprep.mubr.f32.mxu0 %v1872
  %4437 = vmatmul.mubr.f32.gmra.mrb[0].mxu0 %v1552
  %v4438 = vpop.f32.mrb[0].mxu0
  %v4439 = vadd.f32 %v4075, %v4438
  %v4440 = vpop.f32.mrb[0].mxu0
  %4441 = vmatprep.mubr.f32.mxu0 %v1873
  %4442 = vmatmul.mubr.f32.gmra.mrb[0].mxu0 %v1553
  %v4443 = vpop.f32.mrb[0].mxu0
  %v4444 = vadd.f32 %v4075, %v4443
  %v4445 = vpop.f32.mrb[0].mxu0
  %4446 = vmatprep.mubr.f32.mxu0 %v1874
  %4447 = vmatmul.mubr.f32.gmra.mrb[0].mxu0 %v1554
  %v4448 = vpop.f32.mrb[0].mxu0
  %v4449 = vadd.f32 %v4075, %v4448
  %v4450 = vpop.f32.mrb[0].mxu0
  %4451 = vmatprep.mubr.f32.mxu0 %v1875
  %4452 = vmatmul.mubr.f32.gmra.mrb[0].mxu0 %v1555
  %v4453 = vpop.f32.mrb[0].mxu0
  %v4454 = vadd.f32 %v4075, %v4453
  %v4455 = vpop.f32.mrb[0].mxu0
  %4456 = vmatprep.mubr.f32.mxu0 %v1876
  %4457 = vmatmul.mubr.f32.gmra.mrb[0].mxu0 %v1556
  %v4458 = vpop.f32.mrb[0].mxu0
  %v4459 = vadd.f32 %v4075, %v4458
  %v4460 = vpop.f32.mrb[0].mxu0
  %4461 = vdwg.mxu0
  %4462 = vmatprep.subr.mxu0 0.0
  %4463 = vmatpush1.msra.mxu0 %v3958
  %4464 = vmatprep.subr.mxu0 0.0
  %4465 = vmatpush1.msra.mxu0 %v3959
  %4466 = vmatprep.subr.mxu0 0.0
  %4467 = vmatpush1.msra.mxu0 %v3960
  %4468 = vmatprep.subr.mxu0 0.0
  %4469 = vmatpush1.msra.mxu0 %v3961
  %4470 = vmatprep.subr.mxu0 0.0
  %4471 = vmatpush1.msra.mxu0 %v3962
  %4472 = vmatprep.subr.mxu0 0.0
  %4473 = vmatpush1.msra.mxu0 %v3963
  %4474 = vmatprep.subr.mxu0 0.0
  %4475 = vmatpush1.msra.mxu0 %v3964
  %4476 = vmatprep.subr.mxu0 0.0
  %4477 = vmatpush1.msra.mxu0 %v3965
  %4478 = vmatprep.subr.mxu0 0.0
  %4479 = vmatpush1.msra.mxu0 %v3966
  %4480 = vmatprep.subr.mxu0 0.0
  %4481 = vmatpush1.msra.mxu0 %v3967
  %4482 = vmatprep.subr.mxu0 0.0
  %4483 = vmatpush1.msra.mxu0 %v3968
  %4484 = vmatprep.subr.mxu0 0.0
  %4485 = vmatpush1.msra.mxu0 %v3969
  %4486 = vmatprep.subr.mxu0 0.0
  %4487 = vmatpush1.msra.mxu0 %v3970
  %4488 = vmatprep.subr.mxu0 0.0
  %4489 = vmatpush1.msra.mxu0 %v3971
  %4490 = vmatprep.subr.mxu0 0.0
  %4491 = vmatpush1.msra.mxu0 %v3972
  %4492 = vmatprep.subr.mxu0 0.0
  %4493 = vmatpush1.msra.mxu0 %v3973
  %4494 = vmatprep.subr.mxu0 0.0
  %4495 = vmatpush1.msra.mxu0 %v3974
  %4496 = vmatprep.subr.mxu0 0.0
  %4497 = vmatpush1.msra.mxu0 %v3975
  %4498 = vmatprep.subr.mxu0 0.0
  %4499 = vmatpush1.msra.mxu0 %v3976
  %4500 = vmatprep.subr.mxu0 0.0
  %4501 = vmatpush1.msra.mxu0 %v3977
  %4502 = vmatprep.subr.mxu0 0.0
  %4503 = vmatpush1.msra.mxu0 %v3978
  %4504 = vmatprep.subr.mxu0 0.0
  %4505 = vmatpush1.msra.mxu0 %v3979
  %4506 = vmatprep.subr.mxu0 0.0
  %4507 = vmatpush1.msra.mxu0 %v3980
  %4508 = vmatprep.subr.mxu0 0.0
  %4509 = vmatpush1.msra.mxu0 %v3981
  %4510 = vmatprep.subr.mxu0 0.0
  %4511 = vmatpush1.msra.mxu0 %v3982
  %4512 = vmatprep.subr.mxu0 0.0
  %4513 = vmatpush1.msra.mxu0 %v3983
  %4514 = vmatprep.subr.mxu0 0.0
  %4515 = vmatpush1.msra.mxu0 %v3984
  %4516 = vmatprep.subr.mxu0 0.0
  %4517 = vmatpush1.msra.mxu0 %v3985
  %4518 = vmatprep.subr.mxu0 0.0
  %4519 = vmatpush1.msra.mxu0 %v3986
  %4520 = vmatprep.subr.mxu0 0.0
  %4521 = vmatpush1.msra.mxu0 %v3987
  %4522 = vmatprep.subr.mxu0 0.0
  %4523 = vmatpush1.msra.mxu0 %v3988
  %4524 = vmatprep.subr.mxu0 0.0
  %4525 = vmatpush1.msra.mxu0 %v3989
  %4526 = vmatprep.mubr.f32.mxu0 %v2582
  %4527 = vmatmul.mubr.f32.gmra.mrb[0].mxu0 %v2262
  %v4528 = vpop.f32.mrb[0].mxu0
  %v4529 = vadd.f32 %v4144, %v4528
  %v4530 = vpop.f32.mrb[0].mxu0
  %4531 = vmatprep.mubr.f32.mxu0 %v2583
  %4532 = vmatmul.mubr.f32.gmra.mrb[0].mxu0 %v2263
  %v4533 = vpop.f32.mrb[0].mxu0
  %v4534 = vadd.f32 %v4149, %v4533
  %v4535 = vpop.f32.mrb[0].mxu0
  %4536 = vmatprep.mubr.f32.mxu0 %v2584
  %4537 = vmatmul.mubr.f32.gmra.mrb[0].mxu0 %v2264
  %v4538 = vpop.f32.mrb[0].mxu0
  %v4539 = vadd.f32 %v4154, %v4538
  %v4540 = vpop.f32.mrb[0].mxu0
  %4541 = vmatprep.mubr.f32.mxu0 %v2585
  %4542 = vmatmul.mubr.f32.gmra.mrb[0].mxu0 %v2265
  %v4543 = vpop.f32.mrb[0].mxu0
  %v4544 = vadd.f32 %v4159, %v4543
  %v4545 = vpop.f32.mrb[0].mxu0
  %4546 = vmatprep.mubr.f32.mxu0 %v2586
  %4547 = vmatmul.mubr.f32.gmra.mrb[0].mxu0 %v2266
  %v4548 = vpop.f32.mrb[0].mxu0
  %v4549 = vadd.f32 %v4164, %v4548
  %v4550 = vpop.f32.mrb[0].mxu0
  %4551 = vmatprep.mubr.f32.mxu0 %v2587
  %4552 = vmatmul.mubr.f32.gmra.mrb[0].mxu0 %v2267
  %v4553 = vpop.f32.mrb[0].mxu0
  %v4554 = vadd.f32 %v4169, %v4553
  %v4555 = vpop.f32.mrb[0].mxu0
  %4556 = vmatprep.mubr.f32.mxu0 %v2588
  %4557 = vmatmul.mubr.f32.gmra.mrb[0].mxu0 %v2268
  %v4558 = vpop.f32.mrb[0].mxu0
  %v4559 = vadd.f32 %v4174, %v4558
  %v4560 = vpop.f32.mrb[0].mxu0
  %4561 = vmatprep.mubr.f32.mxu0 %v2589
  %4562 = vmatmul.mubr.f32.gmra.mrb[0].mxu0 %v2269
  %v4563 = vpop.f32.mrb[0].mxu0
  %v4564 = vadd.f32 %v4179, %v4563
  %v4565 = vpop.f32.mrb[0].mxu0
  %4566 = vmatprep.mubr.f32.mxu0 %v2590
  %4567 = vmatmul.mubr.f32.gmra.mrb[0].mxu0 %v2270
  %v4568 = vpop.f32.mrb[0].mxu0
  %v4569 = vadd.f32 %v4184, %v4568
  %v4570 = vpop.f32.mrb[0].mxu0
  %4571 = vmatprep.mubr.f32.mxu0 %v2591
  %4572 = vmatmul.mubr.f32.gmra.mrb[0].mxu0 %v2271
  %v4573 = vpop.f32.mrb[0].mxu0
  %v4574 = vadd.f32 %v4189, %v4573
  %v4575 = vpop.f32.mrb[0].mxu0
  %4576 = vmatprep.mubr.f32.mxu0 %v2592
  %4577 = vmatmul.mubr.f32.gmra.mrb[0].mxu0 %v2272
  %v4578 = vpop.f32.mrb[0].mxu0
  %v4579 = vadd.f32 %v4194, %v4578
  %v4580 = vpop.f32.mrb[0].mxu0
  %4581 = vmatprep.mubr.f32.mxu0 %v2593
  %4582 = vmatmul.mubr.f32.gmra.mrb[0].mxu0 %v2273
  %v4583 = vpop.f32.mrb[0].mxu0
  %v4584 = vadd.f32 %v4199, %v4583
  %v4585 = vpop.f32.mrb[0].mxu0
  %4586 = vmatprep.mubr.f32.mxu0 %v2594
  %4587 = vmatmul.mubr.f32.gmra.mrb[0].mxu0 %v2274
  %v4588 = vpop.f32.mrb[0].mxu0
  %v4589 = vadd.f32 %v4204, %v4588
  %v4590 = vpop.f32.mrb[0].mxu0
  %4591 = vmatprep.mubr.f32.mxu0 %v2595
  %4592 = vmatmul.mubr.f32.gmra.mrb[0].mxu0 %v2275
  %v4593 = vpop.f32.mrb[0].mxu0
  %v4594 = vadd.f32 %v4209, %v4593
  %v4595 = vpop.f32.mrb[0].mxu0
  %4596 = vmatprep.mubr.f32.mxu0 %v2596
  %4597 = vmatmul.mubr.f32.gmra.mrb[0].mxu0 %v2276
  %v4598 = vpop.f32.mrb[0].mxu0
  %v4599 = vadd.f32 %v4214, %v4598
  %v4600 = vpop.f32.mrb[0].mxu0
  %4601 = vmatprep.mubr.f32.mxu0 %v2597
  %4602 = vmatmul.mubr.f32.gmra.mrb[0].mxu0 %v2277
  %v4603 = vpop.f32.mrb[0].mxu0
  %v4604 = vadd.f32 %v4219, %v4603
  %v4605 = vpop.f32.mrb[0].mxu0
  %4606 = vmatprep.mubr.f32.mxu0 %v2598
  %4607 = vmatmul.mubr.f32.gmra.mrb[0].mxu0 %v2278
  %v4608 = vpop.f32.mrb[0].mxu0
  %v4609 = vadd.f32 %v4224, %v4608
  %v4610 = vpop.f32.mrb[0].mxu0
  %4611 = vmatprep.mubr.f32.mxu0 %v2599
  %4612 = vmatmul.mubr.f32.gmra.mrb[0].mxu0 %v2279
  %v4613 = vpop.f32.mrb[0].mxu0
  %v4614 = vadd.f32 %v4229, %v4613
  %v4615 = vpop.f32.mrb[0].mxu0
  %4616 = vmatprep.mubr.f32.mxu0 %v2600
  %4617 = vmatmul.mubr.f32.gmra.mrb[0].mxu0 %v2280
  %v4618 = vpop.f32.mrb[0].mxu0
  %v4619 = vadd.f32 %v4234, %v4618
  %v4620 = vpop.f32.mrb[0].mxu0
  %4621 = vmatprep.mubr.f32.mxu0 %v2601
  %4622 = vmatmul.mubr.f32.gmra.mrb[0].mxu0 %v2281
  %v4623 = vpop.f32.mrb[0].mxu0
  %v4624 = vadd.f32 %v4239, %v4623
  %v4625 = vpop.f32.mrb[0].mxu0
  %4626 = vmatprep.mubr.f32.mxu0 %v2602
  %4627 = vmatmul.mubr.f32.gmra.mrb[0].mxu0 %v2282
  %v4628 = vpop.f32.mrb[0].mxu0
  %v4629 = vadd.f32 %v4244, %v4628
  %v4630 = vpop.f32.mrb[0].mxu0
  %4631 = vmatprep.mubr.f32.mxu0 %v2603
  %4632 = vmatmul.mubr.f32.gmra.mrb[0].mxu0 %v2283
  %v4633 = vpop.f32.mrb[0].mxu0
  %v4634 = vadd.f32 %v4249, %v4633
  %v4635 = vpop.f32.mrb[0].mxu0
  %4636 = vmatprep.mubr.f32.mxu0 %v2604
  %4637 = vmatmul.mubr.f32.gmra.mrb[0].mxu0 %v2284
  %v4638 = vpop.f32.mrb[0].mxu0
  %v4639 = vadd.f32 %v4254, %v4638
  %v4640 = vpop.f32.mrb[0].mxu0
  %4641 = vmatprep.mubr.f32.mxu0 %v2605
  %4642 = vmatmul.mubr.f32.gmra.mrb[0].mxu0 %v2285
  %v4643 = vpop.f32.mrb[0].mxu0
  %v4644 = vadd.f32 %v4259, %v4643
  %v4645 = vpop.f32.mrb[0].mxu0
  %4646 = vmatprep.mubr.f32.mxu0 %v2606
  %4647 = vmatmul.mubr.f32.gmra.mrb[0].mxu0 %v2286
  %v4648 = vpop.f32.mrb[0].mxu0
  %v4649 = vadd.f32 %v4264, %v4648
  %v4650 = vpop.f32.mrb[0].mxu0
  %4651 = vmatprep.mubr.f32.mxu0 %v2607
  %4652 = vmatmul.mubr.f32.gmra.mrb[0].mxu0 %v2287
  %v4653 = vpop.f32.mrb[0].mxu0
  %v4654 = vadd.f32 %v4269, %v4653
  %v4655 = vpop.f32.mrb[0].mxu0
  %4656 = vmatprep.mubr.f32.mxu0 %v2608
  %4657 = vmatmul.mubr.f32.gmra.mrb[0].mxu0 %v2288
  %v4658 = vpop.f32.mrb[0].mxu0
  %v4659 = vadd.f32 %v4274, %v4658
  %v4660 = vpop.f32.mrb[0].mxu0
  %4661 = vmatprep.mubr.f32.mxu0 %v2609
  %4662 = vmatmul.mubr.f32.gmra.mrb[0].mxu0 %v2289
  %v4663 = vpop.f32.mrb[0].mxu0
  %v4664 = vadd.f32 %v4279, %v4663
  %v4665 = vpop.f32.mrb[0].mxu0
  %4666 = vmatprep.mubr.f32.mxu0 %v2610
  %4667 = vmatmul.mubr.f32.gmra.mrb[0].mxu0 %v2290
  %v4668 = vpop.f32.mrb[0].mxu0
  %v4669 = vadd.f32 %v4284, %v4668
  %v4670 = vpop.f32.mrb[0].mxu0
  %4671 = vmatprep.mubr.f32.mxu0 %v2611
  %4672 = vmatmul.mubr.f32.gmra.mrb[0].mxu0 %v2291
  %v4673 = vpop.f32.mrb[0].mxu0
  %v4674 = vadd.f32 %v4289, %v4673
  %v4675 = vpop.f32.mrb[0].mxu0
  %4676 = vmatprep.mubr.f32.mxu0 %v2612
  %4677 = vmatmul.mubr.f32.gmra.mrb[0].mxu0 %v2292
  %v4678 = vpop.f32.mrb[0].mxu0
  %v4679 = vadd.f32 %v4294, %v4678
  %v4680 = vpop.f32.mrb[0].mxu0
  %4681 = vmatprep.mubr.f32.mxu0 %v2613
  %4682 = vmatmul.mubr.f32.gmra.mrb[0].mxu0 %v2293
  %v4683 = vpop.f32.mrb[0].mxu0
  %v4684 = vadd.f32 %v4299, %v4683
  %v4685 = vpop.f32.mrb[0].mxu0
  %4686 = vmatprep.mubr.f32.mxu0 %v2614
  %4687 = vmatmul.mubr.f32.gmra.mrb[0].mxu0 %v2294
  %v4688 = vpop.f32.mrb[0].mxu0
  %v4689 = vadd.f32 %v4304, %v4688
  %v4690 = vpop.f32.mrb[0].mxu0
  %4691 = vmatprep.mubr.f32.mxu0 %v2615
  %4692 = vmatmul.mubr.f32.gmra.mrb[0].mxu0 %v2295
  %v4693 = vpop.f32.mrb[0].mxu0
  %v4694 = vadd.f32 %v4309, %v4693
  %v4695 = vpop.f32.mrb[0].mxu0
  %4696 = vmatprep.mubr.f32.mxu0 %v2616
  %4697 = vmatmul.mubr.f32.gmra.mrb[0].mxu0 %v2296
  %v4698 = vpop.f32.mrb[0].mxu0
  %v4699 = vadd.f32 %v4314, %v4698
  %v4700 = vpop.f32.mrb[0].mxu0
  %4701 = vmatprep.mubr.f32.mxu0 %v2617
  %4702 = vmatmul.mubr.f32.gmra.mrb[0].mxu0 %v2297
  %v4703 = vpop.f32.mrb[0].mxu0
  %v4704 = vadd.f32 %v4319, %v4703
  %v4705 = vpop.f32.mrb[0].mxu0
  %4706 = vmatprep.mubr.f32.mxu0 %v2618
  %4707 = vmatmul.mubr.f32.gmra.mrb[0].mxu0 %v2298
  %v4708 = vpop.f32.mrb[0].mxu0
  %v4709 = vadd.f32 %v4324, %v4708
  %v4710 = vpop.f32.mrb[0].mxu0
  %4711 = vmatprep.mubr.f32.mxu0 %v2619
  %4712 = vmatmul.mubr.f32.gmra.mrb[0].mxu0 %v2299
  %v4713 = vpop.f32.mrb[0].mxu0
  %v4714 = vadd.f32 %v4329, %v4713
  %v4715 = vpop.f32.mrb[0].mxu0
  %4716 = vmatprep.mubr.f32.mxu0 %v2620
  %4717 = vmatmul.mubr.f32.gmra.mrb[0].mxu0 %v2300
  %v4718 = vpop.f32.mrb[0].mxu0
  %v4719 = vadd.f32 %v4334, %v4718
  %v4720 = vpop.f32.mrb[0].mxu0
  %4721 = vmatprep.mubr.f32.mxu0 %v2621
  %4722 = vmatmul.mubr.f32.gmra.mrb[0].mxu0 %v2301
  %v4723 = vpop.f32.mrb[0].mxu0
  %v4724 = vadd.f32 %v4339, %v4723
  %v4725 = vpop.f32.mrb[0].mxu0
  %4726 = vmatprep.mubr.f32.mxu0 %v2622
  %4727 = vmatmul.mubr.f32.gmra.mrb[0].mxu0 %v2302
  %v4728 = vpop.f32.mrb[0].mxu0
  %v4729 = vadd.f32 %v4344, %v4728
  %v4730 = vpop.f32.mrb[0].mxu0
  %4731 = vmatprep.mubr.f32.mxu0 %v2623
  %4732 = vmatmul.mubr.f32.gmra.mrb[0].mxu0 %v2303
  %v4733 = vpop.f32.mrb[0].mxu0
  %v4734 = vadd.f32 %v4349, %v4733
  %v4735 = vpop.f32.mrb[0].mxu0
  %4736 = vmatprep.mubr.f32.mxu0 %v2624
  %4737 = vmatmul.mubr.f32.gmra.mrb[0].mxu0 %v2304
  %v4738 = vpop.f32.mrb[0].mxu0
  %v4739 = vadd.f32 %v4354, %v4738
  %v4740 = vpop.f32.mrb[0].mxu0
  %4741 = vmatprep.mubr.f32.mxu0 %v2625
  %4742 = vmatmul.mubr.f32.gmra.mrb[0].mxu0 %v2305
  %v4743 = vpop.f32.mrb[0].mxu0
  %v4744 = vadd.f32 %v4359, %v4743
  %v4745 = vpop.f32.mrb[0].mxu0
  %4746 = vmatprep.mubr.f32.mxu0 %v2626
  %4747 = vmatmul.mubr.f32.gmra.mrb[0].mxu0 %v2306
  %v4748 = vpop.f32.mrb[0].mxu0
  %v4749 = vadd.f32 %v4364, %v4748
  %v4750 = vpop.f32.mrb[0].mxu0
  %4751 = vmatprep.mubr.f32.mxu0 %v2627
  %4752 = vmatmul.mubr.f32.gmra.mrb[0].mxu0 %v2307
  %v4753 = vpop.f32.mrb[0].mxu0
  %v4754 = vadd.f32 %v4369, %v4753
  %v4755 = vpop.f32.mrb[0].mxu0
  %4756 = vmatprep.mubr.f32.mxu0 %v2628
  %4757 = vmatmul.mubr.f32.gmra.mrb[0].mxu0 %v2308
  %v4758 = vpop.f32.mrb[0].mxu0
  %v4759 = vadd.f32 %v4374, %v4758
  %v4760 = vpop.f32.mrb[0].mxu0
  %4761 = vmatprep.mubr.f32.mxu0 %v2629
  %4762 = vmatmul.mubr.f32.gmra.mrb[0].mxu0 %v2309
  %v4763 = vpop.f32.mrb[0].mxu0
  %v4764 = vadd.f32 %v4379, %v4763
  %v4765 = vpop.f32.mrb[0].mxu0
  %4766 = vmatprep.mubr.f32.mxu0 %v2630
  %4767 = vmatmul.mubr.f32.gmra.mrb[0].mxu0 %v2310
  %v4768 = vpop.f32.mrb[0].mxu0
  %v4769 = vadd.f32 %v4384, %v4768
  %v4770 = vpop.f32.mrb[0].mxu0
  %4771 = vmatprep.mubr.f32.mxu0 %v2631
  %4772 = vmatmul.mubr.f32.gmra.mrb[0].mxu0 %v2311
  %v4773 = vpop.f32.mrb[0].mxu0
  %v4774 = vadd.f32 %v4389, %v4773
  %v4775 = vpop.f32.mrb[0].mxu0
  %4776 = vmatprep.mubr.f32.mxu0 %v2632
  %4777 = vmatmul.mubr.f32.gmra.mrb[0].mxu0 %v2312
  %v4778 = vpop.f32.mrb[0].mxu0
  %v4779 = vadd.f32 %v4394, %v4778
  %v4780 = vpop.f32.mrb[0].mxu0
  %4781 = vmatprep.mubr.f32.mxu0 %v2633
  %4782 = vmatmul.mubr.f32.gmra.mrb[0].mxu0 %v2313
  %v4783 = vpop.f32.mrb[0].mxu0
  %v4784 = vadd.f32 %v4399, %v4783
  %v4785 = vpop.f32.mrb[0].mxu0
  %4786 = vmatprep.mubr.f32.mxu0 %v2634
  %4787 = vmatmul.mubr.f32.gmra.mrb[0].mxu0 %v2314
  %v4788 = vpop.f32.mrb[0].mxu0
  %v4789 = vadd.f32 %v4404, %v4788
  %v4790 = vpop.f32.mrb[0].mxu0
  %4791 = vmatprep.mubr.f32.mxu0 %v2635
  %4792 = vmatmul.mubr.f32.gmra.mrb[0].mxu0 %v2315
  %v4793 = vpop.f32.mrb[0].mxu0
  %v4794 = vadd.f32 %v4409, %v4793
  %v4795 = vpop.f32.mrb[0].mxu0
  %4796 = vmatprep.mubr.f32.mxu0 %v2636
  %4797 = vmatmul.mubr.f32.gmra.mrb[0].mxu0 %v2316
  %v4798 = vpop.f32.mrb[0].mxu0
  %v4799 = vadd.f32 %v4414, %v4798
  %v4800 = vpop.f32.mrb[0].mxu0
  %4801 = vmatprep.mubr.f32.mxu0 %v2637
  %4802 = vmatmul.mubr.f32.gmra.mrb[0].mxu0 %v2317
  %v4803 = vpop.f32.mrb[0].mxu0
  %v4804 = vadd.f32 %v4419, %v4803
  %v4805 = vpop.f32.mrb[0].mxu0
  %4806 = vmatprep.mubr.f32.mxu0 %v2638
  %4807 = vmatmul.mubr.f32.gmra.mrb[0].mxu0 %v2318
  %v4808 = vpop.f32.mrb[0].mxu0
  %v4809 = vadd.f32 %v4424, %v4808
  %v4810 = vpop.f32.mrb[0].mxu0
  %4811 = vmatprep.mubr.f32.mxu0 %v2639
  %4812 = vmatmul.mubr.f32.gmra.mrb[0].mxu0 %v2319
  %v4813 = vpop.f32.mrb[0].mxu0
  %v4814 = vadd.f32 %v4429, %v4813
  %v4815 = vpop.f32.mrb[0].mxu0
  %4816 = vmatprep.mubr.f32.mxu0 %v2640
  %4817 = vmatmul.mubr.f32.gmra.mrb[0].mxu0 %v2320
  %v4818 = vpop.f32.mrb[0].mxu0
  %v4819 = vadd.f32 %v4434, %v4818
  %v4820 = vpop.f32.mrb[0].mxu0
  %4821 = vmatprep.mubr.f32.mxu0 %v2641
  %4822 = vmatmul.mubr.f32.gmra.mrb[0].mxu0 %v2321
  %v4823 = vpop.f32.mrb[0].mxu0
  %v4824 = vadd.f32 %v4439, %v4823
  %v4825 = vpop.f32.mrb[0].mxu0
  %4826 = vmatprep.mubr.f32.mxu0 %v2642
  %4827 = vmatmul.mubr.f32.gmra.mrb[0].mxu0 %v2322
  %v4828 = vpop.f32.mrb[0].mxu0
  %v4829 = vadd.f32 %v4444, %v4828
  %v4830 = vpop.f32.mrb[0].mxu0
  %4831 = vmatprep.mubr.f32.mxu0 %v2643
  %4832 = vmatmul.mubr.f32.gmra.mrb[0].mxu0 %v2323
  %v4833 = vpop.f32.mrb[0].mxu0
  %v4834 = vadd.f32 %v4449, %v4833
  %v4835 = vpop.f32.mrb[0].mxu0
  %4836 = vmatprep.mubr.f32.mxu0 %v2644
  %4837 = vmatmul.mubr.f32.gmra.mrb[0].mxu0 %v2324
  %v4838 = vpop.f32.mrb[0].mxu0
  %v4839 = vadd.f32 %v4454, %v4838
  %v4840 = vpop.f32.mrb[0].mxu0
  %4841 = vmatprep.mubr.f32.mxu0 %v2645
  %4842 = vmatmul.mubr.f32.gmra.mrb[0].mxu0 %v2325
  %v4843 = vpop.f32.mrb[0].mxu0
  %v4844 = vadd.f32 %v4459, %v4843
  %v4845 = vpop.f32.mrb[0].mxu0
  %4846 = vdwg.mxu0
  %4847 = vmatprep.subr.mxu0 0.0
  %4848 = vmatpush1.msra.mxu0 %v3990
  %4849 = vmatprep.subr.mxu0 0.0
  %4850 = vmatpush1.msra.mxu0 %v3991
  %4851 = vmatprep.subr.mxu0 0.0
  %4852 = vmatpush1.msra.mxu0 %v3992
  %4853 = vmatprep.subr.mxu0 0.0
  %4854 = vmatpush1.msra.mxu0 %v3993
  %4855 = vmatprep.subr.mxu0 0.0
  %4856 = vmatpush1.msra.mxu0 %v3994
  %4857 = vmatprep.subr.mxu0 0.0
  %4858 = vmatpush1.msra.mxu0 %v3995
  %4859 = vmatprep.subr.mxu0 0.0
  %4860 = vmatpush1.msra.mxu0 %v3996
  %4861 = vmatprep.subr.mxu0 0.0
  %4862 = vmatpush1.msra.mxu0 %v3997
  %4863 = vmatprep.subr.mxu0 0.0
  %4864 = vmatpush1.msra.mxu0 %v3998
  %4865 = vmatprep.subr.mxu0 0.0
  %4866 = vmatpush1.msra.mxu0 %v3999
  %4867 = vmatprep.subr.mxu0 0.0
  %4868 = vmatpush1.msra.mxu0 %v4000
  %4869 = vmatprep.subr.mxu0 0.0
  %4870 = vmatpush1.msra.mxu0 %v4001
  %4871 = vmatprep.subr.mxu0 0.0
  %4872 = vmatpush1.msra.mxu0 %v4002
  %4873 = vmatprep.subr.mxu0 0.0
  %4874 = vmatpush1.msra.mxu0 %v4003
  %4875 = vmatprep.subr.mxu0 0.0
  %4876 = vmatpush1.msra.mxu0 %v4004
  %4877 = vmatprep.subr.mxu0 0.0
  %4878 = vmatpush1.msra.mxu0 %v4005
  %4879 = vmatprep.subr.mxu0 0.0
  %4880 = vmatpush1.msra.mxu0 %v4006
  %4881 = vmatprep.subr.mxu0 0.0
  %4882 = vmatpush1.msra.mxu0 %v4007
  %4883 = vmatprep.subr.mxu0 0.0
  %4884 = vmatpush1.msra.mxu0 %v4008
  %4885 = vmatprep.subr.mxu0 0.0
  %4886 = vmatpush1.msra.mxu0 %v4009
  %4887 = vmatprep.subr.mxu0 0.0
  %4888 = vmatpush1.msra.mxu0 %v4010
  %4889 = vmatprep.subr.mxu0 0.0
  %4890 = vmatpush1.msra.mxu0 %v4011
  %4891 = vmatprep.subr.mxu0 0.0
  %4892 = vmatpush1.msra.mxu0 %v4012
  %4893 = vmatprep.subr.mxu0 0.0
  %4894 = vmatpush1.msra.mxu0 %v4013
  %4895 = vmatprep.subr.mxu0 0.0
  %4896 = vmatpush1.msra.mxu0 %v4014
  %4897 = vmatprep.subr.mxu0 0.0
  %4898 = vmatpush1.msra.mxu0 %v4015
  %4899 = vmatprep.subr.mxu0 0.0
  %4900 = vmatpush1.msra.mxu0 %v4016
  %4901 = vmatprep.subr.mxu0 0.0
  %4902 = vmatpush1.msra.mxu0 %v4017
  %4903 = vmatprep.subr.mxu0 0.0
  %4904 = vmatpush1.msra.mxu0 %v4018
  %4905 = vmatprep.subr.mxu0 0.0
  %4906 = vmatpush1.msra.mxu0 %v4019
  %4907 = vmatprep.subr.mxu0 0.0
  %4908 = vmatpush1.msra.mxu0 %v4020
  %4909 = vmatprep.subr.mxu0 0.0
  %4910 = vmatpush1.msra.mxu0 %v4021
  %4911 = vmatprep.mubr.f32.mxu0 %v2902
  %4912 = vmatmul.mubr.f32.gmra.mrb[0].mxu0 %v914
  %v4913 = vpop.f32.mrb[0].mxu0
  %v4914 = vadd.f32 %v4529, %v4913
  %v4915 = vpop.f32.mrb[0].mxu0
  %4916 = vmatprep.mubr.f32.mxu0 %v2903
  %4917 = vmatmul.mubr.f32.gmra.mrb[0].mxu0 %v915
  %v4918 = vpop.f32.mrb[0].mxu0
  %v4919 = vadd.f32 %v4534, %v4918
  %v4920 = vpop.f32.mrb[0].mxu0
  %4921 = vmatprep.mubr.f32.mxu0 %v2904
  %4922 = vmatmul.mubr.f32.gmra.mrb[0].mxu0 %v916
  %v4923 = vpop.f32.mrb[0].mxu0
  %v4924 = vadd.f32 %v4539, %v4923
  %v4925 = vpop.f32.mrb[0].mxu0
  %4926 = vmatprep.mubr.f32.mxu0 %v2905
  %4927 = vmatmul.mubr.f32.gmra.mrb[0].mxu0 %v917
  %v4928 = vpop.f32.mrb[0].mxu0
  %v4929 = vadd.f32 %v4544, %v4928
  %v4930 = vpop.f32.mrb[0].mxu0
  %4931 = vmatprep.mubr.f32.mxu0 %v2906
  %4932 = vmatmul.mubr.f32.gmra.mrb[0].mxu0 %v918
  %v4933 = vpop.f32.mrb[0].mxu0
  %v4934 = vadd.f32 %v4549, %v4933
  %v4935 = vpop.f32.mrb[0].mxu0
  %4936 = vmatprep.mubr.f32.mxu0 %v2907
  %4937 = vmatmul.mubr.f32.gmra.mrb[0].mxu0 %v919
  %v4938 = vpop.f32.mrb[0].mxu0
  %v4939 = vadd.f32 %v4554, %v4938
  %v4940 = vpop.f32.mrb[0].mxu0
  %4941 = vmatprep.mubr.f32.mxu0 %v2908
  %4942 = vmatmul.mubr.f32.gmra.mrb[0].mxu0 %v920
  %v4943 = vpop.f32.mrb[0].mxu0
  %v4944 = vadd.f32 %v4559, %v4943
  %v4945 = vpop.f32.mrb[0].mxu0
  %4946 = vmatprep.mubr.f32.mxu0 %v2909
  %4947 = vmatmul.mubr.f32.gmra.mrb[0].mxu0 %v921
  %v4948 = vpop.f32.mrb[0].mxu0
  %v4949 = vadd.f32 %v4564, %v4948
  %v4950 = vpop.f32.mrb[0].mxu0
  %4951 = vmatprep.mubr.f32.mxu0 %v2910
  %4952 = vmatmul.mubr.f32.gmra.mrb[0].mxu0 %v922
  %v4953 = vpop.f32.mrb[0].mxu0
  %v4954 = vadd.f32 %v4569, %v4953
  %v4955 = vpop.f32.mrb[0].mxu0
  %4956 = vmatprep.mubr.f32.mxu0 %v2911
  %4957 = vmatmul.mubr.f32.gmra.mrb[0].mxu0 %v923
  %v4958 = vpop.f32.mrb[0].mxu0
  %v4959 = vadd.f32 %v4574, %v4958
  %v4960 = vpop.f32.mrb[0].mxu0
  %4961 = vmatprep.mubr.f32.mxu0 %v2912
  %4962 = vmatmul.mubr.f32.gmra.mrb[0].mxu0 %v924
  %v4963 = vpop.f32.mrb[0].mxu0
  %v4964 = vadd.f32 %v4579, %v4963
  %v4965 = vpop.f32.mrb[0].mxu0
  %4966 = vmatprep.mubr.f32.mxu0 %v2913
  %4967 = vmatmul.mubr.f32.gmra.mrb[0].mxu0 %v925
  %v4968 = vpop.f32.mrb[0].mxu0
  %v4969 = vadd.f32 %v4584, %v4968
  %v4970 = vpop.f32.mrb[0].mxu0
  %4971 = vmatprep.mubr.f32.mxu0 %v2914
  %4972 = vmatmul.mubr.f32.gmra.mrb[0].mxu0 %v926
  %v4973 = vpop.f32.mrb[0].mxu0
  %v4974 = vadd.f32 %v4589, %v4973
  %v4975 = vpop.f32.mrb[0].mxu0
  %4976 = vmatprep.mubr.f32.mxu0 %v2915
  %4977 = vmatmul.mubr.f32.gmra.mrb[0].mxu0 %v927
  %v4978 = vpop.f32.mrb[0].mxu0
  %v4979 = vadd.f32 %v4594, %v4978
  %v4980 = vpop.f32.mrb[0].mxu0
  %4981 = vmatprep.mubr.f32.mxu0 %v2916
  %4982 = vmatmul.mubr.f32.gmra.mrb[0].mxu0 %v928
  %v4983 = vpop.f32.mrb[0].mxu0
  %v4984 = vadd.f32 %v4599, %v4983
  %v4985 = vpop.f32.mrb[0].mxu0
  %4986 = vmatprep.mubr.f32.mxu0 %v2917
  %4987 = vmatmul.mubr.f32.gmra.mrb[0].mxu0 %v929
  %v4988 = vpop.f32.mrb[0].mxu0
  %v4989 = vadd.f32 %v4604, %v4988
  %v4990 = vpop.f32.mrb[0].mxu0
  %4991 = vmatprep.mubr.f32.mxu0 %v2918
  %4992 = vmatmul.mubr.f32.gmra.mrb[0].mxu0 %v930
  %v4993 = vpop.f32.mrb[0].mxu0
  %v4994 = vadd.f32 %v4609, %v4993
  %v4995 = vpop.f32.mrb[0].mxu0
  %4996 = vmatprep.mubr.f32.mxu0 %v2919
  %4997 = vmatmul.mubr.f32.gmra.mrb[0].mxu0 %v931
  %v4998 = vpop.f32.mrb[0].mxu0
  %v4999 = vadd.f32 %v4614, %v4998
  %v5000 = vpop.f32.mrb[0].mxu0
  %5001 = vmatprep.mubr.f32.mxu0 %v2920
  %5002 = vmatmul.mubr.f32.gmra.mrb[0].mxu0 %v932
  %v5003 = vpop.f32.mrb[0].mxu0
  %v5004 = vadd.f32 %v4619, %v5003
  %v5005 = vpop.f32.mrb[0].mxu0
  %5006 = vmatprep.mubr.f32.mxu0 %v2921
  %5007 = vmatmul.mubr.f32.gmra.mrb[0].mxu0 %v933
  %v5008 = vpop.f32.mrb[0].mxu0
  %v5009 = vadd.f32 %v4624, %v5008
  %v5010 = vpop.f32.mrb[0].mxu0
  %5011 = vmatprep.mubr.f32.mxu0 %v2922
  %5012 = vmatmul.mubr.f32.gmra.mrb[0].mxu0 %v934
  %v5013 = vpop.f32.mrb[0].mxu0
  %v5014 = vadd.f32 %v4629, %v5013
  %v5015 = vpop.f32.mrb[0].mxu0
  %5016 = vmatprep.mubr.f32.mxu0 %v2923
  %5017 = vmatmul.mubr.f32.gmra.mrb[0].mxu0 %v935
  %v5018 = vpop.f32.mrb[0].mxu0
  %v5019 = vadd.f32 %v4634, %v5018
  %v5020 = vpop.f32.mrb[0].mxu0
  %5021 = vmatprep.mubr.f32.mxu0 %v2924
  %5022 = vmatmul.mubr.f32.gmra.mrb[0].mxu0 %v936
  %v5023 = vpop.f32.mrb[0].mxu0
  %v5024 = vadd.f32 %v4639, %v5023
  %v5025 = vpop.f32.mrb[0].mxu0
  %5026 = vmatprep.mubr.f32.mxu0 %v2925
  %5027 = vmatmul.mubr.f32.gmra.mrb[0].mxu0 %v937
  %v5028 = vpop.f32.mrb[0].mxu0
  %v5029 = vadd.f32 %v4644, %v5028
  %v5030 = vpop.f32.mrb[0].mxu0
  %5031 = vmatprep.mubr.f32.mxu0 %v2926
  %5032 = vmatmul.mubr.f32.gmra.mrb[0].mxu0 %v938
  %v5033 = vpop.f32.mrb[0].mxu0
  %v5034 = vadd.f32 %v4649, %v5033
  %v5035 = vpop.f32.mrb[0].mxu0
  %5036 = vmatprep.mubr.f32.mxu0 %v2927
  %5037 = vmatmul.mubr.f32.gmra.mrb[0].mxu0 %v939
  %v5038 = vpop.f32.mrb[0].mxu0
  %v5039 = vadd.f32 %v4654, %v5038
  %v5040 = vpop.f32.mrb[0].mxu0
  %5041 = vmatprep.mubr.f32.mxu0 %v2928
  %5042 = vmatmul.mubr.f32.gmra.mrb[0].mxu0 %v940
  %v5043 = vpop.f32.mrb[0].mxu0
  %v5044 = vadd.f32 %v4659, %v5043
  %v5045 = vpop.f32.mrb[0].mxu0
  %5046 = vmatprep.mubr.f32.mxu0 %v2929
  %5047 = vmatmul.mubr.f32.gmra.mrb[0].mxu0 %v941
  %v5048 = vpop.f32.mrb[0].mxu0
  %v5049 = vadd.f32 %v4664, %v5048
  %v5050 = vpop.f32.mrb[0].mxu0
  %5051 = vmatprep.mubr.f32.mxu0 %v2930
  %5052 = vmatmul.mubr.f32.gmra.mrb[0].mxu0 %v942
  %v5053 = vpop.f32.mrb[0].mxu0
  %v5054 = vadd.f32 %v4669, %v5053
  %v5055 = vpop.f32.mrb[0].mxu0
  %5056 = vmatprep.mubr.f32.mxu0 %v2931
  %5057 = vmatmul.mubr.f32.gmra.mrb[0].mxu0 %v943
  %v5058 = vpop.f32.mrb[0].mxu0
  %v5059 = vadd.f32 %v4674, %v5058
  %v5060 = vpop.f32.mrb[0].mxu0
  %5061 = vmatprep.mubr.f32.mxu0 %v2932
  %5062 = vmatmul.mubr.f32.gmra.mrb[0].mxu0 %v944
  %v5063 = vpop.f32.mrb[0].mxu0
  %v5064 = vadd.f32 %v4679, %v5063
  %v5065 = vpop.f32.mrb[0].mxu0
  %5066 = vmatprep.mubr.f32.mxu0 %v2933
  %5067 = vmatmul.mubr.f32.gmra.mrb[0].mxu0 %v945
  %v5068 = vpop.f32.mrb[0].mxu0
  %v5069 = vadd.f32 %v4684, %v5068
  %v5070 = vpop.f32.mrb[0].mxu0
  %5071 = vmatprep.mubr.f32.mxu0 %v2934
  %5072 = vmatmul.mubr.f32.gmra.mrb[0].mxu0 %v946
  %v5073 = vpop.f32.mrb[0].mxu0
  %v5074 = vadd.f32 %v4689, %v5073
  %v5075 = vpop.f32.mrb[0].mxu0
  %5076 = vmatprep.mubr.f32.mxu0 %v2935
  %5077 = vmatmul.mubr.f32.gmra.mrb[0].mxu0 %v947
  %v5078 = vpop.f32.mrb[0].mxu0
  %v5079 = vadd.f32 %v4694, %v5078
  %v5080 = vpop.f32.mrb[0].mxu0
  %5081 = vmatprep.mubr.f32.mxu0 %v2936
  %5082 = vmatmul.mubr.f32.gmra.mrb[0].mxu0 %v948
  %v5083 = vpop.f32.mrb[0].mxu0
  %v5084 = vadd.f32 %v4699, %v5083
  %v5085 = vpop.f32.mrb[0].mxu0
  %5086 = vmatprep.mubr.f32.mxu0 %v2937
  %5087 = vmatmul.mubr.f32.gmra.mrb[0].mxu0 %v949
  %v5088 = vpop.f32.mrb[0].mxu0
  %v5089 = vadd.f32 %v4704, %v5088
  %v5090 = vpop.f32.mrb[0].mxu0
  %5091 = vmatprep.mubr.f32.mxu0 %v2938
  %5092 = vmatmul.mubr.f32.gmra.mrb[0].mxu0 %v950
  %v5093 = vpop.f32.mrb[0].mxu0
  %v5094 = vadd.f32 %v4709, %v5093
  %v5095 = vpop.f32.mrb[0].mxu0
  %5096 = vmatprep.mubr.f32.mxu0 %v2939
  %5097 = vmatmul.mubr.f32.gmra.mrb[0].mxu0 %v951
  %v5098 = vpop.f32.mrb[0].mxu0
  %v5099 = vadd.f32 %v4714, %v5098
  %v5100 = vpop.f32.mrb[0].mxu0
  %5101 = vmatprep.mubr.f32.mxu0 %v2940
  %5102 = vmatmul.mubr.f32.gmra.mrb[0].mxu0 %v952
  %v5103 = vpop.f32.mrb[0].mxu0
  %v5104 = vadd.f32 %v4719, %v5103
  %v5105 = vpop.f32.mrb[0].mxu0
  %5106 = vmatprep.mubr.f32.mxu0 %v2941
  %5107 = vmatmul.mubr.f32.gmra.mrb[0].mxu0 %v953
  %v5108 = vpop.f32.mrb[0].mxu0
  %v5109 = vadd.f32 %v4724, %v5108
  %v5110 = vpop.f32.mrb[0].mxu0
  %5111 = vmatprep.mubr.f32.mxu0 %v2942
  %5112 = vmatmul.mubr.f32.gmra.mrb[0].mxu0 %v954
  %v5113 = vpop.f32.mrb[0].mxu0
  %v5114 = vadd.f32 %v4729, %v5113
  %v5115 = vpop.f32.mrb[0].mxu0
  %5116 = vmatprep.mubr.f32.mxu0 %v2943
  %5117 = vmatmul.mubr.f32.gmra.mrb[0].mxu0 %v955
  %v5118 = vpop.f32.mrb[0].mxu0
  %v5119 = vadd.f32 %v4734, %v5118
  %v5120 = vpop.f32.mrb[0].mxu0
  %5121 = vmatprep.mubr.f32.mxu0 %v2944
  %5122 = vmatmul.mubr.f32.gmra.mrb[0].mxu0 %v956
  %v5123 = vpop.f32.mrb[0].mxu0
  %v5124 = vadd.f32 %v4739, %v5123
  %v5125 = vpop.f32.mrb[0].mxu0
  %5126 = vmatprep.mubr.f32.mxu0 %v2945
  %5127 = vmatmul.mubr.f32.gmra.mrb[0].mxu0 %v957
  %v5128 = vpop.f32.mrb[0].mxu0
  %v5129 = vadd.f32 %v4744, %v5128
  %v5130 = vpop.f32.mrb[0].mxu0
  %5131 = vmatprep.mubr.f32.mxu0 %v2946
  %5132 = vmatmul.mubr.f32.gmra.mrb[0].mxu0 %v958
  %v5133 = vpop.f32.mrb[0].mxu0
  %v5134 = vadd.f32 %v4749, %v5133
  %v5135 = vpop.f32.mrb[0].mxu0
  %5136 = vmatprep.mubr.f32.mxu0 %v2947
  %5137 = vmatmul.mubr.f32.gmra.mrb[0].mxu0 %v959
  %v5138 = vpop.f32.mrb[0].mxu0
  %v5139 = vadd.f32 %v4754, %v5138
  %v5140 = vpop.f32.mrb[0].mxu0
  %5141 = vmatprep.mubr.f32.mxu0 %v2948
  %5142 = vmatmul.mubr.f32.gmra.mrb[0].mxu0 %v960
  %v5143 = vpop.f32.mrb[0].mxu0
  %v5144 = vadd.f32 %v4759, %v5143
  %v5145 = vpop.f32.mrb[0].mxu0
  %5146 = vmatprep.mubr.f32.mxu0 %v2949
  %5147 = vmatmul.mubr.f32.gmra.mrb[0].mxu0 %v961
  %v5148 = vpop.f32.mrb[0].mxu0
  %v5149 = vadd.f32 %v4764, %v5148
  %v5150 = vpop.f32.mrb[0].mxu0
  %5151 = vmatprep.mubr.f32.mxu0 %v2950
  %5152 = vmatmul.mubr.f32.gmra.mrb[0].mxu0 %v962
  %v5153 = vpop.f32.mrb[0].mxu0
  %v5154 = vadd.f32 %v4769, %v5153
  %v5155 = vpop.f32.mrb[0].mxu0
  %5156 = vmatprep.mubr.f32.mxu0 %v2951
  %5157 = vmatmul.mubr.f32.gmra.mrb[0].mxu0 %v963
  %v5158 = vpop.f32.mrb[0].mxu0
  %v5159 = vadd.f32 %v4774, %v5158
  %v5160 = vpop.f32.mrb[0].mxu0
  %5161 = vmatprep.mubr.f32.mxu0 %v2952
  %5162 = vmatmul.mubr.f32.gmra.mrb[0].mxu0 %v964
  %v5163 = vpop.f32.mrb[0].mxu0
  %v5164 = vadd.f32 %v4779, %v5163
  %v5165 = vpop.f32.mrb[0].mxu0
  %5166 = vmatprep.mubr.f32.mxu0 %v2953
  %5167 = vmatmul.mubr.f32.gmra.mrb[0].mxu0 %v965
  %v5168 = vpop.f32.mrb[0].mxu0
  %v5169 = vadd.f32 %v4784, %v5168
  %v5170 = vpop.f32.mrb[0].mxu0
  %5171 = vmatprep.mubr.f32.mxu0 %v2954
  %5172 = vmatmul.mubr.f32.gmra.mrb[0].mxu0 %v966
  %v5173 = vpop.f32.mrb[0].mxu0
  %v5174 = vadd.f32 %v4789, %v5173
  %v5175 = vpop.f32.mrb[0].mxu0
  %5176 = vmatprep.mubr.f32.mxu0 %v2955
  %5177 = vmatmul.mubr.f32.gmra.mrb[0].mxu0 %v967
  %v5178 = vpop.f32.mrb[0].mxu0
  %v5179 = vadd.f32 %v4794, %v5178
  %v5180 = vpop.f32.mrb[0].mxu0
  %5181 = vmatprep.mubr.f32.mxu0 %v2956
  %5182 = vmatmul.mubr.f32.gmra.mrb[0].mxu0 %v968
  %v5183 = vpop.f32.mrb[0].mxu0
  %v5184 = vadd.f32 %v4799, %v5183
  %v5185 = vpop.f32.mrb[0].mxu0
  %5186 = vmatprep.mubr.f32.mxu0 %v2957
  %5187 = vmatmul.mubr.f32.gmra.mrb[0].mxu0 %v969
  %v5188 = vpop.f32.mrb[0].mxu0
  %v5189 = vadd.f32 %v4804, %v5188
  %v5190 = vpop.f32.mrb[0].mxu0
  %5191 = vmatprep.mubr.f32.mxu0 %v2958
  %5192 = vmatmul.mubr.f32.gmra.mrb[0].mxu0 %v970
  %v5193 = vpop.f32.mrb[0].mxu0
  %v5194 = vadd.f32 %v4809, %v5193
  %v5195 = vpop.f32.mrb[0].mxu0
  %5196 = vmatprep.mubr.f32.mxu0 %v2959
  %5197 = vmatmul.mubr.f32.gmra.mrb[0].mxu0 %v971
  %v5198 = vpop.f32.mrb[0].mxu0
  %v5199 = vadd.f32 %v4814, %v5198
  %v5200 = vpop.f32.mrb[0].mxu0
  %5201 = vmatprep.mubr.f32.mxu0 %v2960
  %5202 = vmatmul.mubr.f32.gmra.mrb[0].mxu0 %v972
  %v5203 = vpop.f32.mrb[0].mxu0
  %v5204 = vadd.f32 %v4819, %v5203
  %v5205 = vpop.f32.mrb[0].mxu0
  %5206 = vmatprep.mubr.f32.mxu0 %v2961
  %5207 = vmatmul.mubr.f32.gmra.mrb[0].mxu0 %v973
  %v5208 = vpop.f32.mrb[0].mxu0
  %v5209 = vadd.f32 %v4824, %v5208
  %v5210 = vpop.f32.mrb[0].mxu0
  %5211 = vmatprep.mubr.f32.mxu0 %v2962
  %5212 = vmatmul.mubr.f32.gmra.mrb[0].mxu0 %v974
  %v5213 = vpop.f32.mrb[0].mxu0
  %v5214 = vadd.f32 %v4829, %v5213
  %v5215 = vpop.f32.mrb[0].mxu0
  %5216 = vmatprep.mubr.f32.mxu0 %v2963
  %5217 = vmatmul.mubr.f32.gmra.mrb[0].mxu0 %v975
  %v5218 = vpop.f32.mrb[0].mxu0
  %v5219 = vadd.f32 %v4834, %v5218
  %v5220 = vpop.f32.mrb[0].mxu0
  %5221 = vmatprep.mubr.f32.mxu0 %v2964
  %5222 = vmatmul.mubr.f32.gmra.mrb[0].mxu0 %v976
  %v5223 = vpop.f32.mrb[0].mxu0
  %v5224 = vadd.f32 %v4839, %v5223
  %v5225 = vpop.f32.mrb[0].mxu0
  %5226 = vmatprep.mubr.f32.mxu0 %v2965
  %5227 = vmatmul.mubr.f32.gmra.mrb[0].mxu0 %v977
  %v5228 = vpop.f32.mrb[0].mxu0
  %v5229 = vadd.f32 %v4844, %v5228
  %v5230 = vpop.f32.mrb[0].mxu0
  %5231 = vdwg.mxu0
  %5232 = vmatprep.subr.mxu0 0.0
  %5233 = vmatpush1.msra.mxu0 %v4022
  %5234 = vmatprep.subr.mxu0 0.0
  %5235 = vmatpush1.msra.mxu0 %v4023
  %5236 = vmatprep.subr.mxu0 0.0
  %5237 = vmatpush1.msra.mxu0 %v4024
  %5238 = vmatprep.subr.mxu0 0.0
  %5239 = vmatpush1.msra.mxu0 %v4025
  %5240 = vmatprep.subr.mxu0 0.0
  %5241 = vmatpush1.msra.mxu0 %v4026
  %5242 = vmatprep.subr.mxu0 0.0
  %5243 = vmatpush1.msra.mxu0 %v4027
  %5244 = vmatprep.subr.mxu0 0.0
  %5245 = vmatpush1.msra.mxu0 %v4028
  %5246 = vmatprep.subr.mxu0 0.0
  %5247 = vmatpush1.msra.mxu0 %v4029
  %5248 = vmatprep.subr.mxu0 0.0
  %5249 = vmatpush1.msra.mxu0 %v4030
  %5250 = vmatprep.subr.mxu0 0.0
  %5251 = vmatpush1.msra.mxu0 %v4031
  %5252 = vmatprep.subr.mxu0 0.0
  %5253 = vmatpush1.msra.mxu0 %v4032
  %5254 = vmatprep.subr.mxu0 0.0
  %5255 = vmatpush1.msra.mxu0 %v4033
  %5256 = vmatprep.subr.mxu0 0.0
  %5257 = vmatpush1.msra.mxu0 %v4034
  %5258 = vmatprep.subr.mxu0 0.0
  %5259 = vmatpush1.msra.mxu0 %v4035
  %5260 = vmatprep.subr.mxu0 0.0
  %5261 = vmatpush1.msra.mxu0 %v4036
  %5262 = vmatprep.subr.mxu0 0.0
  %5263 = vmatpush1.msra.mxu0 %v4037
  %5264 = vmatprep.subr.mxu0 0.0
  %5265 = vmatpush1.msra.mxu0 %v4038
  %5266 = vmatprep.subr.mxu0 0.0
  %5267 = vmatpush1.msra.mxu0 %v4039
  %5268 = vmatprep.subr.mxu0 0.0
  %5269 = vmatpush1.msra.mxu0 %v4040
  %5270 = vmatprep.subr.mxu0 0.0
  %5271 = vmatpush1.msra.mxu0 %v4041
  %5272 = vmatprep.subr.mxu0 0.0
  %5273 = vmatpush1.msra.mxu0 %v4042
  %5274 = vmatprep.subr.mxu0 0.0
  %5275 = vmatpush1.msra.mxu0 %v4043
  %5276 = vmatprep.subr.mxu0 0.0
  %5277 = vmatpush1.msra.mxu0 %v4044
  %5278 = vmatprep.subr.mxu0 0.0
  %5279 = vmatpush1.msra.mxu0 %v4045
  %5280 = vmatprep.subr.mxu0 0.0
  %5281 = vmatpush1.msra.mxu0 %v4046
  %5282 = vmatprep.subr.mxu0 0.0
  %5283 = vmatpush1.msra.mxu0 %v4047
  %5284 = vmatprep.subr.mxu0 0.0
  %5285 = vmatpush1.msra.mxu0 %v4048
  %5286 = vmatprep.subr.mxu0 0.0
  %5287 = vmatpush1.msra.mxu0 %v4049
  %5288 = vmatprep.subr.mxu0 0.0
  %5289 = vmatpush1.msra.mxu0 %v4050
  %5290 = vmatprep.subr.mxu0 0.0
  %5291 = vmatpush1.msra.mxu0 %v4051
  %5292 = vmatprep.subr.mxu0 0.0
  %5293 = vmatpush1.msra.mxu0 %v4052
  %5294 = vmatprep.subr.mxu0 0.0
  %5295 = vmatpush1.msra.mxu0 %v4053
  %5296 = vmatprep.mubr.f32.mxu0 %v3542
  %5297 = vmatmul.mubr.f32.gmra.mrb[0].mxu0 %v3222
  %v5298 = vpop.f32.mrb[0].mxu0
  %v5299 = vadd.f32 %v4914, %v5298
  %v5300 = vpop.f32.mrb[0].mxu0
  %5301 = vmatprep.mubr.f32.mxu0 %v3543
  %5302 = vmatmul.mubr.f32.gmra.mrb[0].mxu0 %v3223
  %v5303 = vpop.f32.mrb[0].mxu0
  %v5304 = vadd.f32 %v4919, %v5303
  %v5305 = vpop.f32.mrb[0].mxu0
  %5306 = vmatprep.mubr.f32.mxu0 %v3544
  %5307 = vmatmul.mubr.f32.gmra.mrb[0].mxu0 %v3224
  %v5308 = vpop.f32.mrb[0].mxu0
  %v5309 = vadd.f32 %v4924, %v5308
  %v5310 = vpop.f32.mrb[0].mxu0
  %5311 = vmatprep.mubr.f32.mxu0 %v3545
  %5312 = vmatmul.mubr.f32.gmra.mrb[0].mxu0 %v3225
  %v5313 = vpop.f32.mrb[0].mxu0
  %v5314 = vadd.f32 %v4929, %v5313
  %v5315 = vpop.f32.mrb[0].mxu0
  %5316 = vmatprep.mubr.f32.mxu0 %v3546
  %5317 = vmatmul.mubr.f32.gmra.mrb[0].mxu0 %v3226
  %v5318 = vpop.f32.mrb[0].mxu0
  %v5319 = vadd.f32 %v4934, %v5318
  %v5320 = vpop.f32.mrb[0].mxu0
  %5321 = vmatprep.mubr.f32.mxu0 %v3547
  %5322 = vmatmul.mubr.f32.gmra.mrb[0].mxu0 %v3227
  %v5323 = vpop.f32.mrb[0].mxu0
  %v5324 = vadd.f32 %v4939, %v5323
  %v5325 = vpop.f32.mrb[0].mxu0
  %5326 = vmatprep.mubr.f32.mxu0 %v3548
  %5327 = vmatmul.mubr.f32.gmra.mrb[0].mxu0 %v3228
  %v5328 = vpop.f32.mrb[0].mxu0
  %v5329 = vadd.f32 %v4944, %v5328
  %v5330 = vpop.f32.mrb[0].mxu0
  %5331 = vmatprep.mubr.f32.mxu0 %v3549
  %5332 = vmatmul.mubr.f32.gmra.mrb[0].mxu0 %v3229
  %v5333 = vpop.f32.mrb[0].mxu0
  %v5334 = vadd.f32 %v4949, %v5333
  %v5335 = vpop.f32.mrb[0].mxu0
  %5336 = vmatprep.mubr.f32.mxu0 %v3550
  %5337 = vmatmul.mubr.f32.gmra.mrb[0].mxu0 %v3230
  %v5338 = vpop.f32.mrb[0].mxu0
  %v5339 = vadd.f32 %v4954, %v5338
  %v5340 = vpop.f32.mrb[0].mxu0
  %5341 = vmatprep.mubr.f32.mxu0 %v3551
  %5342 = vmatmul.mubr.f32.gmra.mrb[0].mxu0 %v3231
  %v5343 = vpop.f32.mrb[0].mxu0
  %v5344 = vadd.f32 %v4959, %v5343
  %v5345 = vpop.f32.mrb[0].mxu0
  %5346 = vmatprep.mubr.f32.mxu0 %v3552
  %5347 = vmatmul.mubr.f32.gmra.mrb[0].mxu0 %v3232
  %v5348 = vpop.f32.mrb[0].mxu0
  %v5349 = vadd.f32 %v4964, %v5348
  %v5350 = vpop.f32.mrb[0].mxu0
  %5351 = vmatprep.mubr.f32.mxu0 %v3553
  %5352 = vmatmul.mubr.f32.gmra.mrb[0].mxu0 %v3233
  %v5353 = vpop.f32.mrb[0].mxu0
  %v5354 = vadd.f32 %v4969, %v5353
  %v5355 = vpop.f32.mrb[0].mxu0
  %5356 = vmatprep.mubr.f32.mxu0 %v3554
  %5357 = vmatmul.mubr.f32.gmra.mrb[0].mxu0 %v3234
  %v5358 = vpop.f32.mrb[0].mxu0
  %v5359 = vadd.f32 %v4974, %v5358
  %v5360 = vpop.f32.mrb[0].mxu0
  %5361 = vmatprep.mubr.f32.mxu0 %v3555
  %5362 = vmatmul.mubr.f32.gmra.mrb[0].mxu0 %v3235
  %v5363 = vpop.f32.mrb[0].mxu0
  %v5364 = vadd.f32 %v4979, %v5363
  %v5365 = vpop.f32.mrb[0].mxu0
  %5366 = vmatprep.mubr.f32.mxu0 %v3556
  %5367 = vmatmul.mubr.f32.gmra.mrb[0].mxu0 %v3236
  %v5368 = vpop.f32.mrb[0].mxu0
  %v5369 = vadd.f32 %v4984, %v5368
  %v5370 = vpop.f32.mrb[0].mxu0
  %5371 = vmatprep.mubr.f32.mxu0 %v3557
  %5372 = vmatmul.mubr.f32.gmra.mrb[0].mxu0 %v3237
  %v5373 = vpop.f32.mrb[0].mxu0
  %v5374 = vadd.f32 %v4989, %v5373
  %v5375 = vpop.f32.mrb[0].mxu0
  %5376 = vmatprep.mubr.f32.mxu0 %v3558
  %5377 = vmatmul.mubr.f32.gmra.mrb[0].mxu0 %v3238
  %v5378 = vpop.f32.mrb[0].mxu0
  %v5379 = vadd.f32 %v4994, %v5378
  %v5380 = vpop.f32.mrb[0].mxu0
  %5381 = vmatprep.mubr.f32.mxu0 %v3559
  %5382 = vmatmul.mubr.f32.gmra.mrb[0].mxu0 %v3239
  %v5383 = vpop.f32.mrb[0].mxu0
  %v5384 = vadd.f32 %v4999, %v5383
  %v5385 = vpop.f32.mrb[0].mxu0
  %5386 = vmatprep.mubr.f32.mxu0 %v3560
  %5387 = vmatmul.mubr.f32.gmra.mrb[0].mxu0 %v3240
  %v5388 = vpop.f32.mrb[0].mxu0
  %v5389 = vadd.f32 %v5004, %v5388
  %v5390 = vpop.f32.mrb[0].mxu0
  %5391 = vmatprep.mubr.f32.mxu0 %v3561
  %5392 = vmatmul.mubr.f32.gmra.mrb[0].mxu0 %v3241
  %v5393 = vpop.f32.mrb[0].mxu0
  %v5394 = vadd.f32 %v5009, %v5393
  %v5395 = vpop.f32.mrb[0].mxu0
  %5396 = vmatprep.mubr.f32.mxu0 %v3562
  %5397 = vmatmul.mubr.f32.gmra.mrb[0].mxu0 %v3242
  %v5398 = vpop.f32.mrb[0].mxu0
  %v5399 = vadd.f32 %v5014, %v5398
  %v5400 = vpop.f32.mrb[0].mxu0
  %5401 = vmatprep.mubr.f32.mxu0 %v3563
  %5402 = vmatmul.mubr.f32.gmra.mrb[0].mxu0 %v3243
  %v5403 = vpop.f32.mrb[0].mxu0
  %v5404 = vadd.f32 %v5019, %v5403
  %v5405 = vpop.f32.mrb[0].mxu0
  %5406 = vmatprep.mubr.f32.mxu0 %v3564
  %5407 = vmatmul.mubr.f32.gmra.mrb[0].mxu0 %v3244
  %v5408 = vpop.f32.mrb[0].mxu0
  %v5409 = vadd.f32 %v5024, %v5408
  %v5410 = vpop.f32.mrb[0].mxu0
  %5411 = vmatprep.mubr.f32.mxu0 %v3565
  %5412 = vmatmul.mubr.f32.gmra.mrb[0].mxu0 %v3245
  %v5413 = vpop.f32.mrb[0].mxu0
  %v5414 = vadd.f32 %v5029, %v5413
  %v5415 = vpop.f32.mrb[0].mxu0
  %5416 = vmatprep.mubr.f32.mxu0 %v3566
  %5417 = vmatmul.mubr.f32.gmra.mrb[0].mxu0 %v3246
  %v5418 = vpop.f32.mrb[0].mxu0
  %v5419 = vadd.f32 %v5034, %v5418
  %v5420 = vpop.f32.mrb[0].mxu0
  %5421 = vmatprep.mubr.f32.mxu0 %v3567
  %5422 = vmatmul.mubr.f32.gmra.mrb[0].mxu0 %v3247
  %v5423 = vpop.f32.mrb[0].mxu0
  %v5424 = vadd.f32 %v5039, %v5423
  %v5425 = vpop.f32.mrb[0].mxu0
  %5426 = vmatprep.mubr.f32.mxu0 %v3568
  %5427 = vmatmul.mubr.f32.gmra.mrb[0].mxu0 %v3248
  %v5428 = vpop.f32.mrb[0].mxu0
  %v5429 = vadd.f32 %v5044, %v5428
  %v5430 = vpop.f32.mrb[0].mxu0
  %5431 = vmatprep.mubr.f32.mxu0 %v3569
  %5432 = vmatmul.mubr.f32.gmra.mrb[0].mxu0 %v3249
  %v5433 = vpop.f32.mrb[0].mxu0
  %v5434 = vadd.f32 %v5049, %v5433
  %v5435 = vpop.f32.mrb[0].mxu0
  %5436 = vmatprep.mubr.f32.mxu0 %v3570
  %5437 = vmatmul.mubr.f32.gmra.mrb[0].mxu0 %v3250
  %v5438 = vpop.f32.mrb[0].mxu0
  %v5439 = vadd.f32 %v5054, %v5438
  %v5440 = vpop.f32.mrb[0].mxu0
  %5441 = vmatprep.mubr.f32.mxu0 %v3571
  %5442 = vmatmul.mubr.f32.gmra.mrb[0].mxu0 %v3251
  %v5443 = vpop.f32.mrb[0].mxu0
  %v5444 = vadd.f32 %v5059, %v5443
  %v5445 = vpop.f32.mrb[0].mxu0
  %5446 = vmatprep.mubr.f32.mxu0 %v3572
  %5447 = vmatmul.mubr.f32.gmra.mrb[0].mxu0 %v3252
  %v5448 = vpop.f32.mrb[0].mxu0
  %v5449 = vadd.f32 %v5064, %v5448
  %v5450 = vpop.f32.mrb[0].mxu0
  %5451 = vmatprep.mubr.f32.mxu0 %v3573
  %5452 = vmatmul.mubr.f32.gmra.mrb[0].mxu0 %v3253
  %v5453 = vpop.f32.mrb[0].mxu0
  %v5454 = vadd.f32 %v5069, %v5453
  %v5455 = vpop.f32.mrb[0].mxu0
  %5456 = vmatprep.mubr.f32.mxu0 %v3574
  %5457 = vmatmul.mubr.f32.gmra.mrb[0].mxu0 %v3254
  %v5458 = vpop.f32.mrb[0].mxu0
  %v5459 = vadd.f32 %v5074, %v5458
  %v5460 = vpop.f32.mrb[0].mxu0
  %5461 = vmatprep.mubr.f32.mxu0 %v3575
  %5462 = vmatmul.mubr.f32.gmra.mrb[0].mxu0 %v3255
  %v5463 = vpop.f32.mrb[0].mxu0
  %v5464 = vadd.f32 %v5079, %v5463
  %v5465 = vpop.f32.mrb[0].mxu0
  %5466 = vmatprep.mubr.f32.mxu0 %v3576
  %5467 = vmatmul.mubr.f32.gmra.mrb[0].mxu0 %v3256
  %v5468 = vpop.f32.mrb[0].mxu0
  %v5469 = vadd.f32 %v5084, %v5468
  %v5470 = vpop.f32.mrb[0].mxu0
  %5471 = vmatprep.mubr.f32.mxu0 %v3577
  %5472 = vmatmul.mubr.f32.gmra.mrb[0].mxu0 %v3257
  %v5473 = vpop.f32.mrb[0].mxu0
  %v5474 = vadd.f32 %v5089, %v5473
  %v5475 = vpop.f32.mrb[0].mxu0
  %5476 = vmatprep.mubr.f32.mxu0 %v3578
  %5477 = vmatmul.mubr.f32.gmra.mrb[0].mxu0 %v3258
  %v5478 = vpop.f32.mrb[0].mxu0
  %v5479 = vadd.f32 %v5094, %v5478
  %v5480 = vpop.f32.mrb[0].mxu0
  %5481 = vmatprep.mubr.f32.mxu0 %v3579
  %5482 = vmatmul.mubr.f32.gmra.mrb[0].mxu0 %v3259
  %v5483 = vpop.f32.mrb[0].mxu0
  %v5484 = vadd.f32 %v5099, %v5483
  %v5485 = vpop.f32.mrb[0].mxu0
  %5486 = vmatprep.mubr.f32.mxu0 %v3580
  %5487 = vmatmul.mubr.f32.gmra.mrb[0].mxu0 %v3260
  %v5488 = vpop.f32.mrb[0].mxu0
  %v5489 = vadd.f32 %v5104, %v5488
  %v5490 = vpop.f32.mrb[0].mxu0
  %5491 = vmatprep.mubr.f32.mxu0 %v3581
  %5492 = vmatmul.mubr.f32.gmra.mrb[0].mxu0 %v3261
  %v5493 = vpop.f32.mrb[0].mxu0
  %v5494 = vadd.f32 %v5109, %v5493
  %v5495 = vpop.f32.mrb[0].mxu0
  %5496 = vmatprep.mubr.f32.mxu0 %v3582
  %5497 = vmatmul.mubr.f32.gmra.mrb[0].mxu0 %v3262
  %v5498 = vpop.f32.mrb[0].mxu0
  %v5499 = vadd.f32 %v5114, %v5498
  %v5500 = vpop.f32.mrb[0].mxu0
  %5501 = vmatprep.mubr.f32.mxu0 %v3583
  %5502 = vmatmul.mubr.f32.gmra.mrb[0].mxu0 %v3263
  %v5503 = vpop.f32.mrb[0].mxu0
  %v5504 = vadd.f32 %v5119, %v5503
  %v5505 = vpop.f32.mrb[0].mxu0
  %5506 = vmatprep.mubr.f32.mxu0 %v3584
  %5507 = vmatmul.mubr.f32.gmra.mrb[0].mxu0 %v3264
  %v5508 = vpop.f32.mrb[0].mxu0
  %v5509 = vadd.f32 %v5124, %v5508
  %v5510 = vpop.f32.mrb[0].mxu0
  %5511 = vmatprep.mubr.f32.mxu0 %v3585
  %5512 = vmatmul.mubr.f32.gmra.mrb[0].mxu0 %v3265
  %v5513 = vpop.f32.mrb[0].mxu0
  %v5514 = vadd.f32 %v5129, %v5513
  %v5515 = vpop.f32.mrb[0].mxu0
  %5516 = vmatprep.mubr.f32.mxu0 %v3586
  %5517 = vmatmul.mubr.f32.gmra.mrb[0].mxu0 %v3266
  %v5518 = vpop.f32.mrb[0].mxu0
  %v5519 = vadd.f32 %v5134, %v5518
  %v5520 = vpop.f32.mrb[0].mxu0
  %5521 = vmatprep.mubr.f32.mxu0 %v3587
  %5522 = vmatmul.mubr.f32.gmra.mrb[0].mxu0 %v3267
  %v5523 = vpop.f32.mrb[0].mxu0
  %v5524 = vadd.f32 %v5139, %v5523
  %v5525 = vpop.f32.mrb[0].mxu0
  %5526 = vmatprep.mubr.f32.mxu0 %v3588
  %5527 = vmatmul.mubr.f32.gmra.mrb[0].mxu0 %v3268
  %v5528 = vpop.f32.mrb[0].mxu0
  %v5529 = vadd.f32 %v5144, %v5528
  %v5530 = vpop.f32.mrb[0].mxu0
  %5531 = vmatprep.mubr.f32.mxu0 %v3589
  %5532 = vmatmul.mubr.f32.gmra.mrb[0].mxu0 %v3269
  %v5533 = vpop.f32.mrb[0].mxu0
  %v5534 = vadd.f32 %v5149, %v5533
  %v5535 = vpop.f32.mrb[0].mxu0
  %5536 = vmatprep.mubr.f32.mxu0 %v3590
  %5537 = vmatmul.mubr.f32.gmra.mrb[0].mxu0 %v3270
  %v5538 = vpop.f32.mrb[0].mxu0
  %v5539 = vadd.f32 %v5154, %v5538
  %v5540 = vpop.f32.mrb[0].mxu0
  %5541 = vmatprep.mubr.f32.mxu0 %v3591
  %5542 = vmatmul.mubr.f32.gmra.mrb[0].mxu0 %v3271
  %v5543 = vpop.f32.mrb[0].mxu0
  %v5544 = vadd.f32 %v5159, %v5543
  %v5545 = vpop.f32.mrb[0].mxu0
  %5546 = vmatprep.mubr.f32.mxu0 %v3592
  %5547 = vmatmul.mubr.f32.gmra.mrb[0].mxu0 %v3272
  %v5548 = vpop.f32.mrb[0].mxu0
  %v5549 = vadd.f32 %v5164, %v5548
  %v5550 = vpop.f32.mrb[0].mxu0
  %5551 = vmatprep.mubr.f32.mxu0 %v3593
  %5552 = vmatmul.mubr.f32.gmra.mrb[0].mxu0 %v3273
  %v5553 = vpop.f32.mrb[0].mxu0
  %v5554 = vadd.f32 %v5169, %v5553
  %v5555 = vpop.f32.mrb[0].mxu0
  %5556 = vmatprep.mubr.f32.mxu0 %v3594
  %5557 = vmatmul.mubr.f32.gmra.mrb[0].mxu0 %v3274
  %v5558 = vpop.f32.mrb[0].mxu0
  %v5559 = vadd.f32 %v5174, %v5558
  %v5560 = vpop.f32.mrb[0].mxu0
  %5561 = vmatprep.mubr.f32.mxu0 %v3595
  %5562 = vmatmul.mubr.f32.gmra.mrb[0].mxu0 %v3275
  %v5563 = vpop.f32.mrb[0].mxu0
  %v5564 = vadd.f32 %v5179, %v5563
  %v5565 = vpop.f32.mrb[0].mxu0
  %5566 = vmatprep.mubr.f32.mxu0 %v3596
  %5567 = vmatmul.mubr.f32.gmra.mrb[0].mxu0 %v3276
  %v5568 = vpop.f32.mrb[0].mxu0
  %v5569 = vadd.f32 %v5184, %v5568
  %v5570 = vpop.f32.mrb[0].mxu0
  %5571 = vmatprep.mubr.f32.mxu0 %v3597
  %5572 = vmatmul.mubr.f32.gmra.mrb[0].mxu0 %v3277
  %v5573 = vpop.f32.mrb[0].mxu0
  %v5574 = vadd.f32 %v5189, %v5573
  %v5575 = vpop.f32.mrb[0].mxu0
  %5576 = vmatprep.mubr.f32.mxu0 %v3598
  %5577 = vmatmul.mubr.f32.gmra.mrb[0].mxu0 %v3278
  %v5578 = vpop.f32.mrb[0].mxu0
  %v5579 = vadd.f32 %v5194, %v5578
  %v5580 = vpop.f32.mrb[0].mxu0
  %5581 = vmatprep.mubr.f32.mxu0 %v3599
  %5582 = vmatmul.mubr.f32.gmra.mrb[0].mxu0 %v3279
  %v5583 = vpop.f32.mrb[0].mxu0
  %v5584 = vadd.f32 %v5199, %v5583
  %v5585 = vpop.f32.mrb[0].mxu0
  %5586 = vmatprep.mubr.f32.mxu0 %v3600
  %5587 = vmatmul.mubr.f32.gmra.mrb[0].mxu0 %v3280
  %v5588 = vpop.f32.mrb[0].mxu0
  %v5589 = vadd.f32 %v5204, %v5588
  %v5590 = vpop.f32.mrb[0].mxu0
  %5591 = vmatprep.mubr.f32.mxu0 %v3601
  %5592 = vmatmul.mubr.f32.gmra.mrb[0].mxu0 %v3281
  %v5593 = vpop.f32.mrb[0].mxu0
  %v5594 = vadd.f32 %v5209, %v5593
  %v5595 = vpop.f32.mrb[0].mxu0
  %5596 = vmatprep.mubr.f32.mxu0 %v3602
  %5597 = vmatmul.mubr.f32.gmra.mrb[0].mxu0 %v3282
  %v5598 = vpop.f32.mrb[0].mxu0
  %v5599 = vadd.f32 %v5214, %v5598
  %v5600 = vpop.f32.mrb[0].mxu0
  %5601 = vmatprep.mubr.f32.mxu0 %v3603
  %5602 = vmatmul.mubr.f32.gmra.mrb[0].mxu0 %v3283
  %v5603 = vpop.f32.mrb[0].mxu0
  %v5604 = vadd.f32 %v5219, %v5603
  %v5605 = vpop.f32.mrb[0].mxu0
  %5606 = vmatprep.mubr.f32.mxu0 %v3604
  %5607 = vmatmul.mubr.f32.gmra.mrb[0].mxu0 %v3284
  %v5608 = vpop.f32.mrb[0].mxu0
  %v5609 = vadd.f32 %v5224, %v5608
  %v5610 = vpop.f32.mrb[0].mxu0
  %5611 = vmatprep.mubr.f32.mxu0 %v3605
  %5612 = vmatmul.mubr.f32.gmra.mrb[0].mxu0 %v3285
  %v5613 = vpop.f32.mrb[0].mxu0
  %v5614 = vadd.f32 %v5229, %v5613
  %v5615 = vpop.f32.mrb[0].mxu0
  %5616 = vdwg.mxu0
  %5617 = vmatprep.subr.mxu0 0.0
  %5618 = vmatpush1.msra.mxu0 %v4054
  %5619 = vmatprep.subr.mxu0 0.0
  %5620 = vmatpush1.msra.mxu0 %v4055
  %5621 = vmatprep.subr.mxu0 0.0
  %5622 = vmatpush1.msra.mxu0 %v4056
  %5623 = vmatprep.subr.mxu0 0.0
  %5624 = vmatpush1.msra.mxu0 %v4057
  %5625 = vmatprep.subr.mxu0 0.0
  %5626 = vmatpush1.msra.mxu0 %v4058
  %5627 = vmatprep.subr.mxu0 0.0
  %5628 = vmatpush1.msra.mxu0 %v4059
  %5629 = vmatprep.subr.mxu0 0.0
  %5630 = vmatpush1.msra.mxu0 %v4060
  %5631 = vmatprep.subr.mxu0 0.0
  %5632 = vmatpush1.msra.mxu0 %v4061
  %5633 = vmatprep.subr.mxu0 0.0
  %5634 = vmatpush1.msra.mxu0 %v4062
  %5635 = vmatprep.subr.mxu0 0.0
  %5636 = vmatpush1.msra.mxu0 %v4063
  %5637 = vmatprep.subr.mxu0 0.0
  %5638 = vmatpush1.msra.mxu0 %v4064
  %5639 = vmatprep.subr.mxu0 0.0
  %5640 = vmatpush1.msra.mxu0 %v4065
  %5641 = vmatprep.subr.mxu0 0.0
  %5642 = vmatpush1.msra.mxu0 %v4066
  %5643 = vmatprep.subr.mxu0 0.0
  %5644 = vmatpush1.msra.mxu0 %v4067
  %5645 = vmatprep.subr.mxu0 0.0
  %5646 = vmatpush1.msra.mxu0 %v4068
  %5647 = vmatprep.subr.mxu0 0.0
  %5648 = vmatpush1.msra.mxu0 %v4069
  %5649 = vmatprep.subr.mxu0 0.0
  %5650 = vmatpush1.msra.mxu0 0.0
  %5651 = vmatprep.subr.mxu0 0.0
  %5652 = vmatpush1.msra.mxu0 0.0
  %5653 = vmatprep.subr.mxu0 0.0
  %5654 = vmatpush1.msra.mxu0 0.0
  %5655 = vmatprep.subr.mxu0 0.0
  %5656 = vmatpush1.msra.mxu0 0.0
  %5657 = vmatprep.subr.mxu0 0.0
  %5658 = vmatpush1.msra.mxu0 0.0
  %5659 = vmatprep.subr.mxu0 0.0
  %5660 = vmatpush1.msra.mxu0 0.0
  %5661 = vmatprep.subr.mxu0 0.0
  %5662 = vmatpush1.msra.mxu0 0.0
  %5663 = vmatprep.subr.mxu0 0.0
  %5664 = vmatpush1.msra.mxu0 0.0
  %5665 = vmatprep.subr.mxu0 0.0
  %5666 = vmatpush1.msra.mxu0 0.0
  %5667 = vmatprep.subr.mxu0 0.0
  %5668 = vmatpush1.msra.mxu0 0.0
  %5669 = vmatprep.subr.mxu0 0.0
  %5670 = vmatpush1.msra.mxu0 0.0
  %5671 = vmatprep.subr.mxu0 0.0
  %5672 = vmatpush1.msra.mxu0 0.0
  %5673 = vmatprep.subr.mxu0 0.0
  %5674 = vmatpush1.msra.mxu0 0.0
  %5675 = vmatprep.subr.mxu0 0.0
  %5676 = vmatpush1.msra.mxu0 0.0
  %5677 = vmatprep.subr.mxu0 0.0
  %5678 = vmatpush1.msra.mxu0 0.0
  %5679 = vmatprep.subr.mxu0 0.0
  %5680 = vmatpush1.msra.mxu0 0.0
  %5681 = vmatprep.mubr.f32.mxu0 0.0
  %5682 = vmatmul.mubr.f32.gmra.mrb[0].mxu0 %v3862
  %v5683 = vpop.f32.mrb[0].mxu0
  %v5684 = vadd.f32 %v5299, %v5683
  %v5685 = vpop.f32.mrb[0].mxu0
  %5686 = vmatprep.mubr.f32.mxu0 0.0
  %5687 = vmatmul.mubr.f32.gmra.mrb[0].mxu0 %v3863
  %v5688 = vpop.f32.mrb[0].mxu0
  %v5689 = vadd.f32 %v5304, %v5688
  %v5690 = vpop.f32.mrb[0].mxu0
  %5691 = vmatprep.mubr.f32.mxu0 0.0
  %5692 = vmatmul.mubr.f32.gmra.mrb[0].mxu0 %v3864
  %v5693 = vpop.f32.mrb[0].mxu0
  %v5694 = vadd.f32 %v5309, %v5693
  %v5695 = vpop.f32.mrb[0].mxu0
  %5696 = vmatprep.mubr.f32.mxu0 0.0
  %5697 = vmatmul.mubr.f32.gmra.mrb[0].mxu0 %v3865
  %v5698 = vpop.f32.mrb[0].mxu0
  %v5699 = vadd.f32 %v5314, %v5698
  %v5700 = vpop.f32.mrb[0].mxu0
  %5701 = vmatprep.mubr.f32.mxu0 0.0
  %5702 = vmatmul.mubr.f32.gmra.mrb[0].mxu0 %v3866
  %v5703 = vpop.f32.mrb[0].mxu0
  %v5704 = vadd.f32 %v5319, %v5703
  %v5705 = vpop.f32.mrb[0].mxu0
  %5706 = vmatprep.mubr.f32.mxu0 0.0
  %5707 = vmatmul.mubr.f32.gmra.mrb[0].mxu0 %v3867
  %v5708 = vpop.f32.mrb[0].mxu0
  %v5709 = vadd.f32 %v5324, %v5708
  %v5710 = vpop.f32.mrb[0].mxu0
  %5711 = vmatprep.mubr.f32.mxu0 0.0
  %5712 = vmatmul.mubr.f32.gmra.mrb[0].mxu0 %v3868
  %v5713 = vpop.f32.mrb[0].mxu0
  %v5714 = vadd.f32 %v5329, %v5713
  %v5715 = vpop.f32.mrb[0].mxu0
  %5716 = vmatprep.mubr.f32.mxu0 0.0
  %5717 = vmatmul.mubr.f32.gmra.mrb[0].mxu0 %v3869
  %v5718 = vpop.f32.mrb[0].mxu0
  %v5719 = vadd.f32 %v5334, %v5718
  %v5720 = vpop.f32.mrb[0].mxu0
  %5721 = vmatprep.mubr.f32.mxu0 0.0
  %5722 = vmatmul.mubr.f32.gmra.mrb[0].mxu0 %v3870
  %v5723 = vpop.f32.mrb[0].mxu0
  %v5724 = vadd.f32 %v5339, %v5723
  %v5725 = vpop.f32.mrb[0].mxu0
  %5726 = vmatprep.mubr.f32.mxu0 0.0
  %5727 = vmatmul.mubr.f32.gmra.mrb[0].mxu0 %v3871
  %v5728 = vpop.f32.mrb[0].mxu0
  %v5729 = vadd.f32 %v5344, %v5728
  %v5730 = vpop.f32.mrb[0].mxu0
  %5731 = vmatprep.mubr.f32.mxu0 0.0
  %5732 = vmatmul.mubr.f32.gmra.mrb[0].mxu0 %v3872
  %v5733 = vpop.f32.mrb[0].mxu0
  %v5734 = vadd.f32 %v5349, %v5733
  %v5735 = vpop.f32.mrb[0].mxu0
  %5736 = vmatprep.mubr.f32.mxu0 0.0
  %5737 = vmatmul.mubr.f32.gmra.mrb[0].mxu0 %v3873
  %v5738 = vpop.f32.mrb[0].mxu0
  %v5739 = vadd.f32 %v5354, %v5738
  %v5740 = vpop.f32.mrb[0].mxu0
  %5741 = vmatprep.mubr.f32.mxu0 0.0
  %5742 = vmatmul.mubr.f32.gmra.mrb[0].mxu0 %v3874
  %v5743 = vpop.f32.mrb[0].mxu0
  %v5744 = vadd.f32 %v5359, %v5743
  %v5745 = vpop.f32.mrb[0].mxu0
  %5746 = vmatprep.mubr.f32.mxu0 0.0
  %5747 = vmatmul.mubr.f32.gmra.mrb[0].mxu0 %v3875
  %v5748 = vpop.f32.mrb[0].mxu0
  %v5749 = vadd.f32 %v5364, %v5748
  %v5750 = vpop.f32.mrb[0].mxu0
  %5751 = vmatprep.mubr.f32.mxu0 0.0
  %5752 = vmatmul.mubr.f32.gmra.mrb[0].mxu0 %v3876
  %v5753 = vpop.f32.mrb[0].mxu0
  %v5754 = vadd.f32 %v5369, %v5753
  %v5755 = vpop.f32.mrb[0].mxu0
  %5756 = vmatprep.mubr.f32.mxu0 0.0
  %5757 = vmatmul.mubr.f32.gmra.mrb[0].mxu0 %v3877
  %v5758 = vpop.f32.mrb[0].mxu0
  %v5759 = vadd.f32 %v5374, %v5758
  %v5760 = vpop.f32.mrb[0].mxu0
  %5761 = vmatprep.mubr.f32.mxu0 0.0
  %5762 = vmatmul.mubr.f32.gmra.mrb[0].mxu0 %v3878
  %v5763 = vpop.f32.mrb[0].mxu0
  %v5764 = vadd.f32 %v5379, %v5763
  %v5765 = vpop.f32.mrb[0].mxu0
  %5766 = vmatprep.mubr.f32.mxu0 0.0
  %5767 = vmatmul.mubr.f32.gmra.mrb[0].mxu0 %v3879
  %v5768 = vpop.f32.mrb[0].mxu0
  %v5769 = vadd.f32 %v5384, %v5768
  %v5770 = vpop.f32.mrb[0].mxu0
  %5771 = vmatprep.mubr.f32.mxu0 0.0
  %5772 = vmatmul.mubr.f32.gmra.mrb[0].mxu0 %v3880
  %v5773 = vpop.f32.mrb[0].mxu0
  %v5774 = vadd.f32 %v5389, %v5773
  %v5775 = vpop.f32.mrb[0].mxu0
  %5776 = vmatprep.mubr.f32.mxu0 0.0
  %5777 = vmatmul.mubr.f32.gmra.mrb[0].mxu0 %v3881
  %v5778 = vpop.f32.mrb[0].mxu0
  %v5779 = vadd.f32 %v5394, %v5778
  %v5780 = vpop.f32.mrb[0].mxu0
  %5781 = vmatprep.mubr.f32.mxu0 0.0
  %5782 = vmatmul.mubr.f32.gmra.mrb[0].mxu0 %v3882
  %v5783 = vpop.f32.mrb[0].mxu0
  %v5784 = vadd.f32 %v5399, %v5783
  %v5785 = vpop.f32.mrb[0].mxu0
  %5786 = vmatprep.mubr.f32.mxu0 0.0
  %5787 = vmatmul.mubr.f32.gmra.mrb[0].mxu0 %v3883
  %v5788 = vpop.f32.mrb[0].mxu0
  %v5789 = vadd.f32 %v5404, %v5788
  %v5790 = vpop.f32.mrb[0].mxu0
  %5791 = vmatprep.mubr.f32.mxu0 0.0
  %5792 = vmatmul.mubr.f32.gmra.mrb[0].mxu0 %v3884
  %v5793 = vpop.f32.mrb[0].mxu0
  %v5794 = vadd.f32 %v5409, %v5793
  %v5795 = vpop.f32.mrb[0].mxu0
  %5796 = vmatprep.mubr.f32.mxu0 0.0
  %5797 = vmatmul.mubr.f32.gmra.mrb[0].mxu0 %v3885
  %v5798 = vpop.f32.mrb[0].mxu0
  %v5799 = vadd.f32 %v5414, %v5798
  %v5800 = vpop.f32.mrb[0].mxu0
  %5801 = vmatprep.mubr.f32.mxu0 0.0
  %5802 = vmatmul.mubr.f32.gmra.mrb[0].mxu0 %v3886
  %v5803 = vpop.f32.mrb[0].mxu0
  %v5804 = vadd.f32 %v5419, %v5803
  %v5805 = vpop.f32.mrb[0].mxu0
  %5806 = vmatprep.mubr.f32.mxu0 0.0
  %5807 = vmatmul.mubr.f32.gmra.mrb[0].mxu0 %v3887
  %v5808 = vpop.f32.mrb[0].mxu0
  %v5809 = vadd.f32 %v5424, %v5808
  %v5810 = vpop.f32.mrb[0].mxu0
  %5811 = vmatprep.mubr.f32.mxu0 0.0
  %5812 = vmatmul.mubr.f32.gmra.mrb[0].mxu0 %v3888
  %v5813 = vpop.f32.mrb[0].mxu0
  %v5814 = vadd.f32 %v5429, %v5813
  %v5815 = vpop.f32.mrb[0].mxu0
  %5816 = vmatprep.mubr.f32.mxu0 0.0
  %5817 = vmatmul.mubr.f32.gmra.mrb[0].mxu0 %v3889
  %v5818 = vpop.f32.mrb[0].mxu0
  %v5819 = vadd.f32 %v5434, %v5818
  %v5820 = vpop.f32.mrb[0].mxu0
  %5821 = vmatprep.mubr.f32.mxu0 0.0
  %5822 = vmatmul.mubr.f32.gmra.mrb[0].mxu0 %v3890
  %v5823 = vpop.f32.mrb[0].mxu0
  %v5824 = vadd.f32 %v5439, %v5823
  %v5825 = vpop.f32.mrb[0].mxu0
  %5826 = vmatprep.mubr.f32.mxu0 0.0
  %5827 = vmatmul.mubr.f32.gmra.mrb[0].mxu0 %v3891
  %v5828 = vpop.f32.mrb[0].mxu0
  %v5829 = vadd.f32 %v5444, %v5828
  %v5830 = vpop.f32.mrb[0].mxu0
  %5831 = vmatprep.mubr.f32.mxu0 0.0
  %5832 = vmatmul.mubr.f32.gmra.mrb[0].mxu0 %v3892
  %v5833 = vpop.f32.mrb[0].mxu0
  %v5834 = vadd.f32 %v5449, %v5833
  %v5835 = vpop.f32.mrb[0].mxu0
  %5836 = vmatprep.mubr.f32.mxu0 0.0
  %5837 = vmatmul.mubr.f32.gmra.mrb[0].mxu0 %v3893
  %v5838 = vpop.f32.mrb[0].mxu0
  %v5839 = vadd.f32 %v5454, %v5838
  %v5840 = vpop.f32.mrb[0].mxu0
  %5841 = vmatprep.mubr.f32.mxu0 0.0
  %5842 = vmatmul.mubr.f32.gmra.mrb[0].mxu0 %v3894
  %v5843 = vpop.f32.mrb[0].mxu0
  %v5844 = vadd.f32 %v5459, %v5843
  %v5845 = vpop.f32.mrb[0].mxu0
  %5846 = vmatprep.mubr.f32.mxu0 0.0
  %5847 = vmatmul.mubr.f32.gmra.mrb[0].mxu0 %v3895
  %v5848 = vpop.f32.mrb[0].mxu0
  %v5849 = vadd.f32 %v5464, %v5848
  %v5850 = vpop.f32.mrb[0].mxu0
  %5851 = vmatprep.mubr.f32.mxu0 0.0
  %5852 = vmatmul.mubr.f32.gmra.mrb[0].mxu0 %v3896
  %v5853 = vpop.f32.mrb[0].mxu0
  %v5854 = vadd.f32 %v5469, %v5853
  %v5855 = vpop.f32.mrb[0].mxu0
  %5856 = vmatprep.mubr.f32.mxu0 0.0
  %5857 = vmatmul.mubr.f32.gmra.mrb[0].mxu0 %v3897
  %v5858 = vpop.f32.mrb[0].mxu0
  %v5859 = vadd.f32 %v5474, %v5858
  %v5860 = vpop.f32.mrb[0].mxu0
  %5861 = vmatprep.mubr.f32.mxu0 0.0
  %5862 = vmatmul.mubr.f32.gmra.mrb[0].mxu0 %v3898
  %v5863 = vpop.f32.mrb[0].mxu0
  %v5864 = vadd.f32 %v5479, %v5863
  %v5865 = vpop.f32.mrb[0].mxu0
  %5866 = vmatprep.mubr.f32.mxu0 0.0
  %5867 = vmatmul.mubr.f32.gmra.mrb[0].mxu0 %v3899
  %v5868 = vpop.f32.mrb[0].mxu0
  %v5869 = vadd.f32 %v5484, %v5868
  %v5870 = vpop.f32.mrb[0].mxu0
  %5871 = vmatprep.mubr.f32.mxu0 0.0
  %5872 = vmatmul.mubr.f32.gmra.mrb[0].mxu0 %v3900
  %v5873 = vpop.f32.mrb[0].mxu0
  %v5874 = vadd.f32 %v5489, %v5873
  %v5875 = vpop.f32.mrb[0].mxu0
  %5876 = vmatprep.mubr.f32.mxu0 0.0
  %5877 = vmatmul.mubr.f32.gmra.mrb[0].mxu0 %v3901
  %v5878 = vpop.f32.mrb[0].mxu0
  %v5879 = vadd.f32 %v5494, %v5878
  %v5880 = vpop.f32.mrb[0].mxu0
  %5881 = vmatprep.mubr.f32.mxu0 0.0
  %5882 = vmatmul.mubr.f32.gmra.mrb[0].mxu0 %v3902
  %v5883 = vpop.f32.mrb[0].mxu0
  %v5884 = vadd.f32 %v5499, %v5883
  %v5885 = vpop.f32.mrb[0].mxu0
  %5886 = vmatprep.mubr.f32.mxu0 0.0
  %5887 = vmatmul.mubr.f32.gmra.mrb[0].mxu0 %v3903
  %v5888 = vpop.f32.mrb[0].mxu0
  %v5889 = vadd.f32 %v5504, %v5888
  %v5890 = vpop.f32.mrb[0].mxu0
  %5891 = vmatprep.mubr.f32.mxu0 0.0
  %5892 = vmatmul.mubr.f32.gmra.mrb[0].mxu0 %v3904
  %v5893 = vpop.f32.mrb[0].mxu0
  %v5894 = vadd.f32 %v5509, %v5893
  %v5895 = vpop.f32.mrb[0].mxu0
  %5896 = vmatprep.mubr.f32.mxu0 0.0
  %5897 = vmatmul.mubr.f32.gmra.mrb[0].mxu0 %v3905
  %v5898 = vpop.f32.mrb[0].mxu0
  %v5899 = vadd.f32 %v5514, %v5898
  %v5900 = vpop.f32.mrb[0].mxu0
  %5901 = vmatprep.mubr.f32.mxu0 0.0
  %5902 = vmatmul.mubr.f32.gmra.mrb[0].mxu0 %v3906
  %v5903 = vpop.f32.mrb[0].mxu0
  %v5904 = vadd.f32 %v5519, %v5903
  %v5905 = vpop.f32.mrb[0].mxu0
  %5906 = vmatprep.mubr.f32.mxu0 0.0
  %5907 = vmatmul.mubr.f32.gmra.mrb[0].mxu0 %v3907
  %v5908 = vpop.f32.mrb[0].mxu0
  %v5909 = vadd.f32 %v5524, %v5908
  %v5910 = vpop.f32.mrb[0].mxu0
  %5911 = vmatprep.mubr.f32.mxu0 0.0
  %5912 = vmatmul.mubr.f32.gmra.mrb[0].mxu0 %v3908
  %v5913 = vpop.f32.mrb[0].mxu0
  %v5914 = vadd.f32 %v5529, %v5913
  %v5915 = vpop.f32.mrb[0].mxu0
  %5916 = vmatprep.mubr.f32.mxu0 0.0
  %5917 = vmatmul.mubr.f32.gmra.mrb[0].mxu0 %v3909
  %v5918 = vpop.f32.mrb[0].mxu0
  %v5919 = vadd.f32 %v5534, %v5918
  %v5920 = vpop.f32.mrb[0].mxu0
  %5921 = vmatprep.mubr.f32.mxu0 0.0
  %5922 = vmatmul.mubr.f32.gmra.mrb[0].mxu0 %v3910
  %v5923 = vpop.f32.mrb[0].mxu0
  %v5924 = vadd.f32 %v5539, %v5923
  %v5925 = vpop.f32.mrb[0].mxu0
  %5926 = vmatprep.mubr.f32.mxu0 0.0
  %5927 = vmatmul.mubr.f32.gmra.mrb[0].mxu0 %v3911
  %v5928 = vpop.f32.mrb[0].mxu0
  %v5929 = vadd.f32 %v5544, %v5928
  %v5930 = vpop.f32.mrb[0].mxu0
  %5931 = vmatprep.mubr.f32.mxu0 0.0
  %5932 = vmatmul.mubr.f32.gmra.mrb[0].mxu0 %v3912
  %v5933 = vpop.f32.mrb[0].mxu0
  %v5934 = vadd.f32 %v5549, %v5933
  %v5935 = vpop.f32.mrb[0].mxu0
  %5936 = vmatprep.mubr.f32.mxu0 0.0
  %5937 = vmatmul.mubr.f32.gmra.mrb[0].mxu0 %v3913
  %v5938 = vpop.f32.mrb[0].mxu0
  %v5939 = vadd.f32 %v5554, %v5938
  %v5940 = vpop.f32.mrb[0].mxu0
  %5941 = vmatprep.mubr.f32.mxu0 0.0
  %5942 = vmatmul.mubr.f32.gmra.mrb[0].mxu0 %v3914
  %v5943 = vpop.f32.mrb[0].mxu0
  %v5944 = vadd.f32 %v5559, %v5943
  %v5945 = vpop.f32.mrb[0].mxu0
  %5946 = vmatprep.mubr.f32.mxu0 0.0
  %5947 = vmatmul.mubr.f32.gmra.mrb[0].mxu0 %v3915
  %v5948 = vpop.f32.mrb[0].mxu0
  %v5949 = vadd.f32 %v5564, %v5948
  %v5950 = vpop.f32.mrb[0].mxu0
  %5951 = vmatprep.mubr.f32.mxu0 0.0
  %5952 = vmatmul.mubr.f32.gmra.mrb[0].mxu0 %v3916
  %v5953 = vpop.f32.mrb[0].mxu0
  %v5954 = vadd.f32 %v5569, %v5953
  %v5955 = vpop.f32.mrb[0].mxu0
  %5956 = vmatprep.mubr.f32.mxu0 0.0
  %5957 = vmatmul.mubr.f32.gmra.mrb[0].mxu0 %v3917
  %v5958 = vpop.f32.mrb[0].mxu0
  %v5959 = vadd.f32 %v5574, %v5958
  %v5960 = vpop.f32.mrb[0].mxu0
  %5961 = vmatprep.mubr.f32.mxu0 0.0
  %5962 = vmatmul.mubr.f32.gmra.mrb[0].mxu0 %v3918
  %v5963 = vpop.f32.mrb[0].mxu0
  %v5964 = vadd.f32 %v5579, %v5963
  %v5965 = vpop.f32.mrb[0].mxu0
  %5966 = vmatprep.mubr.f32.mxu0 0.0
  %5967 = vmatmul.mubr.f32.gmra.mrb[0].mxu0 %v3919
  %v5968 = vpop.f32.mrb[0].mxu0
  %v5969 = vadd.f32 %v5584, %v5968
  %v5970 = vpop.f32.mrb[0].mxu0
  %5971 = vmatprep.mubr.f32.mxu0 0.0
  %5972 = vmatmul.mubr.f32.gmra.mrb[0].mxu0 %v3920
  %v5973 = vpop.f32.mrb[0].mxu0
  %v5974 = vadd.f32 %v5589, %v5973
  %v5975 = vpop.f32.mrb[0].mxu0
  %5976 = vmatprep.mubr.f32.mxu0 0.0
  %5977 = vmatmul.mubr.f32.gmra.mrb[0].mxu0 %v3921
  %v5978 = vpop.f32.mrb[0].mxu0
  %v5979 = vadd.f32 %v5594, %v5978
  %v5980 = vpop.f32.mrb[0].mxu0
  %5981 = vmatprep.mubr.f32.mxu0 0.0
  %5982 = vmatmul.mubr.f32.gmra.mrb[0].mxu0 %v3922
  %v5983 = vpop.f32.mrb[0].mxu0
  %v5984 = vadd.f32 %v5599, %v5983
  %v5985 = vpop.f32.mrb[0].mxu0
  %5986 = vmatprep.mubr.f32.mxu0 0.0
  %5987 = vmatmul.mubr.f32.gmra.mrb[0].mxu0 %v3923
  %v5988 = vpop.f32.mrb[0].mxu0
  %v5989 = vadd.f32 %v5604, %v5988
  %v5990 = vpop.f32.mrb[0].mxu0
  %5991 = vmatprep.mubr.f32.mxu0 0.0
  %5992 = vmatmul.mubr.f32.gmra.mrb[0].mxu0 %v3924
  %v5993 = vpop.f32.mrb[0].mxu0
  %v5994 = vadd.f32 %v5609, %v5993
  %v5995 = vpop.f32.mrb[0].mxu0
  %5996 = vmatprep.mubr.f32.mxu0 0.0
  %5997 = vmatmul.mubr.f32.gmra.mrb[0].mxu0 %v3925
  %v5998 = vpop.f32.mrb[0].mxu0
  %v5999 = vadd.f32 %v5614, %v5998
  %v6000 = vpop.f32.mrb[0].mxu0
  %6001 = vdwg.mxu0
  %6002 = vxpose.xlu0.b32.start [1/16] %v5684, 128
  %6003 = vxpose.xlu0.b32.cont [2/16] %v5689, 128
  %6004 = vxpose.xlu0.b32.cont [3/16] %v5694, 128
  %6005 = vxpose.xlu0.b32.cont [4/16] %v5699, 128
  %6006 = vxpose.xlu0.b32.cont [5/16] %v5704, 128
  %6007 = vxpose.xlu0.b32.cont [6/16] %v5709, 128
  %6008 = vxpose.xlu0.b32.cont [7/16] %v5714, 128
  %6009 = vxpose.xlu0.b32.cont [8/16] %v5719, 128
  %6010 = vxpose.xlu0.b32.cont [9/16] %v5724, 128
  %6011 = vxpose.xlu0.b32.cont [10/16] %v5729, 128
  %6012 = vxpose.xlu0.b32.cont [11/16] %v5734, 128
  %6013 = vxpose.xlu0.b32.cont [12/16] %v5739, 128
  %6014 = vxpose.xlu0.b32.cont [13/16] %v5744, 128
  %6015 = vxpose.xlu0.b32.cont [14/16] %v5749, 128
  %6016 = vxpose.xlu0.b32.cont [15/16] %v5754, 128
  %6017 = vxpose.xlu0.b32.end [16/16] %v5759, 128
  %v6018 = vpop.trf.xlu0
  %v6019 = vpop.trf.xlu0
  %v6020 = vpop.trf.xlu0
  %v6021 = vpop.trf.xlu0
  %v6022 = vpop.trf.xlu0
  %v6023 = vpop.trf.xlu0
  %v6024 = vpop.trf.xlu0
  %v6025 = vpop.trf.xlu0
  %v6026 = vpop.trf.xlu0
  %v6027 = vpop.trf.xlu0
  %v6028 = vpop.trf.xlu0
  %v6029 = vpop.trf.xlu0
  %v6030 = vpop.trf.xlu0
  %v6031 = vpop.trf.xlu0
  %v6032 = vpop.trf.xlu0
  %v6033 = vpop.trf.xlu0
  %6034 = vxpose.xlu0.b32.start [1/16] %v5764, 128
  %6035 = vxpose.xlu0.b32.cont [2/16] %v5769, 128
  %6036 = vxpose.xlu0.b32.cont [3/16] %v5774, 128
  %6037 = vxpose.xlu0.b32.cont [4/16] %v5779, 128
  %6038 = vxpose.xlu0.b32.cont [5/16] %v5784, 128
  %6039 = vxpose.xlu0.b32.cont [6/16] %v5789, 128
  %6040 = vxpose.xlu0.b32.cont [7/16] %v5794, 128
  %6041 = vxpose.xlu0.b32.cont [8/16] %v5799, 128
  %6042 = vxpose.xlu0.b32.cont [9/16] %v5804, 128
  %6043 = vxpose.xlu0.b32.cont [10/16] %v5809, 128
  %6044 = vxpose.xlu0.b32.cont [11/16] %v5814, 128
  %6045 = vxpose.xlu0.b32.cont [12/16] %v5819, 128
  %6046 = vxpose.xlu0.b32.cont [13/16] %v5824, 128
  %6047 = vxpose.xlu0.b32.cont [14/16] %v5829, 128
  %6048 = vxpose.xlu0.b32.cont [15/16] %v5834, 128
  %6049 = vxpose.xlu0.b32.end [16/16] %v5839, 128
  %v6050 = vpop.trf.xlu0
  %v6051 = vpop.trf.xlu0
  %v6052 = vpop.trf.xlu0
  %v6053 = vpop.trf.xlu0
  %v6054 = vpop.trf.xlu0
  %v6055 = vpop.trf.xlu0
  %v6056 = vpop.trf.xlu0
  %v6057 = vpop.trf.xlu0
  %v6058 = vpop.trf.xlu0
  %v6059 = vpop.trf.xlu0
  %v6060 = vpop.trf.xlu0
  %v6061 = vpop.trf.xlu0
  %v6062 = vpop.trf.xlu0
  %v6063 = vpop.trf.xlu0
  %v6064 = vpop.trf.xlu0
  %v6065 = vpop.trf.xlu0
  %6066 = vxpose.xlu0.b32.start [1/16] %v5844, 128
  %6067 = vxpose.xlu0.b32.cont [2/16] %v5849, 128
  %6068 = vxpose.xlu0.b32.cont [3/16] %v5854, 128
  %6069 = vxpose.xlu0.b32.cont [4/16] %v5859, 128
  %6070 = vxpose.xlu0.b32.cont [5/16] %v5864, 128
  %6071 = vxpose.xlu0.b32.cont [6/16] %v5869, 128
  %6072 = vxpose.xlu0.b32.cont [7/16] %v5874, 128
  %6073 = vxpose.xlu0.b32.cont [8/16] %v5879, 128
  %6074 = vxpose.xlu0.b32.cont [9/16] %v5884, 128
  %6075 = vxpose.xlu0.b32.cont [10/16] %v5889, 128
  %6076 = vxpose.xlu0.b32.cont [11/16] %v5894, 128
  %6077 = vxpose.xlu0.b32.cont [12/16] %v5899, 128
  %6078 = vxpose.xlu0.b32.cont [13/16] %v5904, 128
  %6079 = vxpose.xlu0.b32.cont [14/16] %v5909, 128
  %6080 = vxpose.xlu0.b32.cont [15/16] %v5914, 128
  %6081 = vxpose.xlu0.b32.end [16/16] %v5919, 128
  %v6082 = vpop.trf.xlu0
  %v6083 = vpop.trf.xlu0
  %v6084 = vpop.trf.xlu0
  %v6085 = vpop.trf.xlu0
  %v6086 = vpop.trf.xlu0
  %v6087 = vpop.trf.xlu0
  %v6088 = vpop.trf.xlu0
  %v6089 = vpop.trf.xlu0
  %v6090 = vpop.trf.xlu0
  %v6091 = vpop.trf.xlu0
  %v6092 = vpop.trf.xlu0
  %v6093 = vpop.trf.xlu0
  %v6094 = vpop.trf.xlu0
  %v6095 = vpop.trf.xlu0
  %v6096 = vpop.trf.xlu0
  %v6097 = vpop.trf.xlu0
  %6098 = vxpose.xlu0.b32.start [1/16] %v5924, 128
  %6099 = vxpose.xlu0.b32.cont [2/16] %v5929, 128
  %6100 = vxpose.xlu0.b32.cont [3/16] %v5934, 128
  %6101 = vxpose.xlu0.b32.cont [4/16] %v5939, 128
  %6102 = vxpose.xlu0.b32.cont [5/16] %v5944, 128
  %6103 = vxpose.xlu0.b32.cont [6/16] %v5949, 128
  %6104 = vxpose.xlu0.b32.cont [7/16] %v5954, 128
  %6105 = vxpose.xlu0.b32.cont [8/16] %v5959, 128
  %6106 = vxpose.xlu0.b32.cont [9/16] %v5964, 128
  %6107 = vxpose.xlu0.b32.cont [10/16] %v5969, 128
  %6108 = vxpose.xlu0.b32.cont [11/16] %v5974, 128
  %6109 = vxpose.xlu0.b32.cont [12/16] %v5979, 128
  %6110 = vxpose.xlu0.b32.cont [13/16] %v5984, 128
  %6111 = vxpose.xlu0.b32.cont [14/16] %v5989, 128
  %6112 = vxpose.xlu0.b32.cont [15/16] %v5994, 128
  %6113 = vxpose.xlu0.b32.end [16/16] %v5999, 128
  %v6114 = vpop.trf.xlu0
  %v6115 = vpop.trf.xlu0
  %v6116 = vpop.trf.xlu0
  %v6117 = vpop.trf.xlu0
  %v6118 = vpop.trf.xlu0
  %v6119 = vpop.trf.xlu0
  %v6120 = vpop.trf.xlu0
  %v6121 = vpop.trf.xlu0
  %v6122 = vpop.trf.xlu0
  %v6123 = vpop.trf.xlu0
  %v6124 = vpop.trf.xlu0
  %v6125 = vpop.trf.xlu0
  %v6126 = vpop.trf.xlu0
  %v6127 = vpop.trf.xlu0
  %v6128 = vpop.trf.xlu0
  %v6129 = vpop.trf.xlu0
  %v6130 = vxor.u32 %v6018, 2147483648
  %v6131 = vxor.u32 %v6050, 2147483648
  %v6132 = vxor.u32 %v6082, 2147483648
  %v6133 = vxor.u32 %v6114, 2147483648
  %v6134 = vmul.f32 %v6130, 1.442695
  %v6135 = vpow.pop %v6134
  %v6136 = vmul.f32 %v6131, 1.442695
  %v6137 = vpow.pop %v6136
  %v6138 = vmul.f32 %v6132, 1.442695
  %v6139 = vpow.pop %v6138
  %v6140 = vmul.f32 %v6133, 1.442695
  %v6141 = vpow.pop %v6140
  %v6142 = vadd.f32 %v6135, 1.0
  %v6143 = vadd.f32 %v6137, 1.0
  %v6144 = vadd.f32 %v6139, 1.0
  %v6145 = vadd.f32 %v6141, 1.0
  %v6146 = vrcp.pop %v6142
  %v6147 = vmul.f32 1.0, %v6146
  %v6148 = vrcp.pop %v6143
  %v6149 = vmul.f32 1.0, %v6148
  %v6150 = vrcp.pop %v6144
  %v6151 = vmul.f32 1.0, %v6150
  %v6152 = vrcp.pop %v6145
  %v6153 = vmul.f32 1.0, %v6152
  %v6158 = vcombine.low %v6147, %v6149
  %v6159 = vcombine.low %v6151, %v6153
  %6162 = vst [vmem:[%s8] sm:$0xff] %v6158
  %6163 = vst [vmem:[%s8 + $0x8] sm:$0xff] %v6159
  // Predicated region
  $region34: #{merge_and_conv.1} parent=0 // pred_check
    _
  $region35: #{merge_and_conv.1} parent=0 // pred_check_branch
    %6165 = sbr.rel (0) target = $region37
  $region36: #{merge_and_conv.1} parent=0 // pred_region
    _
  $region37: #{merge_and_conv.1} parent=0 // pred_fallthru
    _
  // Predicated region
  $region38: #{merge_and_conv.1} parent=0 // pred_check
    _
  $region39: #{merge_and_conv.1} parent=0 // pred_check_branch
    %6167 = sbr.rel (0) target = $region41
  $region40: #{merge_and_conv.1} parent=0 // pred_region
    _
  $region41: #{merge_and_conv.1} parent=0 // pred_fallthru
    _

</llo_original>
